<compile_context>
chip_gen: v6e
topology: v6e:2x2x1
jax: 0.10.0
libtpu: 0.0.40
codegen_flags: <defaults>
</compile_context>

<pallas_src>
import functools
import math

import numpy as np
import jax
import jax.numpy as jnp
from jax.experimental import pallas as pl
from jax.experimental.pallas import tpu as pltpu


# ----------------------------- small math helpers -----------------------------

def _layernorm(x, g, b, eps=1e-5):
    mean = jnp.mean(x, axis=-1, keepdims=True)
    var = jnp.mean(jnp.square(x - mean), axis=-1, keepdims=True)
    return (x - mean) * jax.lax.rsqrt(var + eps) * g + b


def _erf_approx(x):
    # Abramowitz & Stegun 7.1.26, |err| <= 1.5e-7 (float32-level accuracy).
    a1, a2, a3, a4, a5 = (0.254829592, -0.284496736, 1.421413741,
                          -1.453152027, 1.061405429)
    p = 0.3275911
    s = jnp.where(x >= 0.0, 1.0, -1.0)
    ax = jnp.abs(x)
    t = 1.0 / (1.0 + p * ax)
    poly = ((((a5 * t + a4) * t + a3) * t + a2) * t + a1) * t
    return s * (1.0 - poly * jnp.exp(-ax * ax))


def _gelu_exact(x):
    # PyTorch nn.GELU default = exact (erf-based) GELU.
    return 0.5 * x * (1.0 + _erf_approx(x * (1.0 / math.sqrt(2.0))))


def _round_up(v, m):
    return (v + m - 1) // m * m


# ------------------------- generation-aware sizing ----------------------------

def _vmem_budget():
    """75% of physical VMEM (v5e/v6e: ~96 MiB, v7x: ~48 MiB); safe fallback."""
    try:
        info = pltpu.get_tpu_info()
        cap = int(getattr(info, "vmem_capacity_bytes"))
        return max(32 << 20, min(112 << 20, (cap * 3) // 4))
    except Exception:
        return 48 << 20   # conservative: fits v7x's 64 MiB physical VMEM


def _row_tile(rows, cap):
    """Largest multiple-of-8 divisor of rows <= cap; prefer >=2 blocks (dual-TC v7x)."""
    def best_le(limit):
        for t in range(min(limit, rows), 7, -1):
            if rows % t == 0 and t % 8 == 0:
                return t
        return None

    t = best_le(cap)
    if t is None:
        return rows                       # odd row counts: single full block
    if t == rows:
        t2 = best_le(rows // 2)
        if t2 is not None:
            return t2                     # keep 2 parallel steps for megacore
    return t


def _hidden_tile(hidden, C, budget):
    """MLP hidden-dim tile: multiple of 128 dividing `hidden`, weight tiles
    (bf16, double-buffered) kept under ~1/4 of the VMEM budget."""
    if hidden % 128 != 0:
        return hidden
    cap = max(128, budget // (32 * max(C, 1)))
    cands = [t for t in range(128, hidden + 1, 128) if hidden % t == 0]
    fitting = [t for t in cands if t <= cap]
    return max(fitting) if fitting else min(cands)


def _mlp_row_cap(C, h_tile, budget):
    per_row = 22 * C + 4 * h_tile         # rough bytes/row of resident state
    cap = budget // (3 * per_row)
    cap = max(64, min(2048, cap))
    return (cap // 8) * 8


def _attn_max_rows(budget):
    if budget >= (80 << 20):
        return 2048                       # v5e / v6e (128 MiB VMEM)
    if budget >= (40 << 20):
        return 1024                       # v7x-ish
    return 512


def _pick_windows_per_step(num_windows, n_tokens, batch, max_rows):
    best = 1
    for cand in range(1, num_windows + 1):
        rows = cand * n_tokens
        if num_windows % cand == 0 and rows <= max_rows and rows % 8 == 0:
            best = cand
    # keep >=2 grid steps overall so both TensorCores on v7x get work
    if batch * (num_windows // best) < 2:
        for cand in range(best - 1, 0, -1):
            rows = cand * n_tokens
            if num_windows % cand == 0 and rows % 8 == 0 and num_windows // cand >= 2:
                best = cand
                break
    return best


# --------------------------------- kernels ------------------------------------

def ln_kernel(x_ref, g_ref, b_ref, o_ref):
    x = x_ref[...].astype(jnp.float32)
    o_ref[...] = _layernorm(x, g_ref[0], b_ref[0]).astype(o_ref.dtype)


def mlp_block_kernel(x_ref, g_ref, b_ref, w1_ref, b1_ref, w2_ref, b2_ref, o_ref,
                     y_ref, acc_ref, *, n_hblocks):
    """out = x + Linear2(GELU(Linear1(LayerNorm(x)))), K-tiled over hidden dim."""
    kb = pl.program_id(1)

    @pl.when(kb == 0)
    def _():
        x = x_ref[...].astype(jnp.float32)
        y_ref[...] = _layernorm(x, g_ref[0], b_ref[0]).astype(jnp.bfloat16)
        acc_ref[...] = jnp.zeros(acc_ref.shape, acc_ref.dtype)

    h = jnp.dot(y_ref[...], w1_ref[...],
                preferred_element_type=jnp.float32) + b1_ref[0]
    h = _gelu_exact(h)
    acc_ref[...] += jnp.dot(h.astype(jnp.bfloat16), w2_ref[...],
                            preferred_element_type=jnp.float32)

    @pl.when(kb == n_hblocks - 1)
    def _():
        x = x_ref[...].astype(jnp.float32)
        o_ref[...] = (x + acc_ref[...] + b2_ref[0]).astype(o_ref.dtype)


def window_attn_kernel(*refs, num_heads, win_tokens, fuse_ln_residual,
                       has_mask, has_res, head_batched):
    """Wb windows per grid step.

    refs (in order): x slab (rows, C); [residual slab (rows, C)];
    rel-bias (nH, N, N); [shift mask (Wb, N, N)]; ln1 gamma/beta (1, C);
    wqkv (C, 3C) bf16; bqkv (1, 3C); wproj (C, C) bf16; bproj (1, C); out slab.
    """
    it = iter(refs)
    x_ref = next(it)
    res_ref = next(it) if has_res else None
    rb_ref = next(it)
    mask_ref = next(it) if has_mask else None
    g_ref = next(it)
    b_ref = next(it)
    wqkv_ref = next(it)
    bqkv_ref = next(it)
    wproj_ref = next(it)
    bproj_ref = next(it)
    o_ref = next(it)

    x = x_ref[...].astype(jnp.float32)              # (rows, C)
    rows, C = x.shape
    N = win_tokens
    Wb = rows // N
    nH = num_heads
    hd = C // nH
    scale = 1.0 / math.sqrt(hd)

    y = _layernorm(x, g_ref[0], b_ref[0]) if fuse_ln_residual else x

    # one big-M QKV projection (bf16 operands, f32 accumulation)
    qkv = jnp.dot(y.astype(jnp.bfloat16), wqkv_ref[...],
                  preferred_element_type=jnp.float32) + bqkv_ref[0]   # (rows, 3C)

    rb = rb_ref[...].astype(jnp.float32)            # (nH, N, N)
    if has_mask:
        msk = mask_ref[...].astype(jnp.float32)     # (Wb, N, N)

    if head_batched:
        # single relayout to head-major layout, then one batched contraction
        # pair over (window*head) -- no per-head lane slices / concat.
        qkv5 = qkv.reshape(Wb, N, 3, nH, hd)
        qkv5 = jnp.transpose(qkv5, (0, 3, 2, 1, 4))         # (Wb, nH, 3, N, hd)
        qkv5 = qkv5.reshape(Wb * nH, 3, N, hd).astype(jnp.bfloat16)
        q, k, v = qkv5[:, 0], qkv5[:, 1], qkv5[:, 2]         # (Wb*nH, N, hd)

        s = jnp.einsum("bnd,bmd->bnm", q, k,
                       preferred_element_type=jnp.float32) * scale
        s = s.reshape(Wb, nH, N, N) + rb[None]
        if has_mask:
            s = s + msk[:, None]
        m = jnp.max(s, axis=-1, keepdims=True)
        e = jnp.exp(s - m)
        pr = e * pl.reciprocal(jnp.sum(e, axis=-1, keepdims=True), approx=True)
        ctx = jnp.einsum("bnm,bmd->bnd",
                         pr.reshape(Wb * nH, N, N).astype(jnp.bfloat16), v,
                         preferred_element_type=jnp.float32)          # (Wb*nH, N, hd)
        out = jnp.transpose(ctx.reshape(Wb, nH, N, hd),
                            (0, 2, 1, 3)).reshape(rows, C)
    else:
        # fallback: per-head loop (known-good lowering path).
        qkv3 = qkv.reshape(Wb, N, 3 * C)
        outs = []
        for h in range(nH):
            q = qkv3[:, :, h * hd:(h + 1) * hd].astype(jnp.bfloat16)
            k = qkv3[:, :, C + h * hd:C + (h + 1) * hd].astype(jnp.bfloat16)
            v = qkv3[:, :, 2 * C + h * hd:2 * C + (h + 1) * hd].astype(jnp.bfloat16)
            s = jnp.einsum("wnd,wmd->wnm", q, k,
                           preferred_element_type=jnp.float32) * scale + rb[h][None]
            if has_mask:
                s = s + msk
            m = jnp.max(s, axis=-1, keepdims=True)
            e = jnp.exp(s - m)
            pr = e * pl.reciprocal(jnp.sum(e, axis=-1, keepdims=True), approx=True)
            outs.append(jnp.einsum("wnm,wmd->wnd", pr.astype(jnp.bfloat16), v,
                                   preferred_element_type=jnp.float32))
        out = jnp.concatenate(outs, axis=-1).reshape(rows, C)

    proj = jnp.dot(out.astype(jnp.bfloat16), wproj_ref[...],
                   preferred_element_type=jnp.float32) + bproj_ref[0]
    if fuse_ln_residual:
        proj = proj + x                           # fused first residual
    elif has_res:
        proj = proj + res_ref[...].astype(jnp.float32)
    o_ref[...] = proj.astype(o_ref.dtype)


# ------------------------------ pallas wrappers --------------------------------

def layer_norm_pallas(x2d, gamma, beta, budget):
    R, C = x2d.shape
    row_tile = _row_tile(R, 1024)
    return pl.pallas_call(
        ln_kernel,
        out_shape=jax.ShapeDtypeStruct((R, C), x2d.dtype),
        grid_spec=pltpu.PrefetchScalarGridSpec(
            num_scalar_prefetch=0,
            grid=(R // row_tile,),
            in_specs=[
                pl.BlockSpec((row_tile, C), lambda i: (i, 0)),
                pl.BlockSpec((1, C), lambda i: (0, 0)),
                pl.BlockSpec((1, C), lambda i: (0, 0)),
            ],
            out_specs=pl.BlockSpec((row_tile, C), lambda i: (i, 0)),
        ),
        compiler_params=pltpu.CompilerParams(
            dimension_semantics=("parallel",), vmem_limit_bytes=budget),
    )(x2d, gamma.reshape(1, C), beta.reshape(1, C))


def mlp_block_pallas(x2d, p, budget):
    R, C = x2d.shape
    hidden = p["w1"].shape[1]
    h_tile = _hidden_tile(hidden, C, budget)
    n_hblocks = hidden // h_tile
    row_tile = _row_tile(R, _mlp_row_cap(C, h_tile, budget))
    grid = (R // row_tile, n_hblocks)
    # TODO(synk): mark constant-index weight/bias blocks pipeline_mode=pl.Buffered(1)
    # once single-buffering via BlockSpec is confirmed on the installed Pallas.
    kernel = functools.partial(mlp_block_kernel, n_hblocks=n_hblocks)
    return pl.pallas_call(
        kernel,
        out_shape=jax.ShapeDtypeStruct((R, C), x2d.dtype),
        grid_spec=pltpu.PrefetchScalarGridSpec(
            num_scalar_prefetch=0,
            grid=grid,
            in_specs=[
                pl.BlockSpec((row_tile, C), lambda i, k: (i, 0)),
                pl.BlockSpec((1, C), lambda i, k: (0, 0)),
                pl.BlockSpec((1, C), lambda i, k: (0, 0)),
                pl.BlockSpec((C, h_tile), lambda i, k: (0, k)),
                pl.BlockSpec((1, h_tile), lambda i, k: (0, k)),
                pl.BlockSpec((h_tile, C), lambda i, k: (k, 0)),
                pl.BlockSpec((1, C), lambda i, k: (0, 0)),
            ],
            out_specs=pl.BlockSpec((row_tile, C), lambda i, k: (i, 0)),
            scratch_shapes=[pltpu.VMEM((row_tile, C), jnp.bfloat16),
                            pltpu.VMEM((row_tile, C), jnp.float32)],
        ),
        compiler_params=pltpu.CompilerParams(
            dimension_semantics=("parallel", "arbitrary"),
            vmem_limit_bytes=budget),
    )(x2d, p["ln2_g"].reshape(1, C), p["ln2_b"].reshape(1, C),
      p["w1"].astype(jnp.bfloat16), p["b1"].reshape(1, hidden),
      p["w2"].astype(jnp.bfloat16), p["b2"].reshape(1, C))


def _make_shift_mask(pH, pW, window_size, shift_size):
    ws0, ws1 = window_size
    s0, s1 = shift_size
    mask = np.zeros((pH, pW), dtype=np.float32)
    h_slices = ((0, -ws0), (-ws0, -s0), (-s0, None))
    w_slices = ((0, -ws1), (-ws1, -s1), (-s1, None))
    cnt = 0
    for hs in h_slices:
        for wsl in w_slices:
            mask[hs[0]:hs[1], wsl[0]:wsl[1]] = cnt
            cnt += 1
    mask = mask.reshape(pH // ws0, ws0, pW // ws1, ws1).transpose(0, 2, 1, 3)
    mask = mask.reshape(-1, ws0 * ws1)
    diff = mask[:, None, :] - mask[:, :, None]
    return np.where(diff != 0, -100.0, 0.0).astype(np.float32)


def make_rel_pos_bias(table, window_size, num_heads):
    ws0, ws1 = window_size
    coords = np.stack(np.meshgrid(np.arange(ws0), np.arange(ws1), indexing="ij"))
    coords_flat = coords.reshape(2, -1)
    rel = coords_flat[:, :, None] - coords_flat[:, None, :]
    rel = rel.transpose(1, 2, 0).copy()
    rel[:, :, 0] += ws0 - 1
    rel[:, :, 1] += ws1 - 1
    rel[:, :, 0] *= 2 * ws1 - 1
    idx = rel.sum(-1).reshape(-1)
    N = ws0 * ws1
    bias = table[idx].reshape(N, N, num_heads)
    return jnp.transpose(bias, (2, 0, 1))                 # (nH, N, N)


def shifted_window_attention_pallas(x_attn, x_res, p, rel_bias, window_size,
                                    shift_size, num_heads, fuse_ln_residual,
                                    budget):
    """fuse_ln_residual: returns x + attn(LN1(x));
       else (x_res given): returns x_res + attn(x_attn)."""
    B, H, W, C = x_attn.shape
    ws0, ws1 = window_size
    pad_r = (ws1 - W % ws1) % ws1
    pad_b = (ws0 - H % ws0) % ws0

    def prep(t):
        return jnp.pad(t, ((0, 0), (0, pad_b), (0, pad_r), (0, 0)))

    xp = prep(x_attn)
    _, pH, pW, _ = xp.shape
    s0, s1 = shift_size
    if ws0 >= pH:
        s0 = 0
    if ws1 >= pW:
        s1 = 0
    has_mask = (s0 + s1) > 0

    nHw, nWw = pH // ws0, pW // ws1
    num_windows = nHw * nWw
    N = ws0 * ws1
    Np = _round_up(N, 8)                 # sublane-align the per-window token dim

    def windows(t):
        if has_mask:
            t = jnp.roll(t, (-s0, -s1), axis=(1, 2))
        t = t.reshape(B, nHw, ws0, nWw, ws1, C).transpose(0, 1, 3, 2, 4, 5)
        return t.reshape(B * num_windows, N, C)

    xw = windows(xp)
    has_res = x_res is not None
    rw = windows(prep(x_res)) if has_res else None

    rb = rel_bias
    if Np != N:
        xw = jnp.pad(xw, ((0, 0), (0, Np - N), (0, 0)))
        if has_res:
            rw = jnp.pad(rw, ((0, 0), (0, Np - N), (0, 0)))
        rb = jnp.pad(rel_bias, ((0, 0), (0, Np - N), (0, Np - N)))
        rb = rb.at[:, :, N:].set(-1e9)   # mask padded keys for every query

    xw = xw.reshape(B * num_windows * Np, C)
    if has_res:
        rw = rw.reshape(B * num_windows * Np, C)

    if has_mask:
        mask = jnp.asarray(_make_shift_mask(pH, pW, (ws0, ws1), (s0, s1)))
        if Np != N:
            mask = jnp.pad(mask, ((0, 0), (0, Np - N), (0, Np - N)))
    else:
        mask = None

    wb = _pick_windows_per_step(num_windows, Np, B, _attn_max_rows(budget))
    wpb = num_windows // wb
    grid = (B, wpb)

    def build(head_batched):
        kernel = functools.partial(
            window_attn_kernel, num_heads=num_heads, win_tokens=Np,
            fuse_ln_residual=fuse_ln_residual, has_mask=has_mask,
            has_res=has_res, head_batched=head_batched)
        in_specs = [pl.BlockSpec((wb * Np, C), lambda bi, wi: (bi * wpb + wi, 0))]
        args = [xw]
        if has_res:
            in_specs.append(pl.BlockSpec((wb * Np, C),
                                         lambda bi, wi: (bi * wpb + wi, 0)))
            args.append(rw)
        in_specs.append(pl.BlockSpec((num_heads, Np, Np), lambda bi, wi: (0, 0, 0)))
        args.append(rb)
        if has_mask:
            in_specs.append(pl.BlockSpec((wb, Np, Np), lambda bi, wi: (wi, 0, 0)))
            args.append(mask)
        # TODO(synk): single-buffer these constant params (pipeline_mode=pl.Buffered(1))
        # and present a lane-dense (rows/k, k*C) out slab for C < 128 stages.
        in_specs += [
            pl.BlockSpec((1, C), lambda bi, wi: (0, 0)),
            pl.BlockSpec((1, C), lambda bi, wi: (0, 0)),
            pl.BlockSpec((C, 3 * C), lambda bi, wi: (0, 0)),
            pl.BlockSpec((1, 3 * C), lambda bi, wi: (0, 0)),
            pl.BlockSpec((C, C), lambda bi, wi: (0, 0)),
            pl.BlockSpec((1, C), lambda bi, wi: (0, 0)),
        ]
        args += [p["ln1_g"].reshape(1, C), p["ln1_b"].reshape(1, C),
                 p["wqkv"].astype(jnp.bfloat16), p["bqkv"].reshape(1, 3 * C),
                 p["wproj"].astype(jnp.bfloat16), p["bproj"].reshape(1, C)]
        call = pl.pallas_call(
            kernel,
            out_shape=jax.ShapeDtypeStruct((B * num_windows * Np, C), x_attn.dtype),
            grid_spec=pltpu.PrefetchScalarGridSpec(
                num_scalar_prefetch=0,
                grid=grid,
                in_specs=in_specs,
                out_specs=pl.BlockSpec((wb * Np, C),
                                       lambda bi, wi: (bi * wpb + wi, 0)),
            ),
            compiler_params=pltpu.CompilerParams(
                dimension_semantics=("parallel", "parallel"),
                vmem_limit_bytes=budget),
        )
        return call, args

    try:
        call, args = build(True)
        yw = call(*args)
    except Exception:
        # Mosaic reshape/transpose relayout support varies; fall back to the
        # per-head-loop formulation that is known to lower.
        call, args = build(False)
        yw = call(*args)

    yw = yw.reshape(B * num_windows, Np, C)[:, :N, :]
    y = yw.reshape(B, nHw, nWw, ws0, ws1, C).transpose(0, 1, 3, 2, 4, 5)
    y = y.reshape(B, pH, pW, C)
    if has_mask:
        y = jnp.roll(y, (s0, s1), axis=(1, 2))
    return y[:, :H, :W, :]


def swin_block_forward_pallas(x, p, window_size, shift_size, num_heads):
    B, H, W, C = x.shape
    ws0, ws1 = window_size
    pad_r = (ws1 - W % ws1) % ws1
    pad_b = (ws0 - H % ws0) % ws0
    budget = _vmem_budget()
    rel_bias = make_rel_pos_bias(p["rel_table"], window_size, num_heads)

    if pad_r == 0 and pad_b == 0:
        # LN1 + attention + first residual fused into the attention kernel.
        x1 = shifted_window_attention_pallas(x, None, p, rel_bias, window_size,
                                             list(shift_size), num_heads, True,
                                             budget)
    else:
        # Reference applies LN before zero-padding, so LN1 stays a separate
        # Pallas pass; the first residual is still fused into the kernel.
        xn = layer_norm_pallas(x.reshape(-1, C), p["ln1_g"], p["ln1_b"], budget)
        xn = xn.reshape(B, H, W, C)
        x1 = shifted_window_attention_pallas(xn, x, p, rel_bias, window_size,
                                             list(shift_size), num_heads, False,
                                             budget)

    # LN2 + MLP (K-tiled over hidden) + second residual fused in one kernel.
    y = mlp_block_pallas(x1.reshape(-1, C), p, budget)
    return y.reshape(B, H, W, C)


# ------------------------------ pure-JAX reference ------------------------------

def ref_shifted_window_attention(x, wqkv_t, bqkv, wproj_t, bproj, rel_bias,
                                 window_size, shift_size, num_heads):
    HI = jax.lax.Precision.HIGHEST
    B, H, W, C = x.shape
    ws0, ws1 = window_size
    pad_r = (ws1 - W % ws1) % ws1
    pad_b = (ws0 - H % ws0) % ws0
    x = jnp.pad(x, ((0, 0), (0, pad_b), (0, pad_r), (0, 0)))
    _, pH, pW, _ = x.shape
    s0, s1 = shift_size
    if ws0 >= pH:
        s0 = 0
    if ws1 >= pW:
        s1 = 0
    if s0 + s1 > 0:
        x = jnp.roll(x, (-s0, -s1), axis=(1, 2))
    nHw, nWw = pH // ws0, pW // ws1
    num_windows = nHw * nWw
    N = ws0 * ws1
    xw = x.reshape(B, nHw, ws0, nWw, ws1, C).transpose(0, 1, 3, 2, 4, 5)
    xw = xw.reshape(B * num_windows, N, C)
    qkv = jnp.einsum("bnc,cd->bnd", xw, wqkv_t, precision=HI) + bqkv
    qkv = qkv.reshape(B * num_windows, N, 3, num_heads, C // num_heads)
    qkv = qkv.transpose(2, 0, 3, 1, 4)
    q, k, v = qkv[0], qkv[1], qkv[2]
    q = q * (C // num_heads) ** (-0.5)
    attn = jnp.einsum("bhnd,bhmd->bhnm", q, k, precision=HI) + rel_bias[None]
    if s0 + s1 > 0:
        mask = jnp.asarray(_make_shift_mask(pH, pW, (ws0, ws1), (s0, s1)))
        attn = attn.reshape(B, num_windows, num_heads, N, N) + mask[None, :, None]
        attn = attn.reshape(-1, num_heads, N, N)
    attn = jax.nn.softmax(attn, axis=-1)
    out = jnp.einsum("bhnm,bhmd->bhnd", attn, v, precision=HI)
    out = out.transpose(0, 2, 1, 3).reshape(B * num_windows, N, C)
    out = jnp.einsum("bnc,cd->bnd", out, wproj_t, precision=HI) + bproj
    out = out.reshape(B, nHw, nWw, ws0, ws1, C).transpose(0, 1, 3, 2, 4, 5)
    out = out.reshape(B, pH, pW, C)
    if s0 + s1 > 0:
        out = jnp.roll(out, (s0, s1), axis=(1, 2))
    return out[:, :H, :W, :]


def ref_block_forward(x, p, window_size, shift_size, num_heads):
    HI = jax.lax.Precision.HIGHEST
    xn = _layernorm(x, p["ln1_g"], p["ln1_b"])
    rel_bias = make_rel_pos_bias(p["rel_table"], window_size, num_heads)
    a = ref_shifted_window_attention(xn, p["wqkv"], p["bqkv"], p["wproj"],
                                     p["bproj"], rel_bias, window_size,
                                     list(shift_size), num_heads)
    x = x + a
    xn2 = _layernorm(x, p["ln2_g"], p["ln2_b"])
    h = jnp.einsum("...c,ch->...h", xn2, p["w1"], precision=HI) + p["b1"]
    h = jax.nn.gelu(h, approximate=False)
    y = jnp.einsum("...h,hc->...c", h, p["w2"], precision=HI) + p["b2"]
    return x + y


# ------------------------------------ main --------------------------------------

def make_params(key, C, num_heads, window_size, mlp_ratio=4.0):
    hidden = int(C * mlp_ratio)
    ks = jax.random.split(key, 13)
    table_len = (2 * window_size[0] - 1) * (2 * window_size[1] - 1)
    return {
        "ln1_g": 1.0 + 0.1 * jax.random.normal(ks[0], (C,), jnp.float32),
        "ln1_b": 0.05 * jax.random.normal(ks[1], (C,), jnp.float32),
        "wqkv": 0.1 * jax.random.normal(ks[2], (C, 3 * C), jnp.float32),
        "bqkv": 0.05 * jax.random.normal(ks[3], (3 * C,), jnp.float32),
        "wproj": 0.1 * jax.random.normal(ks[4], (C, C), jnp.float32),
        "bproj": 0.05 * jax.random.normal(ks[5], (C,), jnp.float32),
        "rel_table": 0.02 * jax.random.normal(ks[6], (table_len, num_heads),
                                              jnp.float32),
        "ln2_g": 1.0 + 0.1 * jax.random.normal(ks[7], (C,), jnp.float32),
        "ln2_b": 0.05 * jax.random.normal(ks[8], (C,), jnp.float32),
        "w1": 0.1 * jax.random.normal(ks[9], (C, hidden), jnp.float32),
        "b1": 1e-3 * jax.random.normal(ks[10], (hidden,), jnp.float32),
        "w2": 0.1 * jax.random.normal(ks[11], (hidden, C), jnp.float32),
        "b2": 1e-3 * jax.random.normal(ks[12], (C,), jnp.float32),
    }


if __name__ == "__main__":
    C = 32
    num_heads = 4

    test_cases = [
        # (window_size, B, H, W, shift_size)
        ((4, 4), 2, 8, 8, (2, 2)),   # shifted windows (mask path), fused LN+residual
        ((4, 4), 2, 8, 8, (0, 0)),   # non-shifted: mask input dropped entirely
        ((4, 4), 2, 6, 6, (2, 2)),   # spatial-padding fallback, residual fused in kernel
        ((3, 3), 2, 6, 6, (1, 1)),   # N=9 -> token-padded to 16 (sublane alignment)
    ]

    key = jax.random.PRNGKey(0)
    for ci, (window_size, B, H, W, shift_size) in enumerate(test_cases):
        pkey, xkey = jax.random.split(jax.random.fold_in(key, ci))
        p = make_params(pkey, C, num_heads, window_size)
        x = jax.random.normal(xkey, (B, H, W, C), jnp.float32)
        out = swin_block_forward_pallas(x, p, window_size, shift_size, num_heads)
        out = jax.block_until_ready(out)
        ref = ref_block_forward(x, p, window_size, shift_size, num_heads)
        # bf16 matmul operands (f32 accumulation) + approx-reciprocal softmax
        # -> slightly looser tolerance than a pure-f32 comparison.
        np.testing.assert_allclose(np.asarray(out), np.asarray(ref),
                                   rtol=2e-2, atol=2e-2)

    print("KERNEL_OK")
</pallas_src>

<mosaic_0001>
module attributes {stable_mosaic.version = 11 : i64} {
  func.func @window_attn_kernel(%arg0: i32, %arg1: i32, %arg2: memref<64x32xf32, #tpu.memory_space<vmem>>, %arg3: memref<4x16x16xf32, #tpu.memory_space<vmem>>, %arg4: memref<4x16x16xf32, #tpu.memory_space<vmem>>, %arg5: memref<1x32xf32, #tpu.memory_space<vmem>>, %arg6: memref<1x32xf32, #tpu.memory_space<vmem>>, %arg7: memref<32x96xbf16, #tpu.memory_space<vmem>>, %arg8: memref<1x96xf32, #tpu.memory_space<vmem>>, %arg9: memref<32x32xbf16, #tpu.memory_space<vmem>>, %arg10: memref<1x32xf32, #tpu.memory_space<vmem>>, %arg11: memref<64x32xf32, #tpu.memory_space<vmem>>) attributes {dimension_semantics = [#tpu.dimension_semantics<parallel>, #tpu.dimension_semantics<parallel>], iteration_bounds = array<i64: 2, 1>, scalar_prefetch = 0 : i64, scratch_operands = 0 : i64, tpu.core_type = #tpu.core_type<tc>, window_params = [{transform_indices = @transform_0, window_bounds = array<i64: 64, 32>}, {pipeline_mode = #tpu.pipeline_mode<synchronous>, transform_indices = @transform_1, window_bounds = array<i64: 4, 16, 16>}, {transform_indices = @transform_2, window_bounds = array<i64: 4, 16, 16>}, {pipeline_mode = #tpu.pipeline_mode<synchronous>, transform_indices = @transform_3, window_bounds = array<i64: 1, 32>}, {pipeline_mode = #tpu.pipeline_mode<synchronous>, transform_indices = @transform_4, window_bounds = array<i64: 1, 32>}, {pipeline_mode = #tpu.pipeline_mode<synchronous>, transform_indices = @transform_5, window_bounds = array<i64: 32, 96>}, {pipeline_mode = #tpu.pipeline_mode<synchronous>, transform_indices = @transform_6, window_bounds = array<i64: 1, 96>}, {pipeline_mode = #tpu.pipeline_mode<synchronous>, transform_indices = @transform_7, window_bounds = array<i64: 32, 32>}, {pipeline_mode = #tpu.pipeline_mode<synchronous>, transform_indices = @transform_8, window_bounds = array<i64: 1, 32>}, {transform_indices = @transform_9, window_bounds = array<i64: 64, 32>}]} {
    %c0 = arith.constant 0 : index
    %c0_0 = arith.constant 0 : index
    %0 = vector.load %arg2[%c0, %c0_0] : memref<64x32xf32, #tpu.memory_space<vmem>>, vector<64x32xf32>
    %c0_1 = arith.constant 0 : index
    %c0_2 = arith.constant 0 : index
    %1 = vector.load %arg5[%c0_1, %c0_2] : memref<1x32xf32, #tpu.memory_space<vmem>>, vector<1x32xf32>
    %2 = vector.shape_cast %1 : vector<1x32xf32> to vector<32xf32>
    %c0_3 = arith.constant 0 : index
    %c0_4 = arith.constant 0 : index
    %3 = vector.load %arg6[%c0_3, %c0_4] : memref<1x32xf32, #tpu.memory_space<vmem>>, vector<1x32xf32>
    %4 = vector.shape_cast %3 : vector<1x32xf32> to vector<32xf32>
    %cst = arith.constant dense<0.000000e+00> : vector<64xf32>
    %5 = vector.multi_reduction <add>, %0, %cst [1] : vector<64x32xf32> to vector<64xf32>
    %6 = vector.shape_cast %5 : vector<64xf32> to vector<64x1xf32>
    %cst_5 = arith.constant 3.200000e+01 : f32
    %7 = vector.broadcast %cst_5 : f32 to vector<64x1xf32>
    %8 = arith.divf %6, %7 : vector<64x1xf32>
    %9 = vector.broadcast %8 : vector<64x1xf32> to vector<64x32xf32>
    %10 = arith.subf %0, %9 : vector<64x32xf32>
    %11 = arith.mulf %10, %10 : vector<64x32xf32>
    %cst_6 = arith.constant dense<0.000000e+00> : vector<64xf32>
    %12 = vector.multi_reduction <add>, %11, %cst_6 [1] : vector<64x32xf32> to vector<64xf32>
    %13 = vector.shape_cast %12 : vector<64xf32> to vector<64x1xf32>
    %cst_7 = arith.constant 3.200000e+01 : f32
    %14 = vector.broadcast %cst_7 : f32 to vector<64x1xf32>
    %15 = arith.divf %13, %14 : vector<64x1xf32>
    %16 = vector.broadcast %8 : vector<64x1xf32> to vector<64x32xf32>
    %17 = arith.subf %0, %16 : vector<64x32xf32>
    %cst_8 = arith.constant 9.99999974E-6 : f32
    %18 = vector.broadcast %cst_8 : f32 to vector<64x1xf32>
    %19 = arith.addf %15, %18 : vector<64x1xf32>
    %20 = math.rsqrt %19 : vector<64x1xf32>
    %21 = vector.broadcast %20 : vector<64x1xf32> to vector<64x32xf32>
    %22 = arith.mulf %17, %21 : vector<64x32xf32>
    %23 = vector.shape_cast %2 : vector<32xf32> to vector<1x32xf32>
    %24 = vector.broadcast %23 : vector<1x32xf32> to vector<64x32xf32>
    %25 = arith.mulf %22, %24 : vector<64x32xf32>
    %26 = vector.shape_cast %4 : vector<32xf32> to vector<1x32xf32>
    %27 = vector.broadcast %26 : vector<1x32xf32> to vector<64x32xf32>
    %28 = arith.addf %25, %27 : vector<64x32xf32>
    %29 = arith.truncf %28 : vector<64x32xf32> to vector<64x32xbf16>
    %c0_9 = arith.constant 0 : index
    %c0_10 = arith.constant 0 : index
    %30 = vector.load %arg7[%c0_9, %c0_10] : memref<32x96xbf16, #tpu.memory_space<vmem>>, vector<32x96xbf16>
    %cst_11 = arith.constant dense<0.000000e+00> : vector<64x96xf32>
    %31 = tpu.matmul %29, %30, %cst_11 {dimension_numbers = #tpu.dot_dimension_numbers<[1], [0], [0], [1], [0, 0, 1, 1], [], []>} : vector<64x32xbf16>, vector<32x96xbf16>, vector<64x96xf32> -> vector<64x96xf32>
    %c0_12 = arith.constant 0 : index
    %c0_13 = arith.constant 0 : index
    %32 = vector.load %arg8[%c0_12, %c0_13] : memref<1x96xf32, #tpu.memory_space<vmem>>, vector<1x96xf32>
    %33 = vector.shape_cast %32 : vector<1x96xf32> to vector<96xf32>
    %34 = vector.shape_cast %33 : vector<96xf32> to vector<1x96xf32>
    %35 = vector.broadcast %34 : vector<1x96xf32> to vector<64x96xf32>
    %36 = arith.addf %31, %35 : vector<64x96xf32>
    %c0_14 = arith.constant 0 : index
    %c0_15 = arith.constant 0 : index
    %c0_16 = arith.constant 0 : index
    %37 = vector.load %arg3[%c0_14, %c0_15, %c0_16] : memref<4x16x16xf32, #tpu.memory_space<vmem>>, vector<4x16x16xf32>
    %c0_17 = arith.constant 0 : index
    %c0_18 = arith.constant 0 : index
    %c0_19 = arith.constant 0 : index
    %38 = vector.load %arg4[%c0_17, %c0_18, %c0_19] : memref<4x16x16xf32, #tpu.memory_space<vmem>>, vector<4x16x16xf32>
    %39 = vector.shape_cast %36 : vector<64x96xf32> to vector<4x16x3x4x8xf32>
    %40 = tpu.transpose %39, [0, 3, 2, 1, 4] : vector<4x16x3x4x8xf32> -> vector<4x4x3x16x8xf32>
    %41 = vector.shape_cast %40 : vector<4x4x3x16x8xf32> to vector<16x3x16x8xf32>
    %42 = arith.truncf %41 : vector<16x3x16x8xf32> to vector<16x3x16x8xbf16>
    %43 = vector.extract_strided_slice %42 {offsets = [0, 0, 0, 0], sizes = [16, 1, 16, 8], strides = [1, 1, 1, 1]} : vector<16x3x16x8xbf16> to vector<16x1x16x8xbf16>
    %44 = vector.shape_cast %43 : vector<16x1x16x8xbf16> to vector<16x16x8xbf16>
    %45 = vector.extract_strided_slice %42 {offsets = [0, 1, 0, 0], sizes = [16, 1, 16, 8], strides = [1, 1, 1, 1]} : vector<16x3x16x8xbf16> to vector<16x1x16x8xbf16>
    %46 = vector.shape_cast %45 : vector<16x1x16x8xbf16> to vector<16x16x8xbf16>
    %47 = vector.extract_strided_slice %42 {offsets = [0, 2, 0, 0], sizes = [16, 1, 16, 8], strides = [1, 1, 1, 1]} : vector<16x3x16x8xbf16> to vector<16x1x16x8xbf16>
    %48 = vector.shape_cast %47 : vector<16x1x16x8xbf16> to vector<16x16x8xbf16>
    "tpu.trace_start"() <{level = 10 : i32, message = "bnd,bmd->bnm"}> : () -> ()
    %cst_20 = arith.constant dense<0.000000e+00> : vector<16x16x16xf32>
    %49 = tpu.matmul %44, %46, %cst_20 {dimension_numbers = #tpu.dot_dimension_numbers<[2], [2], [1], [1], [0, 0, 0, 1, 1, 1], [0], [0]>} : vector<16x16x8xbf16>, vector<16x16x8xbf16>, vector<16x16x16xf32> -> vector<16x16x16xf32>
    "tpu.trace_stop"() : () -> ()
    %cst_21 = arith.constant 0.353553385 : f32
    %50 = vector.broadcast %cst_21 : f32 to vector<16x16x16xf32>
    %51 = arith.mulf %49, %50 : vector<16x16x16xf32>
    %52 = vector.shape_cast %51 : vector<16x16x16xf32> to vector<4x4x16x16xf32>
    %53 = vector.shape_cast %37 : vector<4x16x16xf32> to vector<1x4x16x16xf32>
    %54 = vector.broadcast %53 : vector<1x4x16x16xf32> to vector<4x4x16x16xf32>
    %55 = arith.addf %52, %54 : vector<4x4x16x16xf32>
    %56 = vector.shape_cast %38 : vector<4x16x16xf32> to vector<4x1x16x16xf32>
    %57 = vector.broadcast %56 : vector<4x1x16x16xf32> to vector<4x4x16x16xf32>
    %58 = arith.addf %55, %57 : vector<4x4x16x16xf32>
    %cst_22 = arith.constant dense<0xFF800000> : vector<4x4x16xf32>
    %59 = vector.multi_reduction <maximumf>, %58, %cst_22 [3] : vector<4x4x16x16xf32> to vector<4x4x16xf32>
    %60 = vector.shape_cast %59 : vector<4x4x16xf32> to vector<4x4x16x1xf32>
    %61 = vector.broadcast %60 : vector<4x4x16x1xf32> to vector<4x4x16x16xf32>
    %62 = arith.subf %58, %61 : vector<4x4x16x16xf32>
    %63 = math.exp %62 : vector<4x4x16x16xf32>
    %cst_23 = arith.constant dense<0.000000e+00> : vector<4x4x16xf32>
    %64 = vector.multi_reduction <add>, %63, %cst_23 [3] : vector<4x4x16x16xf32> to vector<4x4x16xf32>
    %65 = vector.shape_cast %64 : vector<4x4x16xf32> to vector<4x4x16x1xf32>
    %66 = tpu.reciprocal %65 {approx = true} : vector<4x4x16x1xf32> -> vector<4x4x16x1xf32>
    %67 = vector.broadcast %66 : vector<4x4x16x1xf32> to vector<4x4x16x16xf32>
    %68 = arith.mulf %63, %67 : vector<4x4x16x16xf32>
    %69 = vector.shape_cast %68 : vector<4x4x16x16xf32> to vector<16x16x16xf32>
    %70 = arith.truncf %69 : vector<16x16x16xf32> to vector<16x16x16xbf16>
    "tpu.trace_start"() <{level = 10 : i32, message = "bnm,bmd->bnd"}> : () -> ()
    %cst_24 = arith.constant dense<0.000000e+00> : vector<16x16x8xf32>
    %71 = tpu.matmul %70, %48, %cst_24 {dimension_numbers = #tpu.dot_dimension_numbers<[2], [1], [1], [2], [0, 0, 0, 1, 1, 2], [0], [0]>} : vector<16x16x16xbf16>, vector<16x16x8xbf16>, vector<16x16x8xf32> -> vector<16x16x8xf32>
    "tpu.trace_stop"() : () -> ()
    %72 = vector.shape_cast %71 : vector<16x16x8xf32> to vector<4x4x16x8xf32>
    %73 = tpu.transpose %72, [0, 2, 1, 3] : vector<4x4x16x8xf32> -> vector<4x16x4x8xf32>
    %74 = vector.shape_cast %73 : vector<4x16x4x8xf32> to vector<64x32xf32>
    %75 = arith.truncf %74 : vector<64x32xf32> to vector<64x32xbf16>
    %c0_25 = arith.constant 0 : index
    %c0_26 = arith.constant 0 : index
    %76 = vector.load %arg9[%c0_25, %c0_26] : memref<32x32xbf16, #tpu.memory_space<vmem>>, vector<32x32xbf16>
    %cst_27 = arith.constant dense<0.000000e+00> : vector<64x32xf32>
    %77 = tpu.matmul %75, %76, %cst_27 {dimension_numbers = #tpu.dot_dimension_numbers<[1], [0], [0], [1], [0, 0, 1, 1], [], []>} : vector<64x32xbf16>, vector<32x32xbf16>, vector<64x32xf32> -> vector<64x32xf32>
    %c0_28 = arith.constant 0 : index
    %c0_29 = arith.constant 0 : index
    %78 = vector.load %arg10[%c0_28, %c0_29] : memref<1x32xf32, #tpu.memory_space<vmem>>, vector<1x32xf32>
    %79 = vector.shape_cast %78 : vector<1x32xf32> to vector<32xf32>
    %80 = vector.shape_cast %79 : vector<32xf32> to vector<1x32xf32>
    %81 = vector.broadcast %80 : vector<1x32xf32> to vector<64x32xf32>
    %82 = arith.addf %77, %81 : vector<64x32xf32>
    %83 = arith.addf %82, %0 : vector<64x32xf32>
    %c0_30 = arith.constant 0 : index
    %c0_31 = arith.constant 0 : index
    %84 = vector.load %arg11[%c0_30, %c0_31] : memref<64x32xf32, #tpu.memory_space<vmem>>, vector<64x32xf32>
    tpu.vector_store %arg11[%c0_30, %c0_31], %83 {strides = array<i32>} : memref<64x32xf32, #tpu.memory_space<vmem>>, vector<64x32xf32>,
    return
  }
  func.func @transform_0(%arg0: i32, %arg1: i32) -> (i32, i32) {
    %c1_i32 = arith.constant 1 : i32
    %0 = arith.muli %arg0, %c1_i32 : i32
    %1 = arith.addi %0, %arg1 : i32
    %c0_i32 = arith.constant 0 : i32
    %c0_i32_0 = arith.constant 0 : i32
    return %1, %c0_i32 : i32, i32
  }
  func.func @transform_1(%arg0: i32, %arg1: i32) -> (i32, i32, i32) {
    %c0_i32 = arith.constant 0 : i32
    %c0_i32_0 = arith.constant 0 : i32
    %c0_i32_1 = arith.constant 0 : i32
    %c0_i32_2 = arith.constant 0 : i32
    return %c0_i32, %c0_i32_0, %c0_i32_1 : i32, i32, i32
  }
  func.func @transform_2(%arg0: i32, %arg1: i32) -> (i32, i32, i32) {
    %c0_i32 = arith.constant 0 : i32
    %c0_i32_0 = arith.constant 0 : i32
    %c0_i32_1 = arith.constant 0 : i32
    return %arg1, %c0_i32, %c0_i32_0 : i32, i32, i32
  }
  func.func @transform_3(%arg0: i32, %arg1: i32) -> (i32, i32) {
    %c0_i32 = arith.constant 0 : i32
    %c0_i32_0 = arith.constant 0 : i32
    %c0_i32_1 = arith.constant 0 : i32
    return %c0_i32, %c0_i32_0 : i32, i32
  }
  func.func @transform_4(%arg0: i32, %arg1: i32) -> (i32, i32) {
    %c0_i32 = arith.constant 0 : i32
    %c0_i32_0 = arith.constant 0 : i32
    %c0_i32_1 = arith.constant 0 : i32
    return %c0_i32, %c0_i32_0 : i32, i32
  }
  func.func @transform_5(%arg0: i32, %arg1: i32) -> (i32, i32) {
    %c0_i32 = arith.constant 0 : i32
    %c0_i32_0 = arith.constant 0 : i32
    %c0_i32_1 = arith.constant 0 : i32
    return %c0_i32, %c0_i32_0 : i32, i32
  }
  func.func @transform_6(%arg0: i32, %arg1: i32) -> (i32, i32) {
    %c0_i32 = arith.constant 0 : i32
    %c0_i32_0 = arith.constant 0 : i32
    %c0_i32_1 = arith.constant 0 : i32
    return %c0_i32, %c0_i32_0 : i32, i32
  }
  func.func @transform_7(%arg0: i32, %arg1: i32) -> (i32, i32) {
    %c0_i32 = arith.constant 0 : i32
    %c0_i32_0 = arith.constant 0 : i32
    %c0_i32_1 = arith.constant 0 : i32
    return %c0_i32, %c0_i32_0 : i32, i32
  }
  func.func @transform_8(%arg0: i32, %arg1: i32) -> (i32, i32) {
    %c0_i32 = arith.constant 0 : i32
    %c0_i32_0 = arith.constant 0 : i32
    %c0_i32_1 = arith.constant 0 : i32
    return %c0_i32, %c0_i32_0 : i32, i32
  }
  func.func @transform_9(%arg0: i32, %arg1: i32) -> (i32, i32) {
    %c1_i32 = arith.constant 1 : i32
    %0 = arith.muli %arg0, %c1_i32 : i32
    %1 = arith.addi %0, %arg1 : i32
    %c0_i32 = arith.constant 0 : i32
    %c0_i32_0 = arith.constant 0 : i32
    return %1, %c0_i32 : i32, i32
  }
}

module attributes {stable_mosaic.version = 11 : i64} {
  func.func @window_attn_kernel(%arg0: i32, %arg1: i32, %arg2: memref<64x32xf32, #tpu.memory_space<vmem>>, %arg3: memref<4x16x16xf32, #tpu.memory_space<vmem>>, %arg4: memref<4x16x16xf32, #tpu.memory_space<vmem>>, %arg5: memref<1x32xf32, #tpu.memory_space<vmem>>, %arg6: memref<1x32xf32, #tpu.memory_space<vmem>>, %arg7: memref<32x96xbf16, #tpu.memory_space<vmem>>, %arg8: memref<1x96xf32, #tpu.memory_space<vmem>>, %arg9: memref<32x32xbf16, #tpu.memory_space<vmem>>, %arg10: memref<1x32xf32, #tpu.memory_space<vmem>>, %arg11: memref<64x32xf32, #tpu.memory_space<vmem>>) attributes {dimension_semantics = [#tpu.dimension_semantics<parallel>, #tpu.dimension_semantics<parallel>], iteration_bounds = array<i64: 2, 1>, scalar_prefetch = 0 : i64, scratch_operands = 0 : i64, tpu.core_type = #tpu.core_type<tc>, window_params = [{transform_indices = @transform_0, window_bounds = array<i64: 64, 32>}, {pipeline_mode = #tpu.pipeline_mode<synchronous>, transform_indices = @transform_1, window_bounds = array<i64: 4, 16, 16>}, {transform_indices = @transform_2, window_bounds = array<i64: 4, 16, 16>}, {pipeline_mode = #tpu.pipeline_mode<synchronous>, transform_indices = @transform_3, window_bounds = array<i64: 1, 32>}, {pipeline_mode = #tpu.pipeline_mode<synchronous>, transform_indices = @transform_4, window_bounds = array<i64: 1, 32>}, {pipeline_mode = #tpu.pipeline_mode<synchronous>, transform_indices = @transform_5, window_bounds = array<i64: 32, 96>}, {pipeline_mode = #tpu.pipeline_mode<synchronous>, transform_indices = @transform_6, window_bounds = array<i64: 1, 96>}, {pipeline_mode = #tpu.pipeline_mode<synchronous>, transform_indices = @transform_7, window_bounds = array<i64: 32, 32>}, {pipeline_mode = #tpu.pipeline_mode<synchronous>, transform_indices = @transform_8, window_bounds = array<i64: 1, 32>}, {transform_indices = @transform_9, window_bounds = array<i64: 64, 32>}]} {
    %c0 = arith.constant 0 : index
    %c0_0 = arith.constant 0 : index
    %0 = vector.load %arg2[%c0, %c0_0] : memref<64x32xf32, #tpu.memory_space<vmem>>, vector<64x32xf32>
    %c0_1 = arith.constant 0 : index
    %c0_2 = arith.constant 0 : index
    %1 = vector.load %arg5[%c0_1, %c0_2] : memref<1x32xf32, #tpu.memory_space<vmem>>, vector<1x32xf32>
    %2 = vector.shape_cast %1 : vector<1x32xf32> to vector<32xf32>
    %c0_3 = arith.constant 0 : index
    %c0_4 = arith.constant 0 : index
    %3 = vector.load %arg6[%c0_3, %c0_4] : memref<1x32xf32, #tpu.memory_space<vmem>>, vector<1x32xf32>
    %4 = vector.shape_cast %3 : vector<1x32xf32> to vector<32xf32>
    %cst = arith.constant dense<0.000000e+00> : vector<64xf32>
    %5 = vector.multi_reduction <add>, %0, %cst [1] : vector<64x32xf32> to vector<64xf32>
    %6 = vector.shape_cast %5 : vector<64xf32> to vector<64x1xf32>
    %cst_5 = arith.constant 3.200000e+01 : f32
    %7 = vector.broadcast %cst_5 : f32 to vector<64x1xf32>
    %8 = arith.divf %6, %7 : vector<64x1xf32>
    %9 = vector.broadcast %8 : vector<64x1xf32> to vector<64x32xf32>
    %10 = arith.subf %0, %9 : vector<64x32xf32>
    %11 = arith.mulf %10, %10 : vector<64x32xf32>
    %cst_6 = arith.constant dense<0.000000e+00> : vector<64xf32>
    %12 = vector.multi_reduction <add>, %11, %cst_6 [1] : vector<64x32xf32> to vector<64xf32>
    %13 = vector.shape_cast %12 : vector<64xf32> to vector<64x1xf32>
    %cst_7 = arith.constant 3.200000e+01 : f32
    %14 = vector.broadcast %cst_7 : f32 to vector<64x1xf32>
    %15 = arith.divf %13, %14 : vector<64x1xf32>
    %16 = vector.broadcast %8 : vector<64x1xf32> to vector<64x32xf32>
    %17 = arith.subf %0, %16 : vector<64x32xf32>
    %cst_8 = arith.constant 9.99999974E-6 : f32
    %18 = vector.broadcast %cst_8 : f32 to vector<64x1xf32>
    %19 = arith.addf %15, %18 : vector<64x1xf32>
    %20 = math.rsqrt %19 : vector<64x1xf32>
    %21 = vector.broadcast %20 : vector<64x1xf32> to vector<64x32xf32>
    %22 = arith.mulf %17, %21 : vector<64x32xf32>
    %23 = vector.shape_cast %2 : vector<32xf32> to vector<1x32xf32>
    %24 = vector.broadcast %23 : vector<1x32xf32> to vector<64x32xf32>
    %25 = arith.mulf %22, %24 : vector<64x32xf32>
    %26 = vector.shape_cast %4 : vector<32xf32> to vector<1x32xf32>
    %27 = vector.broadcast %26 : vector<1x32xf32> to vector<64x32xf32>
    %28 = arith.addf %25, %27 : vector<64x32xf32>
    %29 = arith.truncf %28 : vector<64x32xf32> to vector<64x32xbf16>
    %c0_9 = arith.constant 0 : index
    %c0_10 = arith.constant 0 : index
    %30 = vector.load %arg7[%c0_9, %c0_10] : memref<32x96xbf16, #tpu.memory_space<vmem>>, vector<32x96xbf16>
    %cst_11 = arith.constant dense<0.000000e+00> : vector<64x96xf32>
    %31 = tpu.matmul %29, %30, %cst_11 {dimension_numbers = #tpu.dot_dimension_numbers<[1], [0], [0], [1], [0, 0, 1, 1], [], []>} : vector<64x32xbf16>, vector<32x96xbf16>, vector<64x96xf32> -> vector<64x96xf32>
    %c0_12 = arith.constant 0 : index
    %c0_13 = arith.constant 0 : index
    %32 = vector.load %arg8[%c0_12, %c0_13] : memref<1x96xf32, #tpu.memory_space<vmem>>, vector<1x96xf32>
    %33 = vector.shape_cast %32 : vector<1x96xf32> to vector<96xf32>
    %34 = vector.shape_cast %33 : vector<96xf32> to vector<1x96xf32>
    %35 = vector.broadcast %34 : vector<1x96xf32> to vector<64x96xf32>
    %36 = arith.addf %31, %35 : vector<64x96xf32>
    %c0_14 = arith.constant 0 : index
    %c0_15 = arith.constant 0 : index
    %c0_16 = arith.constant 0 : index
    %37 = vector.load %arg3[%c0_14, %c0_15, %c0_16] : memref<4x16x16xf32, #tpu.memory_space<vmem>>, vector<4x16x16xf32>
    %c0_17 = arith.constant 0 : index
    %c0_18 = arith.constant 0 : index
    %c0_19 = arith.constant 0 : index
    %38 = vector.load %arg4[%c0_17, %c0_18, %c0_19] : memref<4x16x16xf32, #tpu.memory_space<vmem>>, vector<4x16x16xf32>
    %39 = vector.shape_cast %36 : vector<64x96xf32> to vector<4x16x96xf32>
    %40 = vector.extract_strided_slice %39 {offsets = [0, 0, 0], sizes = [4, 16, 8], strides = [1, 1, 1]} : vector<4x16x96xf32> to vector<4x16x8xf32>
    %41 = arith.truncf %40 : vector<4x16x8xf32> to vector<4x16x8xbf16>
    %42 = vector.extract_strided_slice %39 {offsets = [0, 0, 32], sizes = [4, 16, 8], strides = [1, 1, 1]} : vector<4x16x96xf32> to vector<4x16x8xf32>
    %43 = arith.truncf %42 : vector<4x16x8xf32> to vector<4x16x8xbf16>
    %44 = vector.extract_strided_slice %39 {offsets = [0, 0, 64], sizes = [4, 16, 8], strides = [1, 1, 1]} : vector<4x16x96xf32> to vector<4x16x8xf32>
    %45 = arith.truncf %44 : vector<4x16x8xf32> to vector<4x16x8xbf16>
    "tpu.trace_start"() <{level = 10 : i32, message = "wnd,wmd->wnm"}> : () -> ()
    %cst_20 = arith.constant dense<0.000000e+00> : vector<4x16x16xf32>
    %46 = tpu.matmul %41, %43, %cst_20 {dimension_numbers = #tpu.dot_dimension_numbers<[2], [2], [1], [1], [0, 0, 0, 1, 1, 1], [0], [0]>} : vector<4x16x8xbf16>, vector<4x16x8xbf16>, vector<4x16x16xf32> -> vector<4x16x16xf32>
    "tpu.trace_stop"() : () -> ()
    %cst_21 = arith.constant 0.353553385 : f32
    %47 = vector.broadcast %cst_21 : f32 to vector<4x16x16xf32>
    %48 = arith.mulf %46, %47 : vector<4x16x16xf32>
    %49 = vector.extract_strided_slice %37 {offsets = [0, 0, 0], sizes = [1, 16, 16], strides = [1, 1, 1]} : vector<4x16x16xf32> to vector<1x16x16xf32>
    %50 = vector.shape_cast %49 : vector<1x16x16xf32> to vector<16x16xf32>
    %51 = vector.shape_cast %50 : vector<16x16xf32> to vector<1x16x16xf32>
    %52 = vector.broadcast %51 : vector<1x16x16xf32> to vector<4x16x16xf32>
    %53 = arith.addf %48, %52 : vector<4x16x16xf32>
    %54 = arith.addf %53, %38 : vector<4x16x16xf32>
    %cst_22 = arith.constant dense<0xFF800000> : vector<4x16xf32>
    %55 = vector.multi_reduction <maximumf>, %54, %cst_22 [2] : vector<4x16x16xf32> to vector<4x16xf32>
    %56 = vector.shape_cast %55 : vector<4x16xf32> to vector<4x16x1xf32>
    %57 = vector.broadcast %56 : vector<4x16x1xf32> to vector<4x16x16xf32>
    %58 = arith.subf %54, %57 : vector<4x16x16xf32>
    %59 = math.exp %58 : vector<4x16x16xf32>
    %cst_23 = arith.constant dense<0.000000e+00> : vector<4x16xf32>
    %60 = vector.multi_reduction <add>, %59, %cst_23 [2] : vector<4x16x16xf32> to vector<4x16xf32>
    %61 = vector.shape_cast %60 : vector<4x16xf32> to vector<4x16x1xf32>
    %62 = tpu.reciprocal %61 {approx = true} : vector<4x16x1xf32> -> vector<4x16x1xf32>
    %63 = vector.broadcast %62 : vector<4x16x1xf32> to vector<4x16x16xf32>
    %64 = arith.mulf %59, %63 : vector<4x16x16xf32>
    %65 = arith.truncf %64 : vector<4x16x16xf32> to vector<4x16x16xbf16>
    "tpu.trace_start"() <{level = 10 : i32, message = "wnm,wmd->wnd"}> : () -> ()
    %cst_24 = arith.constant dense<0.000000e+00> : vector<4x16x8xf32>
    %66 = tpu.matmul %65, %45, %cst_24 {dimension_numbers = #tpu.dot_dimension_numbers<[2], [1], [1], [2], [0, 0, 0, 1, 1, 2], [0], [0]>} : vector<4x16x16xbf16>, vector<4x16x8xbf16>, vector<4x16x8xf32> -> vector<4x16x8xf32>
    "tpu.trace_stop"() : () -> ()
    %67 = vector.extract_strided_slice %39 {offsets = [0, 0, 8], sizes = [4, 16, 8], strides = [1, 1, 1]} : vector<4x16x96xf32> to vector<4x16x8xf32>
    %68 = arith.truncf %67 : vector<4x16x8xf32> to vector<4x16x8xbf16>
    %69 = vector.extract_strided_slice %39 {offsets = [0, 0, 40], sizes = [4, 16, 8], strides = [1, 1, 1]} : vector<4x16x96xf32> to vector<4x16x8xf32>
    %70 = arith.truncf %69 : vector<4x16x8xf32> to vector<4x16x8xbf16>
    %71 = vector.extract_strided_slice %39 {offsets = [0, 0, 72], sizes = [4, 16, 8], strides = [1, 1, 1]} : vector<4x16x96xf32> to vector<4x16x8xf32>
    %72 = arith.truncf %71 : vector<4x16x8xf32> to vector<4x16x8xbf16>
    "tpu.trace_start"() <{level = 10 : i32, message = "wnd,wmd->wnm"}> : () -> ()
    %cst_25 = arith.constant dense<0.000000e+00> : vector<4x16x16xf32>
    %73 = tpu.matmul %68, %70, %cst_25 {dimension_numbers = #tpu.dot_dimension_numbers<[2], [2], [1], [1], [0, 0, 0, 1, 1, 1], [0], [0]>} : vector<4x16x8xbf16>, vector<4x16x8xbf16>, vector<4x16x16xf32> -> vector<4x16x16xf32>
    "tpu.trace_stop"() : () -> ()
    %cst_26 = arith.constant 0.353553385 : f32
    %74 = vector.broadcast %cst_26 : f32 to vector<4x16x16xf32>
    %75 = arith.mulf %73, %74 : vector<4x16x16xf32>
    %76 = vector.extract_strided_slice %37 {offsets = [1, 0, 0], sizes = [1, 16, 16], strides = [1, 1, 1]} : vector<4x16x16xf32> to vector<1x16x16xf32>
    %77 = vector.shape_cast %76 : vector<1x16x16xf32> to vector<16x16xf32>
    %78 = vector.shape_cast %77 : vector<16x16xf32> to vector<1x16x16xf32>
    %79 = vector.broadcast %78 : vector<1x16x16xf32> to vector<4x16x16xf32>
    %80 = arith.addf %75, %79 : vector<4x16x16xf32>
    %81 = arith.addf %80, %38 : vector<4x16x16xf32>
    %cst_27 = arith.constant dense<0xFF800000> : vector<4x16xf32>
    %82 = vector.multi_reduction <maximumf>, %81, %cst_27 [2] : vector<4x16x16xf32> to vector<4x16xf32>
    %83 = vector.shape_cast %82 : vector<4x16xf32> to vector<4x16x1xf32>
    %84 = vector.broadcast %83 : vector<4x16x1xf32> to vector<4x16x16xf32>
    %85 = arith.subf %81, %84 : vector<4x16x16xf32>
    %86 = math.exp %85 : vector<4x16x16xf32>
    %cst_28 = arith.constant dense<0.000000e+00> : vector<4x16xf32>
    %87 = vector.multi_reduction <add>, %86, %cst_28 [2] : vector<4x16x16xf32> to vector<4x16xf32>
    %88 = vector.shape_cast %87 : vector<4x16xf32> to vector<4x16x1xf32>
    %89 = tpu.reciprocal %88 {approx = true} : vector<4x16x1xf32> -> vector<4x16x1xf32>
    %90 = vector.broadcast %89 : vector<4x16x1xf32> to vector<4x16x16xf32>
    %91 = arith.mulf %86, %90 : vector<4x16x16xf32>
    %92 = arith.truncf %91 : vector<4x16x16xf32> to vector<4x16x16xbf16>
    "tpu.trace_start"() <{level = 10 : i32, message = "wnm,wmd->wnd"}> : () -> ()
    %cst_29 = arith.constant dense<0.000000e+00> : vector<4x16x8xf32>
    %93 = tpu.matmul %92, %72, %cst_29 {dimension_numbers = #tpu.dot_dimension_numbers<[2], [1], [1], [2], [0, 0, 0, 1, 1, 2], [0], [0]>} : vector<4x16x16xbf16>, vector<4x16x8xbf16>, vector<4x16x8xf32> -> vector<4x16x8xf32>
    "tpu.trace_stop"() : () -> ()
    %94 = vector.extract_strided_slice %39 {offsets = [0, 0, 16], sizes = [4, 16, 8], strides = [1, 1, 1]} : vector<4x16x96xf32> to vector<4x16x8xf32>
    %95 = arith.truncf %94 : vector<4x16x8xf32> to vector<4x16x8xbf16>
    %96 = vector.extract_strided_slice %39 {offsets = [0, 0, 48], sizes = [4, 16, 8], strides = [1, 1, 1]} : vector<4x16x96xf32> to vector<4x16x8xf32>
    %97 = arith.truncf %96 : vector<4x16x8xf32> to vector<4x16x8xbf16>
    %98 = vector.extract_strided_slice %39 {offsets = [0, 0, 80], sizes = [4, 16, 8], strides = [1, 1, 1]} : vector<4x16x96xf32> to vector<4x16x8xf32>
    %99 = arith.truncf %98 : vector<4x16x8xf32> to vector<4x16x8xbf16>
    "tpu.trace_start"() <{level = 10 : i32, message = "wnd,wmd->wnm"}> : () -> ()
    %cst_30 = arith.constant dense<0.000000e+00> : vector<4x16x16xf32>
    %100 = tpu.matmul %95, %97, %cst_30 {dimension_numbers = #tpu.dot_dimension_numbers<[2], [2], [1], [1], [0, 0, 0, 1, 1, 1], [0], [0]>} : vector<4x16x8xbf16>, vector<4x16x8xbf16>, vector<4x16x16xf32> -> vector<4x16x16xf32>
    "tpu.trace_stop"() : () -> ()
    %cst_31 = arith.constant 0.353553385 : f32
    %101 = vector.broadcast %cst_31 : f32 to vector<4x16x16xf32>
    %102 = arith.mulf %100, %101 : vector<4x16x16xf32>
    %103 = vector.extract_strided_slice %37 {offsets = [2, 0, 0], sizes = [1, 16, 16], strides = [1, 1, 1]} : vector<4x16x16xf32> to vector<1x16x16xf32>
    %104 = vector.shape_cast %103 : vector<1x16x16xf32> to vector<16x16xf32>
    %105 = vector.shape_cast %104 : vector<16x16xf32> to vector<1x16x16xf32>
    %106 = vector.broadcast %105 : vector<1x16x16xf32> to vector<4x16x16xf32>
    %107 = arith.addf %102, %106 : vector<4x16x16xf32>
    %108 = arith.addf %107, %38 : vector<4x16x16xf32>
    %cst_32 = arith.constant dense<0xFF800000> : vector<4x16xf32>
    %109 = vector.multi_reduction <maximumf>, %108, %cst_32 [2] : vector<4x16x16xf32> to vector<4x16xf32>
    %110 = vector.shape_cast %109 : vector<4x16xf32> to vector<4x16x1xf32>
    %111 = vector.broadcast %110 : vector<4x16x1xf32> to vector<4x16x16xf32>
    %112 = arith.subf %108, %111 : vector<4x16x16xf32>
    %113 = math.exp %112 : vector<4x16x16xf32>
    %cst_33 = arith.constant dense<0.000000e+00> : vector<4x16xf32>
    %114 = vector.multi_reduction <add>, %113, %cst_33 [2] : vector<4x16x16xf32> to vector<4x16xf32>
    %115 = vector.shape_cast %114 : vector<4x16xf32> to vector<4x16x1xf32>
    %116 = tpu.reciprocal %115 {approx = true} : vector<4x16x1xf32> -> vector<4x16x1xf32>
    %117 = vector.broadcast %116 : vector<4x16x1xf32> to vector<4x16x16xf32>
    %118 = arith.mulf %113, %117 : vector<4x16x16xf32>
    %119 = arith.truncf %118 : vector<4x16x16xf32> to vector<4x16x16xbf16>
    "tpu.trace_start"() <{level = 10 : i32, message = "wnm,wmd->wnd"}> : () -> ()
    %cst_34 = arith.constant dense<0.000000e+00> : vector<4x16x8xf32>
    %120 = tpu.matmul %119, %99, %cst_34 {dimension_numbers = #tpu.dot_dimension_numbers<[2], [1], [1], [2], [0, 0, 0, 1, 1, 2], [0], [0]>} : vector<4x16x16xbf16>, vector<4x16x8xbf16>, vector<4x16x8xf32> -> vector<4x16x8xf32>
    "tpu.trace_stop"() : () -> ()
    %121 = vector.extract_strided_slice %39 {offsets = [0, 0, 24], sizes = [4, 16, 8], strides = [1, 1, 1]} : vector<4x16x96xf32> to vector<4x16x8xf32>
    %122 = arith.truncf %121 : vector<4x16x8xf32> to vector<4x16x8xbf16>
    %123 = vector.extract_strided_slice %39 {offsets = [0, 0, 56], sizes = [4, 16, 8], strides = [1, 1, 1]} : vector<4x16x96xf32> to vector<4x16x8xf32>
    %124 = arith.truncf %123 : vector<4x16x8xf32> to vector<4x16x8xbf16>
    %125 = vector.extract_strided_slice %39 {offsets = [0, 0, 88], sizes = [4, 16, 8], strides = [1, 1, 1]} : vector<4x16x96xf32> to vector<4x16x8xf32>
    %126 = arith.truncf %125 : vector<4x16x8xf32> to vector<4x16x8xbf16>
    "tpu.trace_start"() <{level = 10 : i32, message = "wnd,wmd->wnm"}> : () -> ()
    %cst_35 = arith.constant dense<0.000000e+00> : vector<4x16x16xf32>
    %127 = tpu.matmul %122, %124, %cst_35 {dimension_numbers = #tpu.dot_dimension_numbers<[2], [2], [1], [1], [0, 0, 0, 1, 1, 1], [0], [0]>} : vector<4x16x8xbf16>, vector<4x16x8xbf16>, vector<4x16x16xf32> -> vector<4x16x16xf32>
    "tpu.trace_stop"() : () -> ()
    %cst_36 = arith.constant 0.353553385 : f32
    %128 = vector.broadcast %cst_36 : f32 to vector<4x16x16xf32>
    %129 = arith.mulf %127, %128 : vector<4x16x16xf32>
    %130 = vector.extract_strided_slice %37 {offsets = [3, 0, 0], sizes = [1, 16, 16], strides = [1, 1, 1]} : vector<4x16x16xf32> to vector<1x16x16xf32>
    %131 = vector.shape_cast %130 : vector<1x16x16xf32> to vector<16x16xf32>
    %132 = vector.shape_cast %131 : vector<16x16xf32> to vector<1x16x16xf32>
    %133 = vector.broadcast %132 : vector<1x16x16xf32> to vector<4x16x16xf32>
    %134 = arith.addf %129, %133 : vector<4x16x16xf32>
    %135 = arith.addf %134, %38 : vector<4x16x16xf32>
    %cst_37 = arith.constant dense<0xFF800000> : vector<4x16xf32>
    %136 = vector.multi_reduction <maximumf>, %135, %cst_37 [2] : vector<4x16x16xf32> to vector<4x16xf32>
    %137 = vector.shape_cast %136 : vector<4x16xf32> to vector<4x16x1xf32>
    %138 = vector.broadcast %137 : vector<4x16x1xf32> to vector<4x16x16xf32>
    %139 = arith.subf %135, %138 : vector<4x16x16xf32>
    %140 = math.exp %139 : vector<4x16x16xf32>
    %cst_38 = arith.constant dense<0.000000e+00> : vector<4x16xf32>
    %141 = vector.multi_reduction <add>, %140, %cst_38 [2] : vector<4x16x16xf32> to vector<4x16xf32>
    %142 = vector.shape_cast %141 : vector<4x16xf32> to vector<4x16x1xf32>
    %143 = tpu.reciprocal %142 {approx = true} : vector<4x16x1xf32> -> vector<4x16x1xf32>
    %144 = vector.broadcast %143 : vector<4x16x1xf32> to vector<4x16x16xf32>
    %145 = arith.mulf %140, %144 : vector<4x16x16xf32>
    %146 = arith.truncf %145 : vector<4x16x16xf32> to vector<4x16x16xbf16>
    "tpu.trace_start"() <{level = 10 : i32, message = "wnm,wmd->wnd"}> : () -> ()
    %cst_39 = arith.constant dense<0.000000e+00> : vector<4x16x8xf32>
    %147 = tpu.matmul %146, %126, %cst_39 {dimension_numbers = #tpu.dot_dimension_numbers<[2], [1], [1], [2], [0, 0, 0, 1, 1, 2], [0], [0]>} : vector<4x16x16xbf16>, vector<4x16x8xbf16>, vector<4x16x8xf32> -> vector<4x16x8xf32>
    "tpu.trace_stop"() : () -> ()
    %148 = tpu.concatenate %66, %93, %120, %147 in 2 : vector<4x16x8xf32>, vector<4x16x8xf32>, vector<4x16x8xf32>, vector<4x16x8xf32> -> vector<4x16x32xf32>
    %149 = vector.shape_cast %148 : vector<4x16x32xf32> to vector<64x32xf32>
    %150 = arith.truncf %149 : vector<64x32xf32> to vector<64x32xbf16>
    %c0_40 = arith.constant 0 : index
    %c0_41 = arith.constant 0 : index
    %151 = vector.load %arg9[%c0_40, %c0_41] : memref<32x32xbf16, #tpu.memory_space<vmem>>, vector<32x32xbf16>
    %cst_42 = arith.constant dense<0.000000e+00> : vector<64x32xf32>
    %152 = tpu.matmul %150, %151, %cst_42 {dimension_numbers = #tpu.dot_dimension_numbers<[1], [0], [0], [1], [0, 0, 1, 1], [], []>} : vector<64x32xbf16>, vector<32x32xbf16>, vector<64x32xf32> -> vector<64x32xf32>
    %c0_43 = arith.constant 0 : index
    %c0_44 = arith.constant 0 : index
    %153 = vector.load %arg10[%c0_43, %c0_44] : memref<1x32xf32, #tpu.memory_space<vmem>>, vector<1x32xf32>
    %154 = vector.shape_cast %153 : vector<1x32xf32> to vector<32xf32>
    %155 = vector.shape_cast %154 : vector<32xf32> to vector<1x32xf32>
    %156 = vector.broadcast %155 : vector<1x32xf32> to vector<64x32xf32>
    %157 = arith.addf %152, %156 : vector<64x32xf32>
    %158 = arith.addf %157, %0 : vector<64x32xf32>
    %c0_45 = arith.constant 0 : index
    %c0_46 = arith.constant 0 : index
    %159 = vector.load %arg11[%c0_45, %c0_46] : memref<64x32xf32, #tpu.memory_space<vmem>>, vector<64x32xf32>
    tpu.vector_store %arg11[%c0_45, %c0_46], %158 {strides = array<i32>} : memref<64x32xf32, #tpu.memory_space<vmem>>, vector<64x32xf32>,
    return
  }
  func.func @transform_0(%arg0: i32, %arg1: i32) -> (i32, i32) {
    %c1_i32 = arith.constant 1 : i32
    %0 = arith.muli %arg0, %c1_i32 : i32
    %1 = arith.addi %0, %arg1 : i32
    %c0_i32 = arith.constant 0 : i32
    %c0_i32_0 = arith.constant 0 : i32
    return %1, %c0_i32 : i32, i32
  }
  func.func @transform_1(%arg0: i32, %arg1: i32) -> (i32, i32, i32) {
    %c0_i32 = arith.constant 0 : i32
    %c0_i32_0 = arith.constant 0 : i32
    %c0_i32_1 = arith.constant 0 : i32
    %c0_i32_2 = arith.constant 0 : i32
    return %c0_i32, %c0_i32_0, %c0_i32_1 : i32, i32, i32
  }
  func.func @transform_2(%arg0: i32, %arg1: i32) -> (i32, i32, i32) {
    %c0_i32 = arith.constant 0 : i32
    %c0_i32_0 = arith.constant 0 : i32
    %c0_i32_1 = arith.constant 0 : i32
    return %arg1, %c0_i32, %c0_i32_0 : i32, i32, i32
  }
  func.func @transform_3(%arg0: i32, %arg1: i32) -> (i32, i32) {
    %c0_i32 = arith.constant 0 : i32
    %c0_i32_0 = arith.constant 0 : i32
    %c0_i32_1 = arith.constant 0 : i32
    return %c0_i32, %c0_i32_0 : i32, i32
  }
  func.func @transform_4(%arg0: i32, %arg1: i32) -> (i32, i32) {
    %c0_i32 = arith.constant 0 : i32
    %c0_i32_0 = arith.constant 0 : i32
    %c0_i32_1 = arith.constant 0 : i32
    return %c0_i32, %c0_i32_0 : i32, i32
  }
  func.func @transform_5(%arg0: i32, %arg1: i32) -> (i32, i32) {
    %c0_i32 = arith.constant 0 : i32
    %c0_i32_0 = arith.constant 0 : i32
    %c0_i32_1 = arith.constant 0 : i32
    return %c0_i32, %c0_i32_0 : i32, i32
  }
  func.func @transform_6(%arg0: i32, %arg1: i32) -> (i32, i32) {
    %c0_i32 = arith.constant 0 : i32
    %c0_i32_0 = arith.constant 0 : i32
    %c0_i32_1 = arith.constant 0 : i32
    return %c0_i32, %c0_i32_0 : i32, i32
  }
  func.func @transform_7(%arg0: i32, %arg1: i32) -> (i32, i32) {
    %c0_i32 = arith.constant 0 : i32
    %c0_i32_0 = arith.constant 0 : i32
    %c0_i32_1 = arith.constant 0 : i32
    return %c0_i32, %c0_i32_0 : i32, i32
  }
  func.func @transform_8(%arg0: i32, %arg1: i32) -> (i32, i32) {
    %c0_i32 = arith.constant 0 : i32
    %c0_i32_0 = arith.constant 0 : i32
    %c0_i32_1 = arith.constant 0 : i32
    return %c0_i32, %c0_i32_0 : i32, i32
  }
  func.func @transform_9(%arg0: i32, %arg1: i32) -> (i32, i32) {
    %c1_i32 = arith.constant 1 : i32
    %0 = arith.muli %arg0, %c1_i32 : i32
    %1 = arith.addi %0, %arg1 : i32
    %c0_i32 = arith.constant 0 : i32
    %c0_i32_0 = arith.constant 0 : i32
    return %1, %c0_i32 : i32, i32
  }
}

</mosaic_0001>

<llo_original>
// kernel: tpu_custom_call.1
$region0: #{tpu_custom_call.1}
  #allocation0 [shape = 'u32[]', space=smem, size = 0x4, offset = 0x4, fixed_abs, tag = 'smem constant byte address 0x4 - core index']
  #allocation1 [shape = 'u32[144,128]{1,0:T(1,128)}', space=vmem, size = 0x12000, scoped, tag = 'internal scratch']
  %s0 = inlined_call_operand.vmem [shape: f32[128,32], index: 0, kind: input, shape index: {}]
  %s1 = inlined_call_operand.vmem [shape: f32[4,16,16], index: 1, kind: input, shape index: {}]
  %s2 = inlined_call_operand.vmem [shape: f32[4,16,16], index: 2, kind: input, shape index: {}]
  %s3 = inlined_call_operand.vmem [shape: f32[1,32], index: 3, kind: input, shape index: {}]
  %s4 = inlined_call_operand.vmem [shape: f32[1,32], index: 4, kind: input, shape index: {}]
  %s5 = inlined_call_operand.vmem [shape: bf16[32,96], index: 5, kind: input, shape index: {}]
  %s6 = inlined_call_operand.vmem [shape: f32[1,96], index: 6, kind: input, shape index: {}]
  %s7 = inlined_call_operand.vmem [shape: bf16[32,32], index: 7, kind: input, shape index: {}]
  %s8 = inlined_call_operand.vmem [shape: f32[1,32], index: 8, kind: input, shape index: {}]
  %s9 = inlined_call_operand.vmem [shape: f32[128,32], index: 9, kind: output, shape index: {}]
  %s10 = sld [smem:[#allocation0]]
  $region69: #{tpu_custom_call.1} parent=0
    _
  %s12 = ssub.s32 1, %s10
  %s13 = scalar_select 0, %s12, %s10
  loop: start=0, step=1, limit=4
  $region2: #{tpu_custom_call.1} parent=0 // loop_pre_header
    _
  $region3: #{tpu_custom_call.1} parent=0 // loop_header
    %s15 = sphi 0, %s19
    %p16 = scmp.ge.s32.totalorder %s15, 4
    %s22 = sphi 0, %s34
    %s23 = sphi 0, %s30
    %s24 = sphi 0, %s22
    %s25 = sphi 0, %s23
    %s26 = sphi 0, %s24
    %s27 = sphi 0, %s25
    %s39 = sphi 0, %s41
    %s42 = sphi 0, %s39
    %s43 = sphi 0, %s42
    %s59 = sphi 0, %s43
    %s63 = sphi 0, %s63
    %s65 = sphi 0, %s63
    %s66 = sphi 0, %s65
    %s80 = sphi 0, %s66
    %s86 = sphi 0, %s88
    %s89 = sphi 0, %s86
    %s90 = sphi 0, %s89
    %s106 = sphi 0, %s90
    %s110 = sphi 0, %s110
    %s112 = sphi 0, %s110
    %s113 = sphi 0, %s112
    %s127 = sphi 0, %s113
    %s131 = sphi 0, %s131
    %s133 = sphi 0, %s131
    %s134 = sphi 0, %s133
    %s148 = sphi 0, %s134
    %s152 = sphi 0, %s152
    %s154 = sphi 0, %s152
    %s155 = sphi 0, %s154
    %s169 = sphi 0, %s155
    %s173 = sphi 0, %s173
    %s175 = sphi 0, %s173
    %s176 = sphi 0, %s175
    %s190 = sphi 0, %s176
    %s194 = sphi 0, %s194
    %s196 = sphi 0, %s194
    %s197 = sphi 0, %s196
    %s211 = sphi 0, %s197
    %s215 = sphi 0, %s215
    %s217 = sphi 0, %s215
    %s218 = sphi 0, %s217
    %s232 = sphi 0, %s218
    %s240 = sphi 0, %s242
    %s243 = sphi 0, %s240
    %s244 = sphi 0, %s243
    %s260 = sphi 0, %s244
  $region4: #{tpu_custom_call.1} parent=0 // loop_header_branch
    %18 = sbr.rel (%p16) target = $region8
  $region5: #{tpu_custom_call.1} parent=0 // loop_body
    %s20 = ssub.s32 %s15, 1
    %s21 = ssub.s32 %s15, 2
    %s28 = sadd.s32 1, %s23
    %p29 = scmp.ge.s32.totalorder %s28, 1
    %s30 = scalar_select %p29, 0, %s28
    %s31 = sadd.s32 1, %s22
    %s32 = scalar_select %p29, %s31, %s22
    %p33 = scmp.ge.s32.totalorder %s32, 2
    %s34 = scalar_select %p33, 0, %s32
    %s35 = sadd.s32 %s22, %s23
    %s36 = sadd.s32 %s34, %s30
    %s37 = ssub.s32 %s35, %s36
    %p38 = scmp.eq.s32.totalorder %s37, 0
    %s40 = sadd.s32 %s39, 1
    %s41 = scalar_select %p38, %s39, %s40
    %p44 = pneg %p38
    %p45 = scmp.eq.s32.totalorder %s15, 1
    %p46 = por %p44, %p45
    %p47 = scmp.ne.s32.totalorder %s39, %s42
    %p48 = scmp.eq.s32.totalorder %s15, 0
    %p49 = por %p47, %p48
    %p50 = scmp.ne.s32.totalorder %s39, %s42
    %p51 = scmp.eq.s32.totalorder %s20, 1
    %p52 = por %p50, %p51
    %p53 = scmp.ne.s32.totalorder %s42, %s43
    %p54 = scmp.eq.s32.totalorder %s20, 0
    %p55 = por %p53, %p54
    %p56 = scmp.ne.s32.totalorder %s42, %s43
    %p57 = scmp.eq.s32.totalorder %s21, 1
    %p58 = por %p56, %p57
    %p60 = scmp.ne.s32.totalorder %s43, %s59
    %p61 = scmp.eq.s32.totalorder %s21, 0
    %p62 = por %p60, %p61
    %s64 = sadd.s32 %s63, 1
    %p67 = scmp.eq.s32.totalorder %s15, 1
    %p68 = scmp.ne.s32.totalorder %s63, %s65
    %p69 = scmp.eq.s32.totalorder %s15, 0
    %p70 = por %p68, %p69
    %p71 = scmp.ne.s32.totalorder %s63, %s65
    %p72 = scmp.eq.s32.totalorder %s20, 1
    %p73 = por %p71, %p72
    %p74 = scmp.ne.s32.totalorder %s65, %s66
    %p75 = scmp.eq.s32.totalorder %s20, 0
    %p76 = por %p74, %p75
    %p77 = scmp.ne.s32.totalorder %s65, %s66
    %p78 = scmp.eq.s32.totalorder %s21, 1
    %p79 = por %p77, %p78
    %p81 = scmp.ne.s32.totalorder %s66, %s80
    %p82 = scmp.eq.s32.totalorder %s21, 0
    %p83 = por %p81, %p82
    %s84 = ssub.s32 %s23, %s30
    %p85 = scmp.eq.s32.totalorder %s84, 0
    %s87 = sadd.s32 %s86, 1
    %s88 = scalar_select %p85, %s86, %s87
    %p91 = pneg %p85
    %p92 = scmp.eq.s32.totalorder %s15, 1
    %p93 = por %p91, %p92
    %p94 = scmp.ne.s32.totalorder %s86, %s89
    %p95 = scmp.eq.s32.totalorder %s15, 0
    %p96 = por %p94, %p95
    %p97 = scmp.ne.s32.totalorder %s86, %s89
    %p98 = scmp.eq.s32.totalorder %s20, 1
    %p99 = por %p97, %p98
    %p100 = scmp.ne.s32.totalorder %s89, %s90
    %p101 = scmp.eq.s32.totalorder %s20, 0
    %p102 = por %p100, %p101
    %p103 = scmp.ne.s32.totalorder %s89, %s90
    %p104 = scmp.eq.s32.totalorder %s21, 1
    %p105 = por %p103, %p104
    %p107 = scmp.ne.s32.totalorder %s90, %s106
    %p108 = scmp.eq.s32.totalorder %s21, 0
    %p109 = por %p107, %p108
    %s111 = sadd.s32 %s110, 1
    %p114 = scmp.eq.s32.totalorder %s15, 1
    %p115 = scmp.ne.s32.totalorder %s110, %s112
    %p116 = scmp.eq.s32.totalorder %s15, 0
    %p117 = por %p115, %p116
    %p118 = scmp.ne.s32.totalorder %s110, %s112
    %p119 = scmp.eq.s32.totalorder %s20, 1
    %p120 = por %p118, %p119
    %p121 = scmp.ne.s32.totalorder %s112, %s113
    %p122 = scmp.eq.s32.totalorder %s20, 0
    %p123 = por %p121, %p122
    %p124 = scmp.ne.s32.totalorder %s112, %s113
    %p125 = scmp.eq.s32.totalorder %s21, 1
    %p126 = por %p124, %p125
    %p128 = scmp.ne.s32.totalorder %s113, %s127
    %p129 = scmp.eq.s32.totalorder %s21, 0
    %p130 = por %p128, %p129
    %s132 = sadd.s32 %s131, 1
    %p135 = scmp.eq.s32.totalorder %s15, 1
    %p136 = scmp.ne.s32.totalorder %s131, %s133
    %p137 = scmp.eq.s32.totalorder %s15, 0
    %p138 = por %p136, %p137
    %p139 = scmp.ne.s32.totalorder %s131, %s133
    %p140 = scmp.eq.s32.totalorder %s20, 1
    %p141 = por %p139, %p140
    %p142 = scmp.ne.s32.totalorder %s133, %s134
    %p143 = scmp.eq.s32.totalorder %s20, 0
    %p144 = por %p142, %p143
    %p145 = scmp.ne.s32.totalorder %s133, %s134
    %p146 = scmp.eq.s32.totalorder %s21, 1
    %p147 = por %p145, %p146
    %p149 = scmp.ne.s32.totalorder %s134, %s148
    %p150 = scmp.eq.s32.totalorder %s21, 0
    %p151 = por %p149, %p150
    %s153 = sadd.s32 %s152, 1
    %p156 = scmp.eq.s32.totalorder %s15, 1
    %p157 = scmp.ne.s32.totalorder %s152, %s154
    %p158 = scmp.eq.s32.totalorder %s15, 0
    %p159 = por %p157, %p158
    %p160 = scmp.ne.s32.totalorder %s152, %s154
    %p161 = scmp.eq.s32.totalorder %s20, 1
    %p162 = por %p160, %p161
    %p163 = scmp.ne.s32.totalorder %s154, %s155
    %p164 = scmp.eq.s32.totalorder %s20, 0
    %p165 = por %p163, %p164
    %p166 = scmp.ne.s32.totalorder %s154, %s155
    %p167 = scmp.eq.s32.totalorder %s21, 1
    %p168 = por %p166, %p167
    %p170 = scmp.ne.s32.totalorder %s155, %s169
    %p171 = scmp.eq.s32.totalorder %s21, 0
    %p172 = por %p170, %p171
    %s174 = sadd.s32 %s173, 1
    %p177 = scmp.eq.s32.totalorder %s15, 1
    %p178 = scmp.ne.s32.totalorder %s173, %s175
    %p179 = scmp.eq.s32.totalorder %s15, 0
    %p180 = por %p178, %p179
    %p181 = scmp.ne.s32.totalorder %s173, %s175
    %p182 = scmp.eq.s32.totalorder %s20, 1
    %p183 = por %p181, %p182
    %p184 = scmp.ne.s32.totalorder %s175, %s176
    %p185 = scmp.eq.s32.totalorder %s20, 0
    %p186 = por %p184, %p185
    %p187 = scmp.ne.s32.totalorder %s175, %s176
    %p188 = scmp.eq.s32.totalorder %s21, 1
    %p189 = por %p187, %p188
    %p191 = scmp.ne.s32.totalorder %s176, %s190
    %p192 = scmp.eq.s32.totalorder %s21, 0
    %p193 = por %p191, %p192
    %s195 = sadd.s32 %s194, 1
    %p198 = scmp.eq.s32.totalorder %s15, 1
    %p199 = scmp.ne.s32.totalorder %s194, %s196
    %p200 = scmp.eq.s32.totalorder %s15, 0
    %p201 = por %p199, %p200
    %p202 = scmp.ne.s32.totalorder %s194, %s196
    %p203 = scmp.eq.s32.totalorder %s20, 1
    %p204 = por %p202, %p203
    %p205 = scmp.ne.s32.totalorder %s196, %s197
    %p206 = scmp.eq.s32.totalorder %s20, 0
    %p207 = por %p205, %p206
    %p208 = scmp.ne.s32.totalorder %s196, %s197
    %p209 = scmp.eq.s32.totalorder %s21, 1
    %p210 = por %p208, %p209
    %p212 = scmp.ne.s32.totalorder %s197, %s211
    %p213 = scmp.eq.s32.totalorder %s21, 0
    %p214 = por %p212, %p213
    %s216 = sadd.s32 %s215, 1
    %p219 = scmp.eq.s32.totalorder %s15, 1
    %p220 = scmp.ne.s32.totalorder %s215, %s217
    %p221 = scmp.eq.s32.totalorder %s15, 0
    %p222 = por %p220, %p221
    %p223 = scmp.ne.s32.totalorder %s215, %s217
    %p224 = scmp.eq.s32.totalorder %s20, 1
    %p225 = por %p223, %p224
    %p226 = scmp.ne.s32.totalorder %s217, %s218
    %p227 = scmp.eq.s32.totalorder %s20, 0
    %p228 = por %p226, %p227
    %p229 = scmp.ne.s32.totalorder %s217, %s218
    %p230 = scmp.eq.s32.totalorder %s21, 1
    %p231 = por %p229, %p230
    %p233 = scmp.ne.s32.totalorder %s218, %s232
    %p234 = scmp.eq.s32.totalorder %s21, 0
    %p235 = por %p233, %p234
    %s236 = sadd.s32 %s22, %s23
    %s237 = sadd.s32 %s34, %s30
    %s238 = ssub.s32 %s236, %s237
    %p239 = scmp.eq.s32.totalorder %s238, 0
    %s241 = sadd.s32 %s240, 1
    %s242 = scalar_select %p239, %s240, %s241
    %p245 = pneg %p239
    %p246 = scmp.eq.s32.totalorder %s15, 1
    %p247 = por %p245, %p246
    %p248 = scmp.ne.s32.totalorder %s240, %s243
    %p249 = scmp.eq.s32.totalorder %s15, 0
    %p250 = por %p248, %p249
    %p251 = scmp.ne.s32.totalorder %s240, %s243
    %p252 = scmp.eq.s32.totalorder %s20, 1
    %p253 = por %p251, %p252
    %p254 = scmp.ne.s32.totalorder %s243, %s244
    %p255 = scmp.eq.s32.totalorder %s20, 0
    %p256 = por %p254, %p255
    %p257 = scmp.ne.s32.totalorder %s243, %s244
    %p258 = scmp.eq.s32.totalorder %s21, 1
    %p259 = por %p257, %p258
    %p261 = scmp.ne.s32.totalorder %s244, %s260
    %p262 = scmp.eq.s32.totalorder %s21, 0
    %p263 = por %p261, %p262
    %p264 = scmp.le.s32.totalorder 1, %s15
    %p265 = scmp.lt.s32.totalorder %s15, 3
    %p266 = pnand %p264, %p265
    %p267 = pneg %p266
    // Predicated region
    $region9: #{tpu_custom_call.1} parent=5 // pred_check
      _
    $region10: #{tpu_custom_call.1} parent=5 // pred_check_branch
      %269 = sbr.rel (%p266) target = $region12
    $region11: #{tpu_custom_call.1} parent=5 // pred_region
      %s270 = ssub.s32 %s15, 1
      // Predicated region
      $region13: #{tpu_custom_call.1} parent=11 // pred_check
        %p271 = pneg %p76
      $region14: #{tpu_custom_call.1} parent=11 // pred_check_branch
        %273 = sbr.rel (%p271) target = $region16
      $region15: #{tpu_custom_call.1} parent=11 // pred_region
        _
      $region16: #{tpu_custom_call.1} parent=11 // pred_fallthru
        _
      // Predicated region
      $region17: #{tpu_custom_call.1} parent=11 // pred_check
        %p274 = pneg %p102
      $region18: #{tpu_custom_call.1} parent=11 // pred_check_branch
        %276 = sbr.rel (%p274) target = $region20
      $region19: #{tpu_custom_call.1} parent=11 // pred_region
        %s277 = smul.u32 4, %s25
        %p278 = scmp.lt.s32.totalorder %s277, 3
        %s279 = scalar_select %p278, %s277, 3
        %s280 = smul.addr %s279, 2
        %s281 = smul.addr %s280, 8
        %s282 = scalar_lea.vmem %s2, %s281
        %s283 = smul.u32 4, %s25
      $region20: #{tpu_custom_call.1} parent=11 // pred_fallthru
        _
      // Predicated region
      $region21: #{tpu_custom_call.1} parent=11 // pred_check
        %p284 = pneg %p123
      $region22: #{tpu_custom_call.1} parent=11 // pred_check_branch
        %286 = sbr.rel (%p284) target = $region24
      $region23: #{tpu_custom_call.1} parent=11 // pred_region
        _
      $region24: #{tpu_custom_call.1} parent=11 // pred_fallthru
        _
      // Predicated region
      $region25: #{tpu_custom_call.1} parent=11 // pred_check
        %p287 = pneg %p144
      $region26: #{tpu_custom_call.1} parent=11 // pred_check_branch
        %289 = sbr.rel (%p287) target = $region28
      $region27: #{tpu_custom_call.1} parent=11 // pred_region
        _
      $region28: #{tpu_custom_call.1} parent=11 // pred_fallthru
        _
      // Predicated region
      $region29: #{tpu_custom_call.1} parent=11 // pred_check
        %p290 = pneg %p165
      $region30: #{tpu_custom_call.1} parent=11 // pred_check_branch
        %292 = sbr.rel (%p290) target = $region32
      $region31: #{tpu_custom_call.1} parent=11 // pred_region
        _
      $region32: #{tpu_custom_call.1} parent=11 // pred_fallthru
        _
      // Predicated region
      $region33: #{tpu_custom_call.1} parent=11 // pred_check
        %p293 = pneg %p186
      $region34: #{tpu_custom_call.1} parent=11 // pred_check_branch
        %295 = sbr.rel (%p293) target = $region36
      $region35: #{tpu_custom_call.1} parent=11 // pred_region
        _
      $region36: #{tpu_custom_call.1} parent=11 // pred_fallthru
        _
      // Predicated region
      $region37: #{tpu_custom_call.1} parent=11 // pred_check
        %p296 = pneg %p207
      $region38: #{tpu_custom_call.1} parent=11 // pred_check_branch
        %298 = sbr.rel (%p296) target = $region40
      $region39: #{tpu_custom_call.1} parent=11 // pred_region
        _
      $region40: #{tpu_custom_call.1} parent=11 // pred_fallthru
        _
      // Predicated region
      $region41: #{tpu_custom_call.1} parent=11 // pred_check
        %p299 = pneg %p228
      $region42: #{tpu_custom_call.1} parent=11 // pred_check_branch
        %301 = sbr.rel (%p299) target = $region44
      $region43: #{tpu_custom_call.1} parent=11 // pred_region
        _
      $region44: #{tpu_custom_call.1} parent=11 // pred_fallthru
        _
    $region12: #{tpu_custom_call.1} parent=5 // pred_fallthru
      _
    %p302 = scmp.lt.s32.totalorder %s15, 2
    // Predicated region
    $region45: #{tpu_custom_call.1} parent=5 // pred_check
      %p303 = pneg %p302
    $region46: #{tpu_custom_call.1} parent=5 // pred_check_branch
      %305 = sbr.rel (%p303) target = $region48
    $region47: #{tpu_custom_call.1} parent=5 // pred_region
      // Predicated region
      $region49: #{tpu_custom_call.1} parent=47 // pred_check
        %p306 = pneg %p49
      $region50: #{tpu_custom_call.1} parent=47 // pred_check_branch
        %308 = sbr.rel (%p306) target = $region52
      $region51: #{tpu_custom_call.1} parent=47 // pred_region
        %s309 = sadd.s32 %s22, %s23
        %s310 = smul.u32 8, %s309
        %p311 = scmp.lt.s32.totalorder %s310, 15
        %s312 = scalar_select %p311, %s310, 15
        %s313 = smul.addr %s312, 8
        %s314 = scalar_lea.vmem %s0, %s313
        %s315 = sadd.s32 %s22, %s23
        %s316 = smul.u32 8, %s315
      $region52: #{tpu_custom_call.1} parent=47 // pred_fallthru
        _
    $region48: #{tpu_custom_call.1} parent=5 // pred_fallthru
      _
    %p317 = scmp.le.s32.totalorder 1, %s15
    %p318 = scmp.lt.s32.totalorder %s15, 3
    %p319 = pnand %p317, %p318
    %p320 = pneg %p319
    // Predicated region
    $region53: #{tpu_custom_call.1} parent=5 // pred_check
      _
    $region54: #{tpu_custom_call.1} parent=5 // pred_check_branch
      %322 = sbr.rel (%p319) target = $region56
    $region55: #{tpu_custom_call.1} parent=5 // pred_region
      %s323 = ssub.s32 %s15, 1
      %s324 = sadd.s32 %s24, %s25
      %s325 = smul.u32 8, %s324
      %p326 = scmp.lt.s32.totalorder %s325, 15
      %s327 = scalar_select %p326, %s325, 15
      %s328 = smul.addr %s327, 8
      %s329 = scalar_lea.vmem %s0, %s328
      %p330 = pneg %p55
      %p331 = pneg %p52
      %p332 = pneg %p76
      %p333 = pneg %p73
      %s334 = smul.u32 4, %s25
      %p335 = scmp.lt.s32.totalorder %s334, 3
      %s336 = scalar_select %p335, %s334, 3
      %s337 = smul.addr %s336, 2
      %s338 = smul.addr %s337, 8
      %s339 = scalar_lea.vmem %s2, %s338
      %p340 = pneg %p102
      %p341 = pneg %p99
      %p342 = pneg %p123
      %p343 = pneg %p120
      %p344 = pneg %p144
      %p345 = pneg %p141
      %p346 = pneg %p165
      %p347 = pneg %p162
      %p348 = pneg %p186
      %p349 = pneg %p183
      %p350 = pneg %p207
      %p351 = pneg %p204
      %p352 = pneg %p228
      %p353 = pneg %p225
      %p354 = pneg %p256
      %p355 = pneg %p253
      %s356 = sadd.s32 %s24, %s25
      %s357 = smul.u32 8, %s356
      %p358 = scmp.lt.s32.totalorder %s357, 15
      %s359 = scalar_select %p358, %s357, 15
      %s360 = smul.addr %s359, 8
      %s361 = scalar_lea.vmem %s9, %s360
      %s362 = sadd.s32 %s24, %s25
      %s363 = smul.u32 8, %s362
      %p364 = scmp.lt.s32.totalorder %s363, 15
      %s365 = scalar_select %p364, %s363, 15
      %s366 = smul.addr %s365, 8
      %s367 = scalar_lea.vmem %s0, %s366
      %s368 = sadd.s32 %s24, %s25
      %s369 = smul.u32 8, %s368
      %s370 = smul.u32 4, %s25
      %p371 = scmp.lt.s32.totalorder %s370, 3
      %s372 = scalar_select %p371, %s370, 3
      %s373 = smul.addr %s372, 2
      %s374 = smul.addr %s373, 8
      %s375 = scalar_lea.vmem %s2, %s374
      %s376 = smul.u32 4, %s25
      %s377 = sadd.s32 %s24, %s25
      %s378 = smul.u32 8, %s377
      %p379 = scmp.lt.s32.totalorder %s378, 15
      %s380 = scalar_select %p379, %s378, 15
      %s381 = smul.addr %s380, 8
      %s382 = scalar_lea.vmem %s9, %s381
      %s383 = sadd.s32 %s24, %s25
      %s384 = smul.u32 8, %s383
      %v386 = vld [vmem:[%s367] sm:$0xff]
      %v387 = vld [vmem:[%s367 + $0x8] sm:$0xff]
      %v388 = vld [vmem:[%s367 + $0x10] sm:$0xff]
      %v389 = vld [vmem:[%s367 + $0x18] sm:$0xff]
      %v390 = vld [vmem:[%s367 + $0x20] sm:$0xff]
      %v391 = vld [vmem:[%s367 + $0x28] sm:$0xff]
      %v392 = vld [vmem:[%s367 + $0x30] sm:$0xff]
      %v393 = vld [vmem:[%s367 + $0x38] sm:$0xff]
      %v394 = vld [vmem:[%s3] sm:$0x1]
      %v395 = vld [vmem:[%s4] sm:$0x1]
      %vm396 = vcmask 261120
      %v397 = vsel %vm396, %v386, 0.0
      %398 = vadd.xlane.f32.xlu0 %v397
      %v399 = vpop.xlane.xlu0 %398
      %v400 = vsel %vm396, %v387, 0.0
      %401 = vadd.xlane.f32.xlu0 %v400
      %v402 = vpop.xlane.xlu0 %401
      %v403 = vsel %vm396, %v388, 0.0
      %404 = vadd.xlane.f32.xlu0 %v403
      %v405 = vpop.xlane.xlu0 %404
      %v406 = vsel %vm396, %v389, 0.0
      %407 = vadd.xlane.f32.xlu0 %v406
      %v408 = vpop.xlane.xlu0 %407
      %v409 = vsel %vm396, %v390, 0.0
      %410 = vadd.xlane.f32.xlu0 %v409
      %v411 = vpop.xlane.xlu0 %410
      %v412 = vsel %vm396, %v391, 0.0
      %413 = vadd.xlane.f32.xlu0 %v412
      %v414 = vpop.xlane.xlu0 %413
      %v415 = vsel %vm396, %v392, 0.0
      %416 = vadd.xlane.f32.xlu0 %v415
      %v417 = vpop.xlane.xlu0 %416
      %v418 = vsel %vm396, %v393, 0.0
      %419 = vadd.xlane.f32.xlu0 %v418
      %v420 = vpop.xlane.xlu0 %419
      %v421 = vrcp.pop 32.0
      %v422 = vmul.f32 %v399, %v421
      %v423 = vmul.f32 %v402, %v421
      %v424 = vmul.f32 %v405, %v421
      %v425 = vmul.f32 %v408, %v421
      %v426 = vmul.f32 %v411, %v421
      %v427 = vmul.f32 %v414, %v421
      %v428 = vmul.f32 %v417, %v421
      %v429 = vmul.f32 %v420, %v421
      %v430 = vsub.f32 %v386, %v422
      %v431 = vsub.f32 %v387, %v423
      %v432 = vsub.f32 %v388, %v424
      %v433 = vsub.f32 %v389, %v425
      %v434 = vsub.f32 %v390, %v426
      %v435 = vsub.f32 %v391, %v427
      %v436 = vsub.f32 %v392, %v428
      %v437 = vsub.f32 %v393, %v429
      %v438 = vmul.f32 %v430, %v430
      %v439 = vmul.f32 %v431, %v431
      %v440 = vmul.f32 %v432, %v432
      %v441 = vmul.f32 %v433, %v433
      %v442 = vmul.f32 %v434, %v434
      %v443 = vmul.f32 %v435, %v435
      %v444 = vmul.f32 %v436, %v436
      %v445 = vmul.f32 %v437, %v437
      %v446 = vsel %vm396, %v438, 0.0
      %447 = vadd.xlane.f32.xlu0 %v446
      %v448 = vpop.xlane.xlu0 %447
      %v449 = vsel %vm396, %v439, 0.0
      %450 = vadd.xlane.f32.xlu0 %v449
      %v451 = vpop.xlane.xlu0 %450
      %v452 = vsel %vm396, %v440, 0.0
      %453 = vadd.xlane.f32.xlu0 %v452
      %v454 = vpop.xlane.xlu0 %453
      %v455 = vsel %vm396, %v441, 0.0
      %456 = vadd.xlane.f32.xlu0 %v455
      %v457 = vpop.xlane.xlu0 %456
      %v458 = vsel %vm396, %v442, 0.0
      %459 = vadd.xlane.f32.xlu0 %v458
      %v460 = vpop.xlane.xlu0 %459
      %v461 = vsel %vm396, %v443, 0.0
      %462 = vadd.xlane.f32.xlu0 %v461
      %v463 = vpop.xlane.xlu0 %462
      %v464 = vsel %vm396, %v444, 0.0
      %465 = vadd.xlane.f32.xlu0 %v464
      %v466 = vpop.xlane.xlu0 %465
      %v467 = vsel %vm396, %v445, 0.0
      %468 = vadd.xlane.f32.xlu0 %v467
      %v469 = vpop.xlane.xlu0 %468
      %v470 = vmul.f32 %v448, %v421
      %v471 = vmul.f32 %v451, %v421
      %v472 = vmul.f32 %v454, %v421
      %v473 = vmul.f32 %v457, %v421
      %v474 = vmul.f32 %v460, %v421
      %v475 = vmul.f32 %v463, %v421
      %v476 = vmul.f32 %v466, %v421
      %v477 = vmul.f32 %v469, %v421
      %v478 = vadd.f32 %v470, 1e-05
      %v479 = vadd.f32 %v471, 1e-05
      %v480 = vadd.f32 %v472, 1e-05
      %v481 = vadd.f32 %v473, 1e-05
      %v482 = vadd.f32 %v474, 1e-05
      %v483 = vadd.f32 %v475, 1e-05
      %v484 = vadd.f32 %v476, 1e-05
      %v485 = vadd.f32 %v477, 1e-05
      %v486 = vrsqrt.pop %v478
      %v487 = vrsqrt.pop %v479
      %v488 = vrsqrt.pop %v480
      %v489 = vrsqrt.pop %v481
      %v490 = vrsqrt.pop %v482
      %v491 = vrsqrt.pop %v483
      %v492 = vrsqrt.pop %v484
      %v493 = vrsqrt.pop %v485
      %v494 = vmul.f32 %v430, %v486
      %v495 = vmul.f32 %v431, %v487
      %v496 = vmul.f32 %v432, %v488
      %v497 = vmul.f32 %v433, %v489
      %v498 = vmul.f32 %v434, %v490
      %v499 = vmul.f32 %v435, %v491
      %v500 = vmul.f32 %v436, %v492
      %v501 = vmul.f32 %v437, %v493
      %v503 = vlaneseq
      %v504 = vshrl.u32 %v503, 7
      %v505 = vsub.s32 0, %v504
      %v506 = vrot.slane %v394, %v505
      %v508 = vmul.f32 %v494, %v506
      %v509 = vmul.f32 %v495, %v506
      %v510 = vmul.f32 %v496, %v506
      %v511 = vmul.f32 %v497, %v506
      %v512 = vmul.f32 %v498, %v506
      %v513 = vmul.f32 %v499, %v506
      %v514 = vmul.f32 %v500, %v506
      %v515 = vmul.f32 %v501, %v506
      %v517 = vlaneseq
      %v518 = vshrl.u32 %v517, 7
      %v519 = vsub.s32 0, %v518
      %v520 = vrot.slane %v395, %v519
      %v522 = vadd.f32 %v508, %v520
      %v523 = vadd.f32 %v509, %v520
      %v524 = vadd.f32 %v510, %v520
      %v525 = vadd.f32 %v511, %v520
      %v526 = vadd.f32 %v512, %v520
      %v527 = vadd.f32 %v513, %v520
      %v528 = vadd.f32 %v514, %v520
      %v529 = vadd.f32 %v515, %v520
      %v530 = vpack.c.bf16 %v523, %v522
      %v531 = vpack.c.bf16 %v525, %v524
      %v532 = vpack.c.bf16 %v527, %v526
      %v533 = vpack.c.bf16 %v529, %v528
      %v534 = vld [vmem:[%s5] sm:$0xf]
      %v535 = vld [vmem:[%s5 + $0x4] sm:$0xf]
      %v536 = vld [vmem:[%s5 + $0x8] sm:$0xf]
      %v537 = vld [vmem:[%s5 + $0xc] sm:$0xf]
      %v538 = vld [vmem:[%s6] sm:$0x1]
      %v540 = vlaneseq
      %v541 = vshrl.u32 %v540, 7
      %v542 = vsub.s32 0, %v541
      %v543 = vrot.slane %v538, %v542
      %v549 = vunpack.c.l.b16 %v534
      %v550 = vunpack.c.l.b16 %v535
      %v551 = vunpack.c.l.b16 %v536
      %v552 = vunpack.c.l.b16 %v537
      %v553 = vpack.c.b16 %v550, %v549
      %v554 = vpack.c.b16 %v552, %v551
      %v558 = vsel %vm396, %v530, 0
      %v561 = vsel %vm396, %v531, 0
      %v564 = vsel %vm396, %v532, 0
      %v567 = vsel %vm396, %v533, 0
      %569 = vmatprep.subr.bf16.mxu0 0
      %570 = vmatpush1.bf16.msra.mxu0 0
      %571 = vmatprep.subr.bf16.mxu0 0
      %572 = vmatpush1.bf16.msra.mxu0 0
      %573 = vmatprep.subr.bf16.mxu0 0
      %574 = vmatpush1.bf16.msra.mxu0 0
      %575 = vmatprep.subr.bf16.mxu0 0
      %576 = vmatpush1.bf16.msra.mxu0 0
      %577 = vmatprep.subr.bf16.mxu0 0
      %578 = vmatpush1.bf16.msra.mxu0 0
      %579 = vmatprep.subr.bf16.mxu0 0
      %580 = vmatpush1.bf16.msra.mxu0 0
      %581 = vmatprep.subr.bf16.mxu0 0
      %582 = vmatpush1.bf16.msra.mxu0 %v554
      %583 = vmatprep.subr.bf16.mxu0 0
      %584 = vmatpush1.bf16.msra.mxu0 %v553
      %585 = vmatprep.subr.bf16.mxu0 0
      %586 = vmatpush2.bf16.msra.mxu0 0
      %587 = vmatprep.subr.bf16.mxu0 0
      %588 = vmatpush2.bf16.msra.mxu0 0
      %589 = vmatprep.subr.bf16.mxu0 0
      %590 = vmatpush2.bf16.msra.mxu0 0
      %591 = vmatprep.subr.bf16.mxu0 0
      %592 = vmatpush2.bf16.msra.mxu0 0
      %593 = vmatprep.subr.bf16.mxu0 0
      %594 = vmatpush2.bf16.msra.mxu0 0
      %595 = vmatprep.subr.bf16.mxu0 0
      %596 = vmatpush2.bf16.msra.mxu0 0
      %597 = vmatprep.subr.bf16.mxu0 0
      %598 = vmatpush2.bf16.msra.mxu0 0
      %599 = vmatprep.subr.bf16.mxu0 0
      %600 = vmatpush2.bf16.msra.mxu0 0
      %601 = vmatprep.mubr.bf16.mxu0 0
      %602 = vmatmul.mubr.bf16.gmra.mxu0 %v558
      %v603 = vpop.f32.mrf.mxu0
      %v604 = vadd.f32 %v543, %v603
      %v605 = vpop.f32.mrf.mxu0
      %v606 = vpop.f32.mrf.mxu0
      %v607 = vadd.f32 %v543, %v606
      %v608 = vpop.f32.mrf.mxu0
      %609 = vmatprep.mubr.bf16.mxu0 0
      %610 = vmatmul.mubr.bf16.gmra.mxu0 %v561
      %v611 = vpop.f32.mrf.mxu0
      %v612 = vadd.f32 %v543, %v611
      %v613 = vpop.f32.mrf.mxu0
      %v614 = vpop.f32.mrf.mxu0
      %v615 = vadd.f32 %v543, %v614
      %v616 = vpop.f32.mrf.mxu0
      %617 = vmatprep.mubr.bf16.mxu0 0
      %618 = vmatmul.mubr.bf16.gmra.mxu0 %v564
      %v619 = vpop.f32.mrf.mxu0
      %v620 = vadd.f32 %v543, %v619
      %v621 = vpop.f32.mrf.mxu0
      %v622 = vpop.f32.mrf.mxu0
      %v623 = vadd.f32 %v543, %v622
      %v624 = vpop.f32.mrf.mxu0
      %625 = vmatprep.mubr.bf16.mxu0 0
      %626 = vmatmul.mubr.bf16.gmra.mxu0 %v567
      %v627 = vpop.f32.mrf.mxu0
      %v628 = vadd.f32 %v543, %v627
      %v629 = vpop.f32.mrf.mxu0
      %v630 = vpop.f32.mrf.mxu0
      %v631 = vadd.f32 %v543, %v630
      %v632 = vpop.f32.mrf.mxu0
      %633 = vdwg.mxu0
      %v634 = vld [vmem:[%s1] sm:$0xff]
      %v635 = vld [vmem:[%s1 + $0x8] sm:$0xff]
      %v636 = vld [vmem:[%s1 + $0x10] sm:$0xff]
      %v637 = vld [vmem:[%s1 + $0x18] sm:$0xff]
      %v638 = vld [vmem:[%s1 + $0x20] sm:$0xff]
      %v639 = vld [vmem:[%s1 + $0x28] sm:$0xff]
      %v640 = vld [vmem:[%s1 + $0x30] sm:$0xff]
      %v641 = vld [vmem:[%s1 + $0x38] sm:$0xff]
      %v642 = vld [vmem:[%s375] sm:$0xff]
      %v643 = vld [vmem:[%s375 + $0x8] sm:$0xff]
      %v644 = vld [vmem:[%s375 + $0x10] sm:$0xff]
      %v645 = vld [vmem:[%s375 + $0x18] sm:$0xff]
      %v646 = vld [vmem:[%s375 + $0x20] sm:$0xff]
      %v647 = vld [vmem:[%s375 + $0x28] sm:$0xff]
      %v648 = vld [vmem:[%s375 + $0x30] sm:$0xff]
      %v649 = vld [vmem:[%s375 + $0x38] sm:$0xff]
      %v650 = vpack.c.bf16 %v607, %v604
      %v651 = vpack.c.bf16 %v615, %v612
      %v652 = vpack.c.bf16 %v623, %v620
      %v653 = vpack.c.bf16 %v631, %v628
      %655 = vrot.lane.b32.xlu0 %v650, 96
      %v656 = vpop.permute.xlu0 %655
      %vm657 = vcmask 64512
      %v659 = vsel %vm657, %v650, 0
      %v662 = vsel %vm657, %v656, 0
      %664 = vmatprep.subr.bf16.mxu0 0
      %665 = vmatpush1.bf16.xpose.msra.mxu0 0
      %666 = vmatprep.subr.bf16.mxu0 0
      %667 = vmatpush1.bf16.xpose.msra.mxu0 0
      %668 = vmatprep.subr.bf16.mxu0 0
      %669 = vmatpush1.bf16.xpose.msra.mxu0 0
      %670 = vmatprep.subr.bf16.mxu0 0
      %671 = vmatpush1.bf16.xpose.msra.mxu0 0
      %672 = vmatprep.subr.bf16.mxu0 0
      %673 = vmatpush1.bf16.xpose.msra.mxu0 0
      %674 = vmatprep.subr.bf16.mxu0 0
      %675 = vmatpush1.bf16.xpose.msra.mxu0 0
      %676 = vmatprep.subr.bf16.mxu0 0
      %677 = vmatpush1.bf16.xpose.msra.mxu0 0
      %678 = vmatprep.subr.bf16.mxu0 0
      %679 = vmatpush1.bf16.xpose.msra.mxu0 %v662
      %680 = vmatprep.subr.bf16.mxu0 0
      %681 = vmatpush2.bf16.xpose.msra.mxu0 0
      %682 = vmatprep.subr.bf16.mxu0 0
      %683 = vmatpush2.bf16.xpose.msra.mxu0 0
      %684 = vmatprep.subr.bf16.mxu0 0
      %685 = vmatpush2.bf16.xpose.msra.mxu0 0
      %686 = vmatprep.subr.bf16.mxu0 0
      %687 = vmatpush2.bf16.xpose.msra.mxu0 0
      %688 = vmatprep.subr.bf16.mxu0 0
      %689 = vmatpush2.bf16.xpose.msra.mxu0 0
      %690 = vmatprep.subr.bf16.mxu0 0
      %691 = vmatpush2.bf16.xpose.msra.mxu0 0
      %692 = vmatprep.subr.bf16.mxu0 0
      %693 = vmatpush2.bf16.xpose.msra.mxu0 0
      %694 = vmatprep.subr.bf16.mxu0 0
      %695 = vmatpush2.bf16.xpose.msra.mxu0 0
      %696 = vmatprep.mubr.bf16.mxu0 0
      %697 = vmatmul.mubr.bf16.gmra.mxu0 %v659
      %v698 = vpop.f32.mrf.mxu0
      %v699 = vadd.f32 0.0, %v698
      %v700 = vpop.f32.mrf.mxu0
      %v701 = vpop.f32.mrf.mxu0
      %v702 = vadd.f32 0.0, %v701
      %v703 = vpop.f32.mrf.mxu0
      %704 = vdwg.mxu0
      %706 = vrot.lane.b32.xlu0 %v651, 96
      %v707 = vpop.permute.xlu0 %706
      %v709 = vsel %vm657, %v651, 0
      %v712 = vsel %vm657, %v707, 0
      %714 = vmatprep.subr.bf16.mxu0 0
      %715 = vmatpush1.bf16.xpose.msra.mxu0 0
      %716 = vmatprep.subr.bf16.mxu0 0
      %717 = vmatpush1.bf16.xpose.msra.mxu0 0
      %718 = vmatprep.subr.bf16.mxu0 0
      %719 = vmatpush1.bf16.xpose.msra.mxu0 0
      %720 = vmatprep.subr.bf16.mxu0 0
      %721 = vmatpush1.bf16.xpose.msra.mxu0 0
      %722 = vmatprep.subr.bf16.mxu0 0
      %723 = vmatpush1.bf16.xpose.msra.mxu0 0
      %724 = vmatprep.subr.bf16.mxu0 0
      %725 = vmatpush1.bf16.xpose.msra.mxu0 0
      %726 = vmatprep.subr.bf16.mxu0 0
      %727 = vmatpush1.bf16.xpose.msra.mxu0 0
      %728 = vmatprep.subr.bf16.mxu0 0
      %729 = vmatpush1.bf16.xpose.msra.mxu0 %v712
      %730 = vmatprep.subr.bf16.mxu0 0
      %731 = vmatpush2.bf16.xpose.msra.mxu0 0
      %732 = vmatprep.subr.bf16.mxu0 0
      %733 = vmatpush2.bf16.xpose.msra.mxu0 0
      %734 = vmatprep.subr.bf16.mxu0 0
      %735 = vmatpush2.bf16.xpose.msra.mxu0 0
      %736 = vmatprep.subr.bf16.mxu0 0
      %737 = vmatpush2.bf16.xpose.msra.mxu0 0
      %738 = vmatprep.subr.bf16.mxu0 0
      %739 = vmatpush2.bf16.xpose.msra.mxu0 0
      %740 = vmatprep.subr.bf16.mxu0 0
      %741 = vmatpush2.bf16.xpose.msra.mxu0 0
      %742 = vmatprep.subr.bf16.mxu0 0
      %743 = vmatpush2.bf16.xpose.msra.mxu0 0
      %744 = vmatprep.subr.bf16.mxu0 0
      %745 = vmatpush2.bf16.xpose.msra.mxu0 0
      %746 = vmatprep.mubr.bf16.mxu0 0
      %747 = vmatmul.mubr.bf16.gmra.mxu0 %v709
      %v748 = vpop.f32.mrf.mxu0
      %v749 = vadd.f32 0.0, %v748
      %v750 = vpop.f32.mrf.mxu0
      %v751 = vpop.f32.mrf.mxu0
      %v752 = vadd.f32 0.0, %v751
      %v753 = vpop.f32.mrf.mxu0
      %754 = vdwg.mxu0
      %756 = vrot.lane.b32.xlu0 %v652, 96
      %v757 = vpop.permute.xlu0 %756
      %v759 = vsel %vm657, %v652, 0
      %v762 = vsel %vm657, %v757, 0
      %764 = vmatprep.subr.bf16.mxu0 0
      %765 = vmatpush1.bf16.xpose.msra.mxu0 0
      %766 = vmatprep.subr.bf16.mxu0 0
      %767 = vmatpush1.bf16.xpose.msra.mxu0 0
      %768 = vmatprep.subr.bf16.mxu0 0
      %769 = vmatpush1.bf16.xpose.msra.mxu0 0
      %770 = vmatprep.subr.bf16.mxu0 0
      %771 = vmatpush1.bf16.xpose.msra.mxu0 0
      %772 = vmatprep.subr.bf16.mxu0 0
      %773 = vmatpush1.bf16.xpose.msra.mxu0 0
      %774 = vmatprep.subr.bf16.mxu0 0
      %775 = vmatpush1.bf16.xpose.msra.mxu0 0
      %776 = vmatprep.subr.bf16.mxu0 0
      %777 = vmatpush1.bf16.xpose.msra.mxu0 0
      %778 = vmatprep.subr.bf16.mxu0 0
      %779 = vmatpush1.bf16.xpose.msra.mxu0 %v762
      %780 = vmatprep.subr.bf16.mxu0 0
      %781 = vmatpush2.bf16.xpose.msra.mxu0 0
      %782 = vmatprep.subr.bf16.mxu0 0
      %783 = vmatpush2.bf16.xpose.msra.mxu0 0
      %784 = vmatprep.subr.bf16.mxu0 0
      %785 = vmatpush2.bf16.xpose.msra.mxu0 0
      %786 = vmatprep.subr.bf16.mxu0 0
      %787 = vmatpush2.bf16.xpose.msra.mxu0 0
      %788 = vmatprep.subr.bf16.mxu0 0
      %789 = vmatpush2.bf16.xpose.msra.mxu0 0
      %790 = vmatprep.subr.bf16.mxu0 0
      %791 = vmatpush2.bf16.xpose.msra.mxu0 0
      %792 = vmatprep.subr.bf16.mxu0 0
      %793 = vmatpush2.bf16.xpose.msra.mxu0 0
      %794 = vmatprep.subr.bf16.mxu0 0
      %795 = vmatpush2.bf16.xpose.msra.mxu0 0
      %796 = vmatprep.mubr.bf16.mxu0 0
      %797 = vmatmul.mubr.bf16.gmra.mxu0 %v759
      %v798 = vpop.f32.mrf.mxu0
      %v799 = vadd.f32 0.0, %v798
      %v800 = vpop.f32.mrf.mxu0
      %v801 = vpop.f32.mrf.mxu0
      %v802 = vadd.f32 0.0, %v801
      %v803 = vpop.f32.mrf.mxu0
      %804 = vdwg.mxu0
      %806 = vrot.lane.b32.xlu0 %v653, 96
      %v807 = vpop.permute.xlu0 %806
      %v809 = vsel %vm657, %v653, 0
      %v812 = vsel %vm657, %v807, 0
      %814 = vmatprep.subr.bf16.mxu0 0
      %815 = vmatpush1.bf16.xpose.msra.mxu0 0
      %816 = vmatprep.subr.bf16.mxu0 0
      %817 = vmatpush1.bf16.xpose.msra.mxu0 0
      %818 = vmatprep.subr.bf16.mxu0 0
      %819 = vmatpush1.bf16.xpose.msra.mxu0 0
      %820 = vmatprep.subr.bf16.mxu0 0
      %821 = vmatpush1.bf16.xpose.msra.mxu0 0
      %822 = vmatprep.subr.bf16.mxu0 0
      %823 = vmatpush1.bf16.xpose.msra.mxu0 0
      %824 = vmatprep.subr.bf16.mxu0 0
      %825 = vmatpush1.bf16.xpose.msra.mxu0 0
      %826 = vmatprep.subr.bf16.mxu0 0
      %827 = vmatpush1.bf16.xpose.msra.mxu0 0
      %828 = vmatprep.subr.bf16.mxu0 0
      %829 = vmatpush1.bf16.xpose.msra.mxu0 %v812
      %830 = vmatprep.subr.bf16.mxu0 0
      %831 = vmatpush2.bf16.xpose.msra.mxu0 0
      %832 = vmatprep.subr.bf16.mxu0 0
      %833 = vmatpush2.bf16.xpose.msra.mxu0 0
      %834 = vmatprep.subr.bf16.mxu0 0
      %835 = vmatpush2.bf16.xpose.msra.mxu0 0
      %836 = vmatprep.subr.bf16.mxu0 0
      %837 = vmatpush2.bf16.xpose.msra.mxu0 0
      %838 = vmatprep.subr.bf16.mxu0 0
      %839 = vmatpush2.bf16.xpose.msra.mxu0 0
      %840 = vmatprep.subr.bf16.mxu0 0
      %841 = vmatpush2.bf16.xpose.msra.mxu0 0
      %842 = vmatprep.subr.bf16.mxu0 0
      %843 = vmatpush2.bf16.xpose.msra.mxu0 0
      %844 = vmatprep.subr.bf16.mxu0 0
      %845 = vmatpush2.bf16.xpose.msra.mxu0 0
      %846 = vmatprep.mubr.bf16.mxu0 0
      %847 = vmatmul.mubr.bf16.gmra.mxu0 %v809
      %v848 = vpop.f32.mrf.mxu0
      %v849 = vadd.f32 0.0, %v848
      %v850 = vpop.f32.mrf.mxu0
      %v851 = vpop.f32.mrf.mxu0
      %v852 = vadd.f32 0.0, %v851
      %v853 = vpop.f32.mrf.mxu0
      %854 = vdwg.mxu0
      %v855 = vmul.f32 %v699, 0.35355338
      %v856 = vmul.f32 %v702, 0.35355338
      %v857 = vmul.f32 %v749, 0.35355338
      %v858 = vmul.f32 %v752, 0.35355338
      %v859 = vmul.f32 %v799, 0.35355338
      %v860 = vmul.f32 %v802, 0.35355338
      %v861 = vmul.f32 %v849, 0.35355338
      %v862 = vmul.f32 %v852, 0.35355338
      %v863 = vadd.f32 %v855, %v634
      %v864 = vadd.f32 %v856, %v635
      %v865 = vadd.f32 %v857, %v634
      %v866 = vadd.f32 %v858, %v635
      %v867 = vadd.f32 %v859, %v634
      %v868 = vadd.f32 %v860, %v635
      %v869 = vadd.f32 %v861, %v634
      %v870 = vadd.f32 %v862, %v635
      %v871 = vadd.f32 %v863, %v642
      %v872 = vadd.f32 %v864, %v643
      %v873 = vadd.f32 %v865, %v644
      %v874 = vadd.f32 %v866, %v645
      %v875 = vadd.f32 %v867, %v646
      %v876 = vadd.f32 %v868, %v647
      %v877 = vadd.f32 %v869, %v648
      %v878 = vadd.f32 %v870, %v649
      %vm879 = vcmask 130048
      %v880 = vsel %vm879, %v871, -inf
      %881 = vmax.xlane.f32.xlu0 %v880
      %v882 = vpop.xlane.xlu0 %881
      %v883 = vsel %vm879, %v872, -inf
      %884 = vmax.xlane.f32.xlu0 %v883
      %v885 = vpop.xlane.xlu0 %884
      %v886 = vsel %vm879, %v873, -inf
      %887 = vmax.xlane.f32.xlu0 %v886
      %v888 = vpop.xlane.xlu0 %887
      %v889 = vsel %vm879, %v874, -inf
      %890 = vmax.xlane.f32.xlu0 %v889
      %v891 = vpop.xlane.xlu0 %890
      %v892 = vsel %vm879, %v875, -inf
      %893 = vmax.xlane.f32.xlu0 %v892
      %v894 = vpop.xlane.xlu0 %893
      %v895 = vsel %vm879, %v876, -inf
      %896 = vmax.xlane.f32.xlu0 %v895
      %v897 = vpop.xlane.xlu0 %896
      %v898 = vsel %vm879, %v877, -inf
      %899 = vmax.xlane.f32.xlu0 %v898
      %v900 = vpop.xlane.xlu0 %899
      %v901 = vsel %vm879, %v878, -inf
      %902 = vmax.xlane.f32.xlu0 %v901
      %v903 = vpop.xlane.xlu0 %902
      %v904 = vsub.f32 %v871, %v882
      %v905 = vsub.f32 %v872, %v885
      %v906 = vsub.f32 %v873, %v888
      %v907 = vsub.f32 %v874, %v891
      %v908 = vsub.f32 %v875, %v894
      %v909 = vsub.f32 %v876, %v897
      %v910 = vsub.f32 %v877, %v900
      %v911 = vsub.f32 %v878, %v903
      %v912 = vmul.f32 %v904, 1.442695
      %v913 = vpow.pop %v912
      %v914 = vmul.f32 %v905, 1.442695
      %v915 = vpow.pop %v914
      %v916 = vmul.f32 %v906, 1.442695
      %v917 = vpow.pop %v916
      %v918 = vmul.f32 %v907, 1.442695
      %v919 = vpow.pop %v918
      %v920 = vmul.f32 %v908, 1.442695
      %v921 = vpow.pop %v920
      %v922 = vmul.f32 %v909, 1.442695
      %v923 = vpow.pop %v922
      %v924 = vmul.f32 %v910, 1.442695
      %v925 = vpow.pop %v924
      %v926 = vmul.f32 %v911, 1.442695
      %v927 = vpow.pop %v926
      %v928 = vsel %vm879, %v913, 0.0
      %929 = vadd.xlane.f32.xlu0 %v928
      %v930 = vpop.xlane.xlu0 %929
      %v931 = vsel %vm879, %v915, 0.0
      %932 = vadd.xlane.f32.xlu0 %v931
      %v933 = vpop.xlane.xlu0 %932
      %v934 = vsel %vm879, %v917, 0.0
      %935 = vadd.xlane.f32.xlu0 %v934
      %v936 = vpop.xlane.xlu0 %935
      %v937 = vsel %vm879, %v919, 0.0
      %938 = vadd.xlane.f32.xlu0 %v937
      %v939 = vpop.xlane.xlu0 %938
      %v940 = vsel %vm879, %v921, 0.0
      %941 = vadd.xlane.f32.xlu0 %v940
      %v942 = vpop.xlane.xlu0 %941
      %v943 = vsel %vm879, %v923, 0.0
      %944 = vadd.xlane.f32.xlu0 %v943
      %v945 = vpop.xlane.xlu0 %944
      %v946 = vsel %vm879, %v925, 0.0
      %947 = vadd.xlane.f32.xlu0 %v946
      %v948 = vpop.xlane.xlu0 %947
      %v949 = vsel %vm879, %v927, 0.0
      %950 = vadd.xlane.f32.xlu0 %v949
      %v951 = vpop.xlane.xlu0 %950
      %v952 = vrcp.pop %v930
      %v953 = vrcp.pop %v933
      %v954 = vrcp.pop %v936
      %v955 = vrcp.pop %v939
      %v956 = vrcp.pop %v942
      %v957 = vrcp.pop %v945
      %v958 = vrcp.pop %v948
      %v959 = vrcp.pop %v951
      %v960 = vmul.f32 %v913, %v952
      %v961 = vmul.f32 %v915, %v953
      %v962 = vmul.f32 %v917, %v954
      %v963 = vmul.f32 %v919, %v955
      %v964 = vmul.f32 %v921, %v956
      %v965 = vmul.f32 %v923, %v957
      %v966 = vmul.f32 %v925, %v958
      %v967 = vmul.f32 %v927, %v959
      %v968 = vpack.c.bf16 %v961, %v960
      %v969 = vpack.c.bf16 %v963, %v962
      %v970 = vpack.c.bf16 %v965, %v964
      %v971 = vpack.c.bf16 %v967, %v966
      %972 = vrot.lane.b32.xlu0 %v650, 64
      %v973 = vpop.permute.xlu0 %972
      %v976 = vsel %vm879, %v968, 0
      %978 = vmatprep.subr.bf16.mxu0 0
      %979 = vmatpush1.bf16.msra.mxu0 0
      %980 = vmatprep.subr.bf16.mxu0 0
      %981 = vmatpush1.bf16.msra.mxu0 0
      %982 = vmatprep.subr.bf16.mxu0 0
      %983 = vmatpush1.bf16.msra.mxu0 0
      %984 = vmatprep.subr.bf16.mxu0 0
      %985 = vmatpush1.bf16.msra.mxu0 0
      %986 = vmatprep.subr.bf16.mxu0 0
      %987 = vmatpush1.bf16.msra.mxu0 0
      %988 = vmatprep.subr.bf16.mxu0 0
      %989 = vmatpush1.bf16.msra.mxu0 0
      %990 = vmatprep.subr.bf16.mxu0 0
      %991 = vmatpush1.bf16.msra.mxu0 0
      %992 = vmatprep.subr.bf16.mxu0 0
      %993 = vmatpush1.bf16.msra.mxu0 %v973
      %994 = vmatprep.subr.bf16.mxu0 0
      %995 = vmatpush2.bf16.msra.mxu0 0
      %996 = vmatprep.subr.bf16.mxu0 0
      %997 = vmatpush2.bf16.msra.mxu0 0
      %998 = vmatprep.subr.bf16.mxu0 0
      %999 = vmatpush2.bf16.msra.mxu0 0
      %1000 = vmatprep.subr.bf16.mxu0 0
      %1001 = vmatpush2.bf16.msra.mxu0 0
      %1002 = vmatprep.subr.bf16.mxu0 0
      %1003 = vmatpush2.bf16.msra.mxu0 0
      %1004 = vmatprep.subr.bf16.mxu0 0
      %1005 = vmatpush2.bf16.msra.mxu0 0
      %1006 = vmatprep.subr.bf16.mxu0 0
      %1007 = vmatpush2.bf16.msra.mxu0 0
      %1008 = vmatprep.subr.bf16.mxu0 0
      %1009 = vmatpush2.bf16.msra.mxu0 0
      %1010 = vmatprep.mubr.bf16.mxu0 0
      %1011 = vmatmul.mubr.bf16.gmra.mxu0 %v976
      %v1012 = vpop.f32.mrf.mxu0
      %v1013 = vadd.f32 0.0, %v1012
      %v1014 = vpop.f32.mrf.mxu0
      %v1015 = vpop.f32.mrf.mxu0
      %v1016 = vadd.f32 0.0, %v1015
      %v1017 = vpop.f32.mrf.mxu0
      %1018 = vdwg.mxu0
      %1019 = vrot.lane.b32.xlu0 %v651, 64
      %v1020 = vpop.permute.xlu0 %1019
      %v1023 = vsel %vm879, %v969, 0
      %1025 = vmatprep.subr.bf16.mxu0 0
      %1026 = vmatpush1.bf16.msra.mxu0 0
      %1027 = vmatprep.subr.bf16.mxu0 0
      %1028 = vmatpush1.bf16.msra.mxu0 0
      %1029 = vmatprep.subr.bf16.mxu0 0
      %1030 = vmatpush1.bf16.msra.mxu0 0
      %1031 = vmatprep.subr.bf16.mxu0 0
      %1032 = vmatpush1.bf16.msra.mxu0 0
      %1033 = vmatprep.subr.bf16.mxu0 0
      %1034 = vmatpush1.bf16.msra.mxu0 0
      %1035 = vmatprep.subr.bf16.mxu0 0
      %1036 = vmatpush1.bf16.msra.mxu0 0
      %1037 = vmatprep.subr.bf16.mxu0 0
      %1038 = vmatpush1.bf16.msra.mxu0 0
      %1039 = vmatprep.subr.bf16.mxu0 0
      %1040 = vmatpush1.bf16.msra.mxu0 %v1020
      %1041 = vmatprep.subr.bf16.mxu0 0
      %1042 = vmatpush2.bf16.msra.mxu0 0
      %1043 = vmatprep.subr.bf16.mxu0 0
      %1044 = vmatpush2.bf16.msra.mxu0 0
      %1045 = vmatprep.subr.bf16.mxu0 0
      %1046 = vmatpush2.bf16.msra.mxu0 0
      %1047 = vmatprep.subr.bf16.mxu0 0
      %1048 = vmatpush2.bf16.msra.mxu0 0
      %1049 = vmatprep.subr.bf16.mxu0 0
      %1050 = vmatpush2.bf16.msra.mxu0 0
      %1051 = vmatprep.subr.bf16.mxu0 0
      %1052 = vmatpush2.bf16.msra.mxu0 0
      %1053 = vmatprep.subr.bf16.mxu0 0
      %1054 = vmatpush2.bf16.msra.mxu0 0
      %1055 = vmatprep.subr.bf16.mxu0 0
      %1056 = vmatpush2.bf16.msra.mxu0 0
      %1057 = vmatprep.mubr.bf16.mxu0 0
      %1058 = vmatmul.mubr.bf16.gmra.mxu0 %v1023
      %v1059 = vpop.f32.mrf.mxu0
      %v1060 = vadd.f32 0.0, %v1059
      %v1061 = vpop.f32.mrf.mxu0
      %v1062 = vpop.f32.mrf.mxu0
      %v1063 = vadd.f32 0.0, %v1062
      %v1064 = vpop.f32.mrf.mxu0
      %1065 = vdwg.mxu0
      %1066 = vrot.lane.b32.xlu0 %v652, 64
      %v1067 = vpop.permute.xlu0 %1066
      %v1070 = vsel %vm879, %v970, 0
      %1072 = vmatprep.subr.bf16.mxu0 0
      %1073 = vmatpush1.bf16.msra.mxu0 0
      %1074 = vmatprep.subr.bf16.mxu0 0
      %1075 = vmatpush1.bf16.msra.mxu0 0
      %1076 = vmatprep.subr.bf16.mxu0 0
      %1077 = vmatpush1.bf16.msra.mxu0 0
      %1078 = vmatprep.subr.bf16.mxu0 0
      %1079 = vmatpush1.bf16.msra.mxu0 0
      %1080 = vmatprep.subr.bf16.mxu0 0
      %1081 = vmatpush1.bf16.msra.mxu0 0
      %1082 = vmatprep.subr.bf16.mxu0 0
      %1083 = vmatpush1.bf16.msra.mxu0 0
      %1084 = vmatprep.subr.bf16.mxu0 0
      %1085 = vmatpush1.bf16.msra.mxu0 0
      %1086 = vmatprep.subr.bf16.mxu0 0
      %1087 = vmatpush1.bf16.msra.mxu0 %v1067
      %1088 = vmatprep.subr.bf16.mxu0 0
      %1089 = vmatpush2.bf16.msra.mxu0 0
      %1090 = vmatprep.subr.bf16.mxu0 0
      %1091 = vmatpush2.bf16.msra.mxu0 0
      %1092 = vmatprep.subr.bf16.mxu0 0
      %1093 = vmatpush2.bf16.msra.mxu0 0
      %1094 = vmatprep.subr.bf16.mxu0 0
      %1095 = vmatpush2.bf16.msra.mxu0 0
      %1096 = vmatprep.subr.bf16.mxu0 0
      %1097 = vmatpush2.bf16.msra.mxu0 0
      %1098 = vmatprep.subr.bf16.mxu0 0
      %1099 = vmatpush2.bf16.msra.mxu0 0
      %1100 = vmatprep.subr.bf16.mxu0 0
      %1101 = vmatpush2.bf16.msra.mxu0 0
      %1102 = vmatprep.subr.bf16.mxu0 0
      %1103 = vmatpush2.bf16.msra.mxu0 0
      %1104 = vmatprep.mubr.bf16.mxu0 0
      %1105 = vmatmul.mubr.bf16.gmra.mxu0 %v1070
      %v1106 = vpop.f32.mrf.mxu0
      %v1107 = vadd.f32 0.0, %v1106
      %v1108 = vpop.f32.mrf.mxu0
      %v1109 = vpop.f32.mrf.mxu0
      %v1110 = vadd.f32 0.0, %v1109
      %v1111 = vpop.f32.mrf.mxu0
      %1112 = vdwg.mxu0
      %1113 = vrot.lane.b32.xlu0 %v653, 64
      %v1114 = vpop.permute.xlu0 %1113
      %v1117 = vsel %vm879, %v971, 0
      %1119 = vmatprep.subr.bf16.mxu0 0
      %1120 = vmatpush1.bf16.msra.mxu0 0
      %1121 = vmatprep.subr.bf16.mxu0 0
      %1122 = vmatpush1.bf16.msra.mxu0 0
      %1123 = vmatprep.subr.bf16.mxu0 0
      %1124 = vmatpush1.bf16.msra.mxu0 0
      %1125 = vmatprep.subr.bf16.mxu0 0
      %1126 = vmatpush1.bf16.msra.mxu0 0
      %1127 = vmatprep.subr.bf16.mxu0 0
      %1128 = vmatpush1.bf16.msra.mxu0 0
      %1129 = vmatprep.subr.bf16.mxu0 0
      %1130 = vmatpush1.bf16.msra.mxu0 0
      %1131 = vmatprep.subr.bf16.mxu0 0
      %1132 = vmatpush1.bf16.msra.mxu0 0
      %1133 = vmatprep.subr.bf16.mxu0 0
      %1134 = vmatpush1.bf16.msra.mxu0 %v1114
      %1135 = vmatprep.subr.bf16.mxu0 0
      %1136 = vmatpush2.bf16.msra.mxu0 0
      %1137 = vmatprep.subr.bf16.mxu0 0
      %1138 = vmatpush2.bf16.msra.mxu0 0
      %1139 = vmatprep.subr.bf16.mxu0 0
      %1140 = vmatpush2.bf16.msra.mxu0 0
      %1141 = vmatprep.subr.bf16.mxu0 0
      %1142 = vmatpush2.bf16.msra.mxu0 0
      %1143 = vmatprep.subr.bf16.mxu0 0
      %1144 = vmatpush2.bf16.msra.mxu0 0
      %1145 = vmatprep.subr.bf16.mxu0 0
      %1146 = vmatpush2.bf16.msra.mxu0 0
      %1147 = vmatprep.subr.bf16.mxu0 0
      %1148 = vmatpush2.bf16.msra.mxu0 0
      %1149 = vmatprep.subr.bf16.mxu0 0
      %1150 = vmatpush2.bf16.msra.mxu0 0
      %1151 = vmatprep.mubr.bf16.mxu0 0
      %1152 = vmatmul.mubr.bf16.gmra.mxu0 %v1117
      %v1153 = vpop.f32.mrf.mxu0
      %v1154 = vadd.f32 0.0, %v1153
      %v1155 = vpop.f32.mrf.mxu0
      %v1156 = vpop.f32.mrf.mxu0
      %v1157 = vadd.f32 0.0, %v1156
      %v1158 = vpop.f32.mrf.mxu0
      %1159 = vdwg.mxu0
      %1160 = vrot.lane.b32.xlu0 %v650, 120
      %v1161 = vpop.permute.xlu0 %1160
      %1162 = vrot.lane.b32.xlu0 %v650, 88
      %v1163 = vpop.permute.xlu0 %1162
      %v1165 = vsel %vm657, %v1161, 0
      %v1168 = vsel %vm657, %v1163, 0
      %1170 = vmatprep.subr.bf16.mxu0 0
      %1171 = vmatpush1.bf16.xpose.msra.mxu0 0
      %1172 = vmatprep.subr.bf16.mxu0 0
      %1173 = vmatpush1.bf16.xpose.msra.mxu0 0
      %1174 = vmatprep.subr.bf16.mxu0 0
      %1175 = vmatpush1.bf16.xpose.msra.mxu0 0
      %1176 = vmatprep.subr.bf16.mxu0 0
      %1177 = vmatpush1.bf16.xpose.msra.mxu0 0
      %1178 = vmatprep.subr.bf16.mxu0 0
      %1179 = vmatpush1.bf16.xpose.msra.mxu0 0
      %1180 = vmatprep.subr.bf16.mxu0 0
      %1181 = vmatpush1.bf16.xpose.msra.mxu0 0
      %1182 = vmatprep.subr.bf16.mxu0 0
      %1183 = vmatpush1.bf16.xpose.msra.mxu0 0
      %1184 = vmatprep.subr.bf16.mxu0 0
      %1185 = vmatpush1.bf16.xpose.msra.mxu0 %v1168
      %1186 = vmatprep.subr.bf16.mxu0 0
      %1187 = vmatpush2.bf16.xpose.msra.mxu0 0
      %1188 = vmatprep.subr.bf16.mxu0 0
      %1189 = vmatpush2.bf16.xpose.msra.mxu0 0
      %1190 = vmatprep.subr.bf16.mxu0 0
      %1191 = vmatpush2.bf16.xpose.msra.mxu0 0
      %1192 = vmatprep.subr.bf16.mxu0 0
      %1193 = vmatpush2.bf16.xpose.msra.mxu0 0
      %1194 = vmatprep.subr.bf16.mxu0 0
      %1195 = vmatpush2.bf16.xpose.msra.mxu0 0
      %1196 = vmatprep.subr.bf16.mxu0 0
      %1197 = vmatpush2.bf16.xpose.msra.mxu0 0
      %1198 = vmatprep.subr.bf16.mxu0 0
      %1199 = vmatpush2.bf16.xpose.msra.mxu0 0
      %1200 = vmatprep.subr.bf16.mxu0 0
      %1201 = vmatpush2.bf16.xpose.msra.mxu0 0
      %1202 = vmatprep.mubr.bf16.mxu0 0
      %1203 = vmatmul.mubr.bf16.gmra.mxu0 %v1165
      %v1204 = vpop.f32.mrf.mxu0
      %v1205 = vadd.f32 0.0, %v1204
      %v1206 = vpop.f32.mrf.mxu0
      %v1207 = vpop.f32.mrf.mxu0
      %v1208 = vadd.f32 0.0, %v1207
      %v1209 = vpop.f32.mrf.mxu0
      %1210 = vdwg.mxu0
      %1211 = vrot.lane.b32.xlu0 %v651, 120
      %v1212 = vpop.permute.xlu0 %1211
      %1213 = vrot.lane.b32.xlu0 %v651, 88
      %v1214 = vpop.permute.xlu0 %1213
      %v1216 = vsel %vm657, %v1212, 0
      %v1219 = vsel %vm657, %v1214, 0
      %1221 = vmatprep.subr.bf16.mxu0 0
      %1222 = vmatpush1.bf16.xpose.msra.mxu0 0
      %1223 = vmatprep.subr.bf16.mxu0 0
      %1224 = vmatpush1.bf16.xpose.msra.mxu0 0
      %1225 = vmatprep.subr.bf16.mxu0 0
      %1226 = vmatpush1.bf16.xpose.msra.mxu0 0
      %1227 = vmatprep.subr.bf16.mxu0 0
      %1228 = vmatpush1.bf16.xpose.msra.mxu0 0
      %1229 = vmatprep.subr.bf16.mxu0 0
      %1230 = vmatpush1.bf16.xpose.msra.mxu0 0
      %1231 = vmatprep.subr.bf16.mxu0 0
      %1232 = vmatpush1.bf16.xpose.msra.mxu0 0
      %1233 = vmatprep.subr.bf16.mxu0 0
      %1234 = vmatpush1.bf16.xpose.msra.mxu0 0
      %1235 = vmatprep.subr.bf16.mxu0 0
      %1236 = vmatpush1.bf16.xpose.msra.mxu0 %v1219
      %1237 = vmatprep.subr.bf16.mxu0 0
      %1238 = vmatpush2.bf16.xpose.msra.mxu0 0
      %1239 = vmatprep.subr.bf16.mxu0 0
      %1240 = vmatpush2.bf16.xpose.msra.mxu0 0
      %1241 = vmatprep.subr.bf16.mxu0 0
      %1242 = vmatpush2.bf16.xpose.msra.mxu0 0
      %1243 = vmatprep.subr.bf16.mxu0 0
      %1244 = vmatpush2.bf16.xpose.msra.mxu0 0
      %1245 = vmatprep.subr.bf16.mxu0 0
      %1246 = vmatpush2.bf16.xpose.msra.mxu0 0
      %1247 = vmatprep.subr.bf16.mxu0 0
      %1248 = vmatpush2.bf16.xpose.msra.mxu0 0
      %1249 = vmatprep.subr.bf16.mxu0 0
      %1250 = vmatpush2.bf16.xpose.msra.mxu0 0
      %1251 = vmatprep.subr.bf16.mxu0 0
      %1252 = vmatpush2.bf16.xpose.msra.mxu0 0
      %1253 = vmatprep.mubr.bf16.mxu0 0
      %1254 = vmatmul.mubr.bf16.gmra.mxu0 %v1216
      %v1255 = vpop.f32.mrf.mxu0
      %v1256 = vadd.f32 0.0, %v1255
      %v1257 = vpop.f32.mrf.mxu0
      %v1258 = vpop.f32.mrf.mxu0
      %v1259 = vadd.f32 0.0, %v1258
      %v1260 = vpop.f32.mrf.mxu0
      %1261 = vdwg.mxu0
      %1262 = vrot.lane.b32.xlu0 %v652, 120
      %v1263 = vpop.permute.xlu0 %1262
      %1264 = vrot.lane.b32.xlu0 %v652, 88
      %v1265 = vpop.permute.xlu0 %1264
      %v1267 = vsel %vm657, %v1263, 0
      %v1270 = vsel %vm657, %v1265, 0
      %1272 = vmatprep.subr.bf16.mxu0 0
      %1273 = vmatpush1.bf16.xpose.msra.mxu0 0
      %1274 = vmatprep.subr.bf16.mxu0 0
      %1275 = vmatpush1.bf16.xpose.msra.mxu0 0
      %1276 = vmatprep.subr.bf16.mxu0 0
      %1277 = vmatpush1.bf16.xpose.msra.mxu0 0
      %1278 = vmatprep.subr.bf16.mxu0 0
      %1279 = vmatpush1.bf16.xpose.msra.mxu0 0
      %1280 = vmatprep.subr.bf16.mxu0 0
      %1281 = vmatpush1.bf16.xpose.msra.mxu0 0
      %1282 = vmatprep.subr.bf16.mxu0 0
      %1283 = vmatpush1.bf16.xpose.msra.mxu0 0
      %1284 = vmatprep.subr.bf16.mxu0 0
      %1285 = vmatpush1.bf16.xpose.msra.mxu0 0
      %1286 = vmatprep.subr.bf16.mxu0 0
      %1287 = vmatpush1.bf16.xpose.msra.mxu0 %v1270
      %1288 = vmatprep.subr.bf16.mxu0 0
      %1289 = vmatpush2.bf16.xpose.msra.mxu0 0
      %1290 = vmatprep.subr.bf16.mxu0 0
      %1291 = vmatpush2.bf16.xpose.msra.mxu0 0
      %1292 = vmatprep.subr.bf16.mxu0 0
      %1293 = vmatpush2.bf16.xpose.msra.mxu0 0
      %1294 = vmatprep.subr.bf16.mxu0 0
      %1295 = vmatpush2.bf16.xpose.msra.mxu0 0
      %1296 = vmatprep.subr.bf16.mxu0 0
      %1297 = vmatpush2.bf16.xpose.msra.mxu0 0
      %1298 = vmatprep.subr.bf16.mxu0 0
      %1299 = vmatpush2.bf16.xpose.msra.mxu0 0
      %1300 = vmatprep.subr.bf16.mxu0 0
      %1301 = vmatpush2.bf16.xpose.msra.mxu0 0
      %1302 = vmatprep.subr.bf16.mxu0 0
      %1303 = vmatpush2.bf16.xpose.msra.mxu0 0
      %1304 = vmatprep.mubr.bf16.mxu0 0
      %1305 = vmatmul.mubr.bf16.gmra.mxu0 %v1267
      %v1306 = vpop.f32.mrf.mxu0
      %v1307 = vadd.f32 0.0, %v1306
      %v1308 = vpop.f32.mrf.mxu0
      %v1309 = vpop.f32.mrf.mxu0
      %v1310 = vadd.f32 0.0, %v1309
      %v1311 = vpop.f32.mrf.mxu0
      %1312 = vdwg.mxu0
      %1313 = vrot.lane.b32.xlu0 %v653, 120
      %v1314 = vpop.permute.xlu0 %1313
      %1315 = vrot.lane.b32.xlu0 %v653, 88
      %v1316 = vpop.permute.xlu0 %1315
      %v1318 = vsel %vm657, %v1314, 0
      %v1321 = vsel %vm657, %v1316, 0
      %1323 = vmatprep.subr.bf16.mxu0 0
      %1324 = vmatpush1.bf16.xpose.msra.mxu0 0
      %1325 = vmatprep.subr.bf16.mxu0 0
      %1326 = vmatpush1.bf16.xpose.msra.mxu0 0
      %1327 = vmatprep.subr.bf16.mxu0 0
      %1328 = vmatpush1.bf16.xpose.msra.mxu0 0
      %1329 = vmatprep.subr.bf16.mxu0 0
      %1330 = vmatpush1.bf16.xpose.msra.mxu0 0
      %1331 = vmatprep.subr.bf16.mxu0 0
      %1332 = vmatpush1.bf16.xpose.msra.mxu0 0
      %1333 = vmatprep.subr.bf16.mxu0 0
      %1334 = vmatpush1.bf16.xpose.msra.mxu0 0
      %1335 = vmatprep.subr.bf16.mxu0 0
      %1336 = vmatpush1.bf16.xpose.msra.mxu0 0
      %1337 = vmatprep.subr.bf16.mxu0 0
      %1338 = vmatpush1.bf16.xpose.msra.mxu0 %v1321
      %1339 = vmatprep.subr.bf16.mxu0 0
      %1340 = vmatpush2.bf16.xpose.msra.mxu0 0
      %1341 = vmatprep.subr.bf16.mxu0 0
      %1342 = vmatpush2.bf16.xpose.msra.mxu0 0
      %1343 = vmatprep.subr.bf16.mxu0 0
      %1344 = vmatpush2.bf16.xpose.msra.mxu0 0
      %1345 = vmatprep.subr.bf16.mxu0 0
      %1346 = vmatpush2.bf16.xpose.msra.mxu0 0
      %1347 = vmatprep.subr.bf16.mxu0 0
      %1348 = vmatpush2.bf16.xpose.msra.mxu0 0
      %1349 = vmatprep.subr.bf16.mxu0 0
      %1350 = vmatpush2.bf16.xpose.msra.mxu0 0
      %1351 = vmatprep.subr.bf16.mxu0 0
      %1352 = vmatpush2.bf16.xpose.msra.mxu0 0
      %1353 = vmatprep.subr.bf16.mxu0 0
      %1354 = vmatpush2.bf16.xpose.msra.mxu0 0
      %1355 = vmatprep.mubr.bf16.mxu0 0
      %1356 = vmatmul.mubr.bf16.gmra.mxu0 %v1318
      %v1357 = vpop.f32.mrf.mxu0
      %v1358 = vadd.f32 0.0, %v1357
      %v1359 = vpop.f32.mrf.mxu0
      %v1360 = vpop.f32.mrf.mxu0
      %v1361 = vadd.f32 0.0, %v1360
      %v1362 = vpop.f32.mrf.mxu0
      %1363 = vdwg.mxu0
      %v1364 = vmul.f32 %v1205, 0.35355338
      %v1365 = vmul.f32 %v1208, 0.35355338
      %v1366 = vmul.f32 %v1256, 0.35355338
      %v1367 = vmul.f32 %v1259, 0.35355338
      %v1368 = vmul.f32 %v1307, 0.35355338
      %v1369 = vmul.f32 %v1310, 0.35355338
      %v1370 = vmul.f32 %v1358, 0.35355338
      %v1371 = vmul.f32 %v1361, 0.35355338
      %v1372 = vadd.f32 %v1364, %v636
      %v1373 = vadd.f32 %v1365, %v637
      %v1374 = vadd.f32 %v1366, %v636
      %v1375 = vadd.f32 %v1367, %v637
      %v1376 = vadd.f32 %v1368, %v636
      %v1377 = vadd.f32 %v1369, %v637
      %v1378 = vadd.f32 %v1370, %v636
      %v1379 = vadd.f32 %v1371, %v637
      %v1380 = vadd.f32 %v1372, %v642
      %v1381 = vadd.f32 %v1373, %v643
      %v1382 = vadd.f32 %v1374, %v644
      %v1383 = vadd.f32 %v1375, %v645
      %v1384 = vadd.f32 %v1376, %v646
      %v1385 = vadd.f32 %v1377, %v647
      %v1386 = vadd.f32 %v1378, %v648
      %v1387 = vadd.f32 %v1379, %v649
      %v1388 = vsel %vm879, %v1380, -inf
      %1389 = vmax.xlane.f32.xlu0 %v1388
      %v1390 = vpop.xlane.xlu0 %1389
      %v1391 = vsel %vm879, %v1381, -inf
      %1392 = vmax.xlane.f32.xlu0 %v1391
      %v1393 = vpop.xlane.xlu0 %1392
      %v1394 = vsel %vm879, %v1382, -inf
      %1395 = vmax.xlane.f32.xlu0 %v1394
      %v1396 = vpop.xlane.xlu0 %1395
      %v1397 = vsel %vm879, %v1383, -inf
      %1398 = vmax.xlane.f32.xlu0 %v1397
      %v1399 = vpop.xlane.xlu0 %1398
      %v1400 = vsel %vm879, %v1384, -inf
      %1401 = vmax.xlane.f32.xlu0 %v1400
      %v1402 = vpop.xlane.xlu0 %1401
      %v1403 = vsel %vm879, %v1385, -inf
      %1404 = vmax.xlane.f32.xlu0 %v1403
      %v1405 = vpop.xlane.xlu0 %1404
      %v1406 = vsel %vm879, %v1386, -inf
      %1407 = vmax.xlane.f32.xlu0 %v1406
      %v1408 = vpop.xlane.xlu0 %1407
      %v1409 = vsel %vm879, %v1387, -inf
      %1410 = vmax.xlane.f32.xlu0 %v1409
      %v1411 = vpop.xlane.xlu0 %1410
      %v1412 = vsub.f32 %v1380, %v1390
      %v1413 = vsub.f32 %v1381, %v1393
      %v1414 = vsub.f32 %v1382, %v1396
      %v1415 = vsub.f32 %v1383, %v1399
      %v1416 = vsub.f32 %v1384, %v1402
      %v1417 = vsub.f32 %v1385, %v1405
      %v1418 = vsub.f32 %v1386, %v1408
      %v1419 = vsub.f32 %v1387, %v1411
      %v1420 = vmul.f32 %v1412, 1.442695
      %v1421 = vpow.pop %v1420
      %v1422 = vmul.f32 %v1413, 1.442695
      %v1423 = vpow.pop %v1422
      %v1424 = vmul.f32 %v1414, 1.442695
      %v1425 = vpow.pop %v1424
      %v1426 = vmul.f32 %v1415, 1.442695
      %v1427 = vpow.pop %v1426
      %v1428 = vmul.f32 %v1416, 1.442695
      %v1429 = vpow.pop %v1428
      %v1430 = vmul.f32 %v1417, 1.442695
      %v1431 = vpow.pop %v1430
      %v1432 = vmul.f32 %v1418, 1.442695
      %v1433 = vpow.pop %v1432
      %v1434 = vmul.f32 %v1419, 1.442695
      %v1435 = vpow.pop %v1434
      %v1436 = vsel %vm879, %v1421, 0.0
      %1437 = vadd.xlane.f32.xlu0 %v1436
      %v1438 = vpop.xlane.xlu0 %1437
      %v1439 = vsel %vm879, %v1423, 0.0
      %1440 = vadd.xlane.f32.xlu0 %v1439
      %v1441 = vpop.xlane.xlu0 %1440
      %v1442 = vsel %vm879, %v1425, 0.0
      %1443 = vadd.xlane.f32.xlu0 %v1442
      %v1444 = vpop.xlane.xlu0 %1443
      %v1445 = vsel %vm879, %v1427, 0.0
      %1446 = vadd.xlane.f32.xlu0 %v1445
      %v1447 = vpop.xlane.xlu0 %1446
      %v1448 = vsel %vm879, %v1429, 0.0
      %1449 = vadd.xlane.f32.xlu0 %v1448
      %v1450 = vpop.xlane.xlu0 %1449
      %v1451 = vsel %vm879, %v1431, 0.0
      %1452 = vadd.xlane.f32.xlu0 %v1451
      %v1453 = vpop.xlane.xlu0 %1452
      %v1454 = vsel %vm879, %v1433, 0.0
      %1455 = vadd.xlane.f32.xlu0 %v1454
      %v1456 = vpop.xlane.xlu0 %1455
      %v1457 = vsel %vm879, %v1435, 0.0
      %1458 = vadd.xlane.f32.xlu0 %v1457
      %v1459 = vpop.xlane.xlu0 %1458
      %v1460 = vrcp.pop %v1438
      %v1461 = vrcp.pop %v1441
      %v1462 = vrcp.pop %v1444
      %v1463 = vrcp.pop %v1447
      %v1464 = vrcp.pop %v1450
      %v1465 = vrcp.pop %v1453
      %v1466 = vrcp.pop %v1456
      %v1467 = vrcp.pop %v1459
      %v1468 = vmul.f32 %v1421, %v1460
      %v1469 = vmul.f32 %v1423, %v1461
      %v1470 = vmul.f32 %v1425, %v1462
      %v1471 = vmul.f32 %v1427, %v1463
      %v1472 = vmul.f32 %v1429, %v1464
      %v1473 = vmul.f32 %v1431, %v1465
      %v1474 = vmul.f32 %v1433, %v1466
      %v1475 = vmul.f32 %v1435, %v1467
      %v1476 = vpack.c.bf16 %v1469, %v1468
      %v1477 = vpack.c.bf16 %v1471, %v1470
      %v1478 = vpack.c.bf16 %v1473, %v1472
      %v1479 = vpack.c.bf16 %v1475, %v1474
      %1480 = vrot.lane.b32.xlu0 %v650, 56
      %v1481 = vpop.permute.xlu0 %1480
      %v1484 = vsel %vm879, %v1476, 0
      %1486 = vmatprep.subr.bf16.mxu0 0
      %1487 = vmatpush1.bf16.msra.mxu0 0
      %1488 = vmatprep.subr.bf16.mxu0 0
      %1489 = vmatpush1.bf16.msra.mxu0 0
      %1490 = vmatprep.subr.bf16.mxu0 0
      %1491 = vmatpush1.bf16.msra.mxu0 0
      %1492 = vmatprep.subr.bf16.mxu0 0
      %1493 = vmatpush1.bf16.msra.mxu0 0
      %1494 = vmatprep.subr.bf16.mxu0 0
      %1495 = vmatpush1.bf16.msra.mxu0 0
      %1496 = vmatprep.subr.bf16.mxu0 0
      %1497 = vmatpush1.bf16.msra.mxu0 0
      %1498 = vmatprep.subr.bf16.mxu0 0
      %1499 = vmatpush1.bf16.msra.mxu0 0
      %1500 = vmatprep.subr.bf16.mxu0 0
      %1501 = vmatpush1.bf16.msra.mxu0 %v1481
      %1502 = vmatprep.subr.bf16.mxu0 0
      %1503 = vmatpush2.bf16.msra.mxu0 0
      %1504 = vmatprep.subr.bf16.mxu0 0
      %1505 = vmatpush2.bf16.msra.mxu0 0
      %1506 = vmatprep.subr.bf16.mxu0 0
      %1507 = vmatpush2.bf16.msra.mxu0 0
      %1508 = vmatprep.subr.bf16.mxu0 0
      %1509 = vmatpush2.bf16.msra.mxu0 0
      %1510 = vmatprep.subr.bf16.mxu0 0
      %1511 = vmatpush2.bf16.msra.mxu0 0
      %1512 = vmatprep.subr.bf16.mxu0 0
      %1513 = vmatpush2.bf16.msra.mxu0 0
      %1514 = vmatprep.subr.bf16.mxu0 0
      %1515 = vmatpush2.bf16.msra.mxu0 0
      %1516 = vmatprep.subr.bf16.mxu0 0
      %1517 = vmatpush2.bf16.msra.mxu0 0
      %1518 = vmatprep.mubr.bf16.mxu0 0
      %1519 = vmatmul.mubr.bf16.gmra.mxu0 %v1484
      %v1520 = vpop.f32.mrf.mxu0
      %v1521 = vadd.f32 0.0, %v1520
      %v1522 = vpop.f32.mrf.mxu0
      %v1523 = vpop.f32.mrf.mxu0
      %v1524 = vadd.f32 0.0, %v1523
      %v1525 = vpop.f32.mrf.mxu0
      %1526 = vdwg.mxu0
      %1527 = vrot.lane.b32.xlu0 %v651, 56
      %v1528 = vpop.permute.xlu0 %1527
      %v1531 = vsel %vm879, %v1477, 0
      %1533 = vmatprep.subr.bf16.mxu0 0
      %1534 = vmatpush1.bf16.msra.mxu0 0
      %1535 = vmatprep.subr.bf16.mxu0 0
      %1536 = vmatpush1.bf16.msra.mxu0 0
      %1537 = vmatprep.subr.bf16.mxu0 0
      %1538 = vmatpush1.bf16.msra.mxu0 0
      %1539 = vmatprep.subr.bf16.mxu0 0
      %1540 = vmatpush1.bf16.msra.mxu0 0
      %1541 = vmatprep.subr.bf16.mxu0 0
      %1542 = vmatpush1.bf16.msra.mxu0 0
      %1543 = vmatprep.subr.bf16.mxu0 0
      %1544 = vmatpush1.bf16.msra.mxu0 0
      %1545 = vmatprep.subr.bf16.mxu0 0
      %1546 = vmatpush1.bf16.msra.mxu0 0
      %1547 = vmatprep.subr.bf16.mxu0 0
      %1548 = vmatpush1.bf16.msra.mxu0 %v1528
      %1549 = vmatprep.subr.bf16.mxu0 0
      %1550 = vmatpush2.bf16.msra.mxu0 0
      %1551 = vmatprep.subr.bf16.mxu0 0
      %1552 = vmatpush2.bf16.msra.mxu0 0
      %1553 = vmatprep.subr.bf16.mxu0 0
      %1554 = vmatpush2.bf16.msra.mxu0 0
      %1555 = vmatprep.subr.bf16.mxu0 0
      %1556 = vmatpush2.bf16.msra.mxu0 0
      %1557 = vmatprep.subr.bf16.mxu0 0
      %1558 = vmatpush2.bf16.msra.mxu0 0
      %1559 = vmatprep.subr.bf16.mxu0 0
      %1560 = vmatpush2.bf16.msra.mxu0 0
      %1561 = vmatprep.subr.bf16.mxu0 0
      %1562 = vmatpush2.bf16.msra.mxu0 0
      %1563 = vmatprep.subr.bf16.mxu0 0
      %1564 = vmatpush2.bf16.msra.mxu0 0
      %1565 = vmatprep.mubr.bf16.mxu0 0
      %1566 = vmatmul.mubr.bf16.gmra.mxu0 %v1531
      %v1567 = vpop.f32.mrf.mxu0
      %v1568 = vadd.f32 0.0, %v1567
      %v1569 = vpop.f32.mrf.mxu0
      %v1570 = vpop.f32.mrf.mxu0
      %v1571 = vadd.f32 0.0, %v1570
      %v1572 = vpop.f32.mrf.mxu0
      %1573 = vdwg.mxu0
      %1574 = vrot.lane.b32.xlu0 %v652, 56
      %v1575 = vpop.permute.xlu0 %1574
      %v1578 = vsel %vm879, %v1478, 0
      %1580 = vmatprep.subr.bf16.mxu0 0
      %1581 = vmatpush1.bf16.msra.mxu0 0
      %1582 = vmatprep.subr.bf16.mxu0 0
      %1583 = vmatpush1.bf16.msra.mxu0 0
      %1584 = vmatprep.subr.bf16.mxu0 0
      %1585 = vmatpush1.bf16.msra.mxu0 0
      %1586 = vmatprep.subr.bf16.mxu0 0
      %1587 = vmatpush1.bf16.msra.mxu0 0
      %1588 = vmatprep.subr.bf16.mxu0 0
      %1589 = vmatpush1.bf16.msra.mxu0 0
      %1590 = vmatprep.subr.bf16.mxu0 0
      %1591 = vmatpush1.bf16.msra.mxu0 0
      %1592 = vmatprep.subr.bf16.mxu0 0
      %1593 = vmatpush1.bf16.msra.mxu0 0
      %1594 = vmatprep.subr.bf16.mxu0 0
      %1595 = vmatpush1.bf16.msra.mxu0 %v1575
      %1596 = vmatprep.subr.bf16.mxu0 0
      %1597 = vmatpush2.bf16.msra.mxu0 0
      %1598 = vmatprep.subr.bf16.mxu0 0
      %1599 = vmatpush2.bf16.msra.mxu0 0
      %1600 = vmatprep.subr.bf16.mxu0 0
      %1601 = vmatpush2.bf16.msra.mxu0 0
      %1602 = vmatprep.subr.bf16.mxu0 0
      %1603 = vmatpush2.bf16.msra.mxu0 0
      %1604 = vmatprep.subr.bf16.mxu0 0
      %1605 = vmatpush2.bf16.msra.mxu0 0
      %1606 = vmatprep.subr.bf16.mxu0 0
      %1607 = vmatpush2.bf16.msra.mxu0 0
      %1608 = vmatprep.subr.bf16.mxu0 0
      %1609 = vmatpush2.bf16.msra.mxu0 0
      %1610 = vmatprep.subr.bf16.mxu0 0
      %1611 = vmatpush2.bf16.msra.mxu0 0
      %1612 = vmatprep.mubr.bf16.mxu0 0
      %1613 = vmatmul.mubr.bf16.gmra.mxu0 %v1578
      %v1614 = vpop.f32.mrf.mxu0
      %v1615 = vadd.f32 0.0, %v1614
      %v1616 = vpop.f32.mrf.mxu0
      %v1617 = vpop.f32.mrf.mxu0
      %v1618 = vadd.f32 0.0, %v1617
      %v1619 = vpop.f32.mrf.mxu0
      %1620 = vdwg.mxu0
      %1621 = vrot.lane.b32.xlu0 %v653, 56
      %v1622 = vpop.permute.xlu0 %1621
      %v1625 = vsel %vm879, %v1479, 0
      %1627 = vmatprep.subr.bf16.mxu0 0
      %1628 = vmatpush1.bf16.msra.mxu0 0
      %1629 = vmatprep.subr.bf16.mxu0 0
      %1630 = vmatpush1.bf16.msra.mxu0 0
      %1631 = vmatprep.subr.bf16.mxu0 0
      %1632 = vmatpush1.bf16.msra.mxu0 0
      %1633 = vmatprep.subr.bf16.mxu0 0
      %1634 = vmatpush1.bf16.msra.mxu0 0
      %1635 = vmatprep.subr.bf16.mxu0 0
      %1636 = vmatpush1.bf16.msra.mxu0 0
      %1637 = vmatprep.subr.bf16.mxu0 0
      %1638 = vmatpush1.bf16.msra.mxu0 0
      %1639 = vmatprep.subr.bf16.mxu0 0
      %1640 = vmatpush1.bf16.msra.mxu0 0
      %1641 = vmatprep.subr.bf16.mxu0 0
      %1642 = vmatpush1.bf16.msra.mxu0 %v1622
      %1643 = vmatprep.subr.bf16.mxu0 0
      %1644 = vmatpush2.bf16.msra.mxu0 0
      %1645 = vmatprep.subr.bf16.mxu0 0
      %1646 = vmatpush2.bf16.msra.mxu0 0
      %1647 = vmatprep.subr.bf16.mxu0 0
      %1648 = vmatpush2.bf16.msra.mxu0 0
      %1649 = vmatprep.subr.bf16.mxu0 0
      %1650 = vmatpush2.bf16.msra.mxu0 0
      %1651 = vmatprep.subr.bf16.mxu0 0
      %1652 = vmatpush2.bf16.msra.mxu0 0
      %1653 = vmatprep.subr.bf16.mxu0 0
      %1654 = vmatpush2.bf16.msra.mxu0 0
      %1655 = vmatprep.subr.bf16.mxu0 0
      %1656 = vmatpush2.bf16.msra.mxu0 0
      %1657 = vmatprep.subr.bf16.mxu0 0
      %1658 = vmatpush2.bf16.msra.mxu0 0
      %1659 = vmatprep.mubr.bf16.mxu0 0
      %1660 = vmatmul.mubr.bf16.gmra.mxu0 %v1625
      %v1661 = vpop.f32.mrf.mxu0
      %v1662 = vadd.f32 0.0, %v1661
      %v1663 = vpop.f32.mrf.mxu0
      %v1664 = vpop.f32.mrf.mxu0
      %v1665 = vadd.f32 0.0, %v1664
      %v1666 = vpop.f32.mrf.mxu0
      %1667 = vdwg.mxu0
      %1668 = vrot.lane.b32.xlu0 %v650, 112
      %v1669 = vpop.permute.xlu0 %1668
      %1670 = vrot.lane.b32.xlu0 %v650, 80
      %v1671 = vpop.permute.xlu0 %1670
      %v1673 = vsel %vm657, %v1669, 0
      %v1676 = vsel %vm657, %v1671, 0
      %1678 = vmatprep.subr.bf16.mxu0 0
      %1679 = vmatpush1.bf16.xpose.msra.mxu0 0
      %1680 = vmatprep.subr.bf16.mxu0 0
      %1681 = vmatpush1.bf16.xpose.msra.mxu0 0
      %1682 = vmatprep.subr.bf16.mxu0 0
      %1683 = vmatpush1.bf16.xpose.msra.mxu0 0
      %1684 = vmatprep.subr.bf16.mxu0 0
      %1685 = vmatpush1.bf16.xpose.msra.mxu0 0
      %1686 = vmatprep.subr.bf16.mxu0 0
      %1687 = vmatpush1.bf16.xpose.msra.mxu0 0
      %1688 = vmatprep.subr.bf16.mxu0 0
      %1689 = vmatpush1.bf16.xpose.msra.mxu0 0
      %1690 = vmatprep.subr.bf16.mxu0 0
      %1691 = vmatpush1.bf16.xpose.msra.mxu0 0
      %1692 = vmatprep.subr.bf16.mxu0 0
      %1693 = vmatpush1.bf16.xpose.msra.mxu0 %v1676
      %1694 = vmatprep.subr.bf16.mxu0 0
      %1695 = vmatpush2.bf16.xpose.msra.mxu0 0
      %1696 = vmatprep.subr.bf16.mxu0 0
      %1697 = vmatpush2.bf16.xpose.msra.mxu0 0
      %1698 = vmatprep.subr.bf16.mxu0 0
      %1699 = vmatpush2.bf16.xpose.msra.mxu0 0
      %1700 = vmatprep.subr.bf16.mxu0 0
      %1701 = vmatpush2.bf16.xpose.msra.mxu0 0
      %1702 = vmatprep.subr.bf16.mxu0 0
      %1703 = vmatpush2.bf16.xpose.msra.mxu0 0
      %1704 = vmatprep.subr.bf16.mxu0 0
      %1705 = vmatpush2.bf16.xpose.msra.mxu0 0
      %1706 = vmatprep.subr.bf16.mxu0 0
      %1707 = vmatpush2.bf16.xpose.msra.mxu0 0
      %1708 = vmatprep.subr.bf16.mxu0 0
      %1709 = vmatpush2.bf16.xpose.msra.mxu0 0
      %1710 = vmatprep.mubr.bf16.mxu0 0
      %1711 = vmatmul.mubr.bf16.gmra.mxu0 %v1673
      %v1712 = vpop.f32.mrf.mxu0
      %v1713 = vadd.f32 0.0, %v1712
      %v1714 = vpop.f32.mrf.mxu0
      %v1715 = vpop.f32.mrf.mxu0
      %v1716 = vadd.f32 0.0, %v1715
      %v1717 = vpop.f32.mrf.mxu0
      %1718 = vdwg.mxu0
      %1719 = vrot.lane.b32.xlu0 %v651, 112
      %v1720 = vpop.permute.xlu0 %1719
      %1721 = vrot.lane.b32.xlu0 %v651, 80
      %v1722 = vpop.permute.xlu0 %1721
      %v1724 = vsel %vm657, %v1720, 0
      %v1727 = vsel %vm657, %v1722, 0
      %1729 = vmatprep.subr.bf16.mxu0 0
      %1730 = vmatpush1.bf16.xpose.msra.mxu0 0
      %1731 = vmatprep.subr.bf16.mxu0 0
      %1732 = vmatpush1.bf16.xpose.msra.mxu0 0
      %1733 = vmatprep.subr.bf16.mxu0 0
      %1734 = vmatpush1.bf16.xpose.msra.mxu0 0
      %1735 = vmatprep.subr.bf16.mxu0 0
      %1736 = vmatpush1.bf16.xpose.msra.mxu0 0
      %1737 = vmatprep.subr.bf16.mxu0 0
      %1738 = vmatpush1.bf16.xpose.msra.mxu0 0
      %1739 = vmatprep.subr.bf16.mxu0 0
      %1740 = vmatpush1.bf16.xpose.msra.mxu0 0
      %1741 = vmatprep.subr.bf16.mxu0 0
      %1742 = vmatpush1.bf16.xpose.msra.mxu0 0
      %1743 = vmatprep.subr.bf16.mxu0 0
      %1744 = vmatpush1.bf16.xpose.msra.mxu0 %v1727
      %1745 = vmatprep.subr.bf16.mxu0 0
      %1746 = vmatpush2.bf16.xpose.msra.mxu0 0
      %1747 = vmatprep.subr.bf16.mxu0 0
      %1748 = vmatpush2.bf16.xpose.msra.mxu0 0
      %1749 = vmatprep.subr.bf16.mxu0 0
      %1750 = vmatpush2.bf16.xpose.msra.mxu0 0
      %1751 = vmatprep.subr.bf16.mxu0 0
      %1752 = vmatpush2.bf16.xpose.msra.mxu0 0
      %1753 = vmatprep.subr.bf16.mxu0 0
      %1754 = vmatpush2.bf16.xpose.msra.mxu0 0
      %1755 = vmatprep.subr.bf16.mxu0 0
      %1756 = vmatpush2.bf16.xpose.msra.mxu0 0
      %1757 = vmatprep.subr.bf16.mxu0 0
      %1758 = vmatpush2.bf16.xpose.msra.mxu0 0
      %1759 = vmatprep.subr.bf16.mxu0 0
      %1760 = vmatpush2.bf16.xpose.msra.mxu0 0
      %1761 = vmatprep.mubr.bf16.mxu0 0
      %1762 = vmatmul.mubr.bf16.gmra.mxu0 %v1724
      %v1763 = vpop.f32.mrf.mxu0
      %v1764 = vadd.f32 0.0, %v1763
      %v1765 = vpop.f32.mrf.mxu0
      %v1766 = vpop.f32.mrf.mxu0
      %v1767 = vadd.f32 0.0, %v1766
      %v1768 = vpop.f32.mrf.mxu0
      %1769 = vdwg.mxu0
      %1770 = vrot.lane.b32.xlu0 %v652, 112
      %v1771 = vpop.permute.xlu0 %1770
      %1772 = vrot.lane.b32.xlu0 %v652, 80
      %v1773 = vpop.permute.xlu0 %1772
      %v1775 = vsel %vm657, %v1771, 0
      %v1778 = vsel %vm657, %v1773, 0
      %1780 = vmatprep.subr.bf16.mxu0 0
      %1781 = vmatpush1.bf16.xpose.msra.mxu0 0
      %1782 = vmatprep.subr.bf16.mxu0 0
      %1783 = vmatpush1.bf16.xpose.msra.mxu0 0
      %1784 = vmatprep.subr.bf16.mxu0 0
      %1785 = vmatpush1.bf16.xpose.msra.mxu0 0
      %1786 = vmatprep.subr.bf16.mxu0 0
      %1787 = vmatpush1.bf16.xpose.msra.mxu0 0
      %1788 = vmatprep.subr.bf16.mxu0 0
      %1789 = vmatpush1.bf16.xpose.msra.mxu0 0
      %1790 = vmatprep.subr.bf16.mxu0 0
      %1791 = vmatpush1.bf16.xpose.msra.mxu0 0
      %1792 = vmatprep.subr.bf16.mxu0 0
      %1793 = vmatpush1.bf16.xpose.msra.mxu0 0
      %1794 = vmatprep.subr.bf16.mxu0 0
      %1795 = vmatpush1.bf16.xpose.msra.mxu0 %v1778
      %1796 = vmatprep.subr.bf16.mxu0 0
      %1797 = vmatpush2.bf16.xpose.msra.mxu0 0
      %1798 = vmatprep.subr.bf16.mxu0 0
      %1799 = vmatpush2.bf16.xpose.msra.mxu0 0
      %1800 = vmatprep.subr.bf16.mxu0 0
      %1801 = vmatpush2.bf16.xpose.msra.mxu0 0
      %1802 = vmatprep.subr.bf16.mxu0 0
      %1803 = vmatpush2.bf16.xpose.msra.mxu0 0
      %1804 = vmatprep.subr.bf16.mxu0 0
      %1805 = vmatpush2.bf16.xpose.msra.mxu0 0
      %1806 = vmatprep.subr.bf16.mxu0 0
      %1807 = vmatpush2.bf16.xpose.msra.mxu0 0
      %1808 = vmatprep.subr.bf16.mxu0 0
      %1809 = vmatpush2.bf16.xpose.msra.mxu0 0
      %1810 = vmatprep.subr.bf16.mxu0 0
      %1811 = vmatpush2.bf16.xpose.msra.mxu0 0
      %1812 = vmatprep.mubr.bf16.mxu0 0
      %1813 = vmatmul.mubr.bf16.gmra.mxu0 %v1775
      %v1814 = vpop.f32.mrf.mxu0
      %v1815 = vadd.f32 0.0, %v1814
      %v1816 = vpop.f32.mrf.mxu0
      %v1817 = vpop.f32.mrf.mxu0
      %v1818 = vadd.f32 0.0, %v1817
      %v1819 = vpop.f32.mrf.mxu0
      %1820 = vdwg.mxu0
      %1821 = vrot.lane.b32.xlu0 %v653, 112
      %v1822 = vpop.permute.xlu0 %1821
      %1823 = vrot.lane.b32.xlu0 %v653, 80
      %v1824 = vpop.permute.xlu0 %1823
      %v1826 = vsel %vm657, %v1822, 0
      %v1829 = vsel %vm657, %v1824, 0
      %1831 = vmatprep.subr.bf16.mxu0 0
      %1832 = vmatpush1.bf16.xpose.msra.mxu0 0
      %1833 = vmatprep.subr.bf16.mxu0 0
      %1834 = vmatpush1.bf16.xpose.msra.mxu0 0
      %1835 = vmatprep.subr.bf16.mxu0 0
      %1836 = vmatpush1.bf16.xpose.msra.mxu0 0
      %1837 = vmatprep.subr.bf16.mxu0 0
      %1838 = vmatpush1.bf16.xpose.msra.mxu0 0
      %1839 = vmatprep.subr.bf16.mxu0 0
      %1840 = vmatpush1.bf16.xpose.msra.mxu0 0
      %1841 = vmatprep.subr.bf16.mxu0 0
      %1842 = vmatpush1.bf16.xpose.msra.mxu0 0
      %1843 = vmatprep.subr.bf16.mxu0 0
      %1844 = vmatpush1.bf16.xpose.msra.mxu0 0
      %1845 = vmatprep.subr.bf16.mxu0 0
      %1846 = vmatpush1.bf16.xpose.msra.mxu0 %v1829
      %1847 = vmatprep.subr.bf16.mxu0 0
      %1848 = vmatpush2.bf16.xpose.msra.mxu0 0
      %1849 = vmatprep.subr.bf16.mxu0 0
      %1850 = vmatpush2.bf16.xpose.msra.mxu0 0
      %1851 = vmatprep.subr.bf16.mxu0 0
      %1852 = vmatpush2.bf16.xpose.msra.mxu0 0
      %1853 = vmatprep.subr.bf16.mxu0 0
      %1854 = vmatpush2.bf16.xpose.msra.mxu0 0
      %1855 = vmatprep.subr.bf16.mxu0 0
      %1856 = vmatpush2.bf16.xpose.msra.mxu0 0
      %1857 = vmatprep.subr.bf16.mxu0 0
      %1858 = vmatpush2.bf16.xpose.msra.mxu0 0
      %1859 = vmatprep.subr.bf16.mxu0 0
      %1860 = vmatpush2.bf16.xpose.msra.mxu0 0
      %1861 = vmatprep.subr.bf16.mxu0 0
      %1862 = vmatpush2.bf16.xpose.msra.mxu0 0
      %1863 = vmatprep.mubr.bf16.mxu0 0
      %1864 = vmatmul.mubr.bf16.gmra.mxu0 %v1826
      %v1865 = vpop.f32.mrf.mxu0
      %v1866 = vadd.f32 0.0, %v1865
      %v1867 = vpop.f32.mrf.mxu0
      %v1868 = vpop.f32.mrf.mxu0
      %v1869 = vadd.f32 0.0, %v1868
      %v1870 = vpop.f32.mrf.mxu0
      %1871 = vdwg.mxu0
      %v1872 = vmul.f32 %v1713, 0.35355338
      %v1873 = vmul.f32 %v1716, 0.35355338
      %v1874 = vmul.f32 %v1764, 0.35355338
      %v1875 = vmul.f32 %v1767, 0.35355338
      %v1876 = vmul.f32 %v1815, 0.35355338
      %v1877 = vmul.f32 %v1818, 0.35355338
      %v1878 = vmul.f32 %v1866, 0.35355338
      %v1879 = vmul.f32 %v1869, 0.35355338
      %v1880 = vadd.f32 %v1872, %v638
      %v1881 = vadd.f32 %v1873, %v639
      %v1882 = vadd.f32 %v1874, %v638
      %v1883 = vadd.f32 %v1875, %v639
      %v1884 = vadd.f32 %v1876, %v638
      %v1885 = vadd.f32 %v1877, %v639
      %v1886 = vadd.f32 %v1878, %v638
      %v1887 = vadd.f32 %v1879, %v639
      %v1888 = vadd.f32 %v1880, %v642
      %v1889 = vadd.f32 %v1881, %v643
      %v1890 = vadd.f32 %v1882, %v644
      %v1891 = vadd.f32 %v1883, %v645
      %v1892 = vadd.f32 %v1884, %v646
      %v1893 = vadd.f32 %v1885, %v647
      %v1894 = vadd.f32 %v1886, %v648
      %v1895 = vadd.f32 %v1887, %v649
      %v1896 = vsel %vm879, %v1888, -inf
      %1897 = vmax.xlane.f32.xlu0 %v1896
      %v1898 = vpop.xlane.xlu0 %1897
      %v1899 = vsel %vm879, %v1889, -inf
      %1900 = vmax.xlane.f32.xlu0 %v1899
      %v1901 = vpop.xlane.xlu0 %1900
      %v1902 = vsel %vm879, %v1890, -inf
      %1903 = vmax.xlane.f32.xlu0 %v1902
      %v1904 = vpop.xlane.xlu0 %1903
      %v1905 = vsel %vm879, %v1891, -inf
      %1906 = vmax.xlane.f32.xlu0 %v1905
      %v1907 = vpop.xlane.xlu0 %1906
      %v1908 = vsel %vm879, %v1892, -inf
      %1909 = vmax.xlane.f32.xlu0 %v1908
      %v1910 = vpop.xlane.xlu0 %1909
      %v1911 = vsel %vm879, %v1893, -inf
      %1912 = vmax.xlane.f32.xlu0 %v1911
      %v1913 = vpop.xlane.xlu0 %1912
      %v1914 = vsel %vm879, %v1894, -inf
      %1915 = vmax.xlane.f32.xlu0 %v1914
      %v1916 = vpop.xlane.xlu0 %1915
      %v1917 = vsel %vm879, %v1895, -inf
      %1918 = vmax.xlane.f32.xlu0 %v1917
      %v1919 = vpop.xlane.xlu0 %1918
      %v1920 = vsub.f32 %v1888, %v1898
      %v1921 = vsub.f32 %v1889, %v1901
      %v1922 = vsub.f32 %v1890, %v1904
      %v1923 = vsub.f32 %v1891, %v1907
      %v1924 = vsub.f32 %v1892, %v1910
      %v1925 = vsub.f32 %v1893, %v1913
      %v1926 = vsub.f32 %v1894, %v1916
      %v1927 = vsub.f32 %v1895, %v1919
      %v1928 = vmul.f32 %v1920, 1.442695
      %v1929 = vpow.pop %v1928
      %v1930 = vmul.f32 %v1921, 1.442695
      %v1931 = vpow.pop %v1930
      %v1932 = vmul.f32 %v1922, 1.442695
      %v1933 = vpow.pop %v1932
      %v1934 = vmul.f32 %v1923, 1.442695
      %v1935 = vpow.pop %v1934
      %v1936 = vmul.f32 %v1924, 1.442695
      %v1937 = vpow.pop %v1936
      %v1938 = vmul.f32 %v1925, 1.442695
      %v1939 = vpow.pop %v1938
      %v1940 = vmul.f32 %v1926, 1.442695
      %v1941 = vpow.pop %v1940
      %v1942 = vmul.f32 %v1927, 1.442695
      %v1943 = vpow.pop %v1942
      %v1944 = vsel %vm879, %v1929, 0.0
      %1945 = vadd.xlane.f32.xlu0 %v1944
      %v1946 = vpop.xlane.xlu0 %1945
      %v1947 = vsel %vm879, %v1931, 0.0
      %1948 = vadd.xlane.f32.xlu0 %v1947
      %v1949 = vpop.xlane.xlu0 %1948
      %v1950 = vsel %vm879, %v1933, 0.0
      %1951 = vadd.xlane.f32.xlu0 %v1950
      %v1952 = vpop.xlane.xlu0 %1951
      %v1953 = vsel %vm879, %v1935, 0.0
      %1954 = vadd.xlane.f32.xlu0 %v1953
      %v1955 = vpop.xlane.xlu0 %1954
      %v1956 = vsel %vm879, %v1937, 0.0
      %1957 = vadd.xlane.f32.xlu0 %v1956
      %v1958 = vpop.xlane.xlu0 %1957
      %v1959 = vsel %vm879, %v1939, 0.0
      %1960 = vadd.xlane.f32.xlu0 %v1959
      %v1961 = vpop.xlane.xlu0 %1960
      %v1962 = vsel %vm879, %v1941, 0.0
      %1963 = vadd.xlane.f32.xlu0 %v1962
      %v1964 = vpop.xlane.xlu0 %1963
      %v1965 = vsel %vm879, %v1943, 0.0
      %1966 = vadd.xlane.f32.xlu0 %v1965
      %v1967 = vpop.xlane.xlu0 %1966
      %v1968 = vrcp.pop %v1946
      %v1969 = vrcp.pop %v1949
      %v1970 = vrcp.pop %v1952
      %v1971 = vrcp.pop %v1955
      %v1972 = vrcp.pop %v1958
      %v1973 = vrcp.pop %v1961
      %v1974 = vrcp.pop %v1964
      %v1975 = vrcp.pop %v1967
      %v1976 = vmul.f32 %v1929, %v1968
      %v1977 = vmul.f32 %v1931, %v1969
      %v1978 = vmul.f32 %v1933, %v1970
      %v1979 = vmul.f32 %v1935, %v1971
      %v1980 = vmul.f32 %v1937, %v1972
      %v1981 = vmul.f32 %v1939, %v1973
      %v1982 = vmul.f32 %v1941, %v1974
      %v1983 = vmul.f32 %v1943, %v1975
      %v1984 = vpack.c.bf16 %v1977, %v1976
      %v1985 = vpack.c.bf16 %v1979, %v1978
      %v1986 = vpack.c.bf16 %v1981, %v1980
      %v1987 = vpack.c.bf16 %v1983, %v1982
      %1988 = vrot.lane.b32.xlu0 %v650, 48
      %v1989 = vpop.permute.xlu0 %1988
      %v1992 = vsel %vm879, %v1984, 0
      %1994 = vmatprep.subr.bf16.mxu0 0
      %1995 = vmatpush1.bf16.msra.mxu0 0
      %1996 = vmatprep.subr.bf16.mxu0 0
      %1997 = vmatpush1.bf16.msra.mxu0 0
      %1998 = vmatprep.subr.bf16.mxu0 0
      %1999 = vmatpush1.bf16.msra.mxu0 0
      %2000 = vmatprep.subr.bf16.mxu0 0
      %2001 = vmatpush1.bf16.msra.mxu0 0
      %2002 = vmatprep.subr.bf16.mxu0 0
      %2003 = vmatpush1.bf16.msra.mxu0 0
      %2004 = vmatprep.subr.bf16.mxu0 0
      %2005 = vmatpush1.bf16.msra.mxu0 0
      %2006 = vmatprep.subr.bf16.mxu0 0
      %2007 = vmatpush1.bf16.msra.mxu0 0
      %2008 = vmatprep.subr.bf16.mxu0 0
      %2009 = vmatpush1.bf16.msra.mxu0 %v1989
      %2010 = vmatprep.subr.bf16.mxu0 0
      %2011 = vmatpush2.bf16.msra.mxu0 0
      %2012 = vmatprep.subr.bf16.mxu0 0
      %2013 = vmatpush2.bf16.msra.mxu0 0
      %2014 = vmatprep.subr.bf16.mxu0 0
      %2015 = vmatpush2.bf16.msra.mxu0 0
      %2016 = vmatprep.subr.bf16.mxu0 0
      %2017 = vmatpush2.bf16.msra.mxu0 0
      %2018 = vmatprep.subr.bf16.mxu0 0
      %2019 = vmatpush2.bf16.msra.mxu0 0
      %2020 = vmatprep.subr.bf16.mxu0 0
      %2021 = vmatpush2.bf16.msra.mxu0 0
      %2022 = vmatprep.subr.bf16.mxu0 0
      %2023 = vmatpush2.bf16.msra.mxu0 0
      %2024 = vmatprep.subr.bf16.mxu0 0
      %2025 = vmatpush2.bf16.msra.mxu0 0
      %2026 = vmatprep.mubr.bf16.mxu0 0
      %2027 = vmatmul.mubr.bf16.gmra.mxu0 %v1992
      %v2028 = vpop.f32.mrf.mxu0
      %v2029 = vadd.f32 0.0, %v2028
      %v2030 = vpop.f32.mrf.mxu0
      %v2031 = vpop.f32.mrf.mxu0
      %v2032 = vadd.f32 0.0, %v2031
      %v2033 = vpop.f32.mrf.mxu0
      %2034 = vdwg.mxu0
      %2035 = vrot.lane.b32.xlu0 %v651, 48
      %v2036 = vpop.permute.xlu0 %2035
      %v2039 = vsel %vm879, %v1985, 0
      %2041 = vmatprep.subr.bf16.mxu0 0
      %2042 = vmatpush1.bf16.msra.mxu0 0
      %2043 = vmatprep.subr.bf16.mxu0 0
      %2044 = vmatpush1.bf16.msra.mxu0 0
      %2045 = vmatprep.subr.bf16.mxu0 0
      %2046 = vmatpush1.bf16.msra.mxu0 0
      %2047 = vmatprep.subr.bf16.mxu0 0
      %2048 = vmatpush1.bf16.msra.mxu0 0
      %2049 = vmatprep.subr.bf16.mxu0 0
      %2050 = vmatpush1.bf16.msra.mxu0 0
      %2051 = vmatprep.subr.bf16.mxu0 0
      %2052 = vmatpush1.bf16.msra.mxu0 0
      %2053 = vmatprep.subr.bf16.mxu0 0
      %2054 = vmatpush1.bf16.msra.mxu0 0
      %2055 = vmatprep.subr.bf16.mxu0 0
      %2056 = vmatpush1.bf16.msra.mxu0 %v2036
      %2057 = vmatprep.subr.bf16.mxu0 0
      %2058 = vmatpush2.bf16.msra.mxu0 0
      %2059 = vmatprep.subr.bf16.mxu0 0
      %2060 = vmatpush2.bf16.msra.mxu0 0
      %2061 = vmatprep.subr.bf16.mxu0 0
      %2062 = vmatpush2.bf16.msra.mxu0 0
      %2063 = vmatprep.subr.bf16.mxu0 0
      %2064 = vmatpush2.bf16.msra.mxu0 0
      %2065 = vmatprep.subr.bf16.mxu0 0
      %2066 = vmatpush2.bf16.msra.mxu0 0
      %2067 = vmatprep.subr.bf16.mxu0 0
      %2068 = vmatpush2.bf16.msra.mxu0 0
      %2069 = vmatprep.subr.bf16.mxu0 0
      %2070 = vmatpush2.bf16.msra.mxu0 0
      %2071 = vmatprep.subr.bf16.mxu0 0
      %2072 = vmatpush2.bf16.msra.mxu0 0
      %2073 = vmatprep.mubr.bf16.mxu0 0
      %2074 = vmatmul.mubr.bf16.gmra.mxu0 %v2039
      %v2075 = vpop.f32.mrf.mxu0
      %v2076 = vadd.f32 0.0, %v2075
      %v2077 = vpop.f32.mrf.mxu0
      %v2078 = vpop.f32.mrf.mxu0
      %v2079 = vadd.f32 0.0, %v2078
      %v2080 = vpop.f32.mrf.mxu0
      %2081 = vdwg.mxu0
      %2082 = vrot.lane.b32.xlu0 %v652, 48
      %v2083 = vpop.permute.xlu0 %2082
      %v2086 = vsel %vm879, %v1986, 0
      %2088 = vmatprep.subr.bf16.mxu0 0
      %2089 = vmatpush1.bf16.msra.mxu0 0
      %2090 = vmatprep.subr.bf16.mxu0 0
      %2091 = vmatpush1.bf16.msra.mxu0 0
      %2092 = vmatprep.subr.bf16.mxu0 0
      %2093 = vmatpush1.bf16.msra.mxu0 0
      %2094 = vmatprep.subr.bf16.mxu0 0
      %2095 = vmatpush1.bf16.msra.mxu0 0
      %2096 = vmatprep.subr.bf16.mxu0 0
      %2097 = vmatpush1.bf16.msra.mxu0 0
      %2098 = vmatprep.subr.bf16.mxu0 0
      %2099 = vmatpush1.bf16.msra.mxu0 0
      %2100 = vmatprep.subr.bf16.mxu0 0
      %2101 = vmatpush1.bf16.msra.mxu0 0
      %2102 = vmatprep.subr.bf16.mxu0 0
      %2103 = vmatpush1.bf16.msra.mxu0 %v2083
      %2104 = vmatprep.subr.bf16.mxu0 0
      %2105 = vmatpush2.bf16.msra.mxu0 0
      %2106 = vmatprep.subr.bf16.mxu0 0
      %2107 = vmatpush2.bf16.msra.mxu0 0
      %2108 = vmatprep.subr.bf16.mxu0 0
      %2109 = vmatpush2.bf16.msra.mxu0 0
      %2110 = vmatprep.subr.bf16.mxu0 0
      %2111 = vmatpush2.bf16.msra.mxu0 0
      %2112 = vmatprep.subr.bf16.mxu0 0
      %2113 = vmatpush2.bf16.msra.mxu0 0
      %2114 = vmatprep.subr.bf16.mxu0 0
      %2115 = vmatpush2.bf16.msra.mxu0 0
      %2116 = vmatprep.subr.bf16.mxu0 0
      %2117 = vmatpush2.bf16.msra.mxu0 0
      %2118 = vmatprep.subr.bf16.mxu0 0
      %2119 = vmatpush2.bf16.msra.mxu0 0
      %2120 = vmatprep.mubr.bf16.mxu0 0
      %2121 = vmatmul.mubr.bf16.gmra.mxu0 %v2086
      %v2122 = vpop.f32.mrf.mxu0
      %v2123 = vadd.f32 0.0, %v2122
      %v2124 = vpop.f32.mrf.mxu0
      %v2125 = vpop.f32.mrf.mxu0
      %v2126 = vadd.f32 0.0, %v2125
      %v2127 = vpop.f32.mrf.mxu0
      %2128 = vdwg.mxu0
      %2129 = vrot.lane.b32.xlu0 %v653, 48
      %v2130 = vpop.permute.xlu0 %2129
      %v2133 = vsel %vm879, %v1987, 0
      %2135 = vmatprep.subr.bf16.mxu0 0
      %2136 = vmatpush1.bf16.msra.mxu0 0
      %2137 = vmatprep.subr.bf16.mxu0 0
      %2138 = vmatpush1.bf16.msra.mxu0 0
      %2139 = vmatprep.subr.bf16.mxu0 0
      %2140 = vmatpush1.bf16.msra.mxu0 0
      %2141 = vmatprep.subr.bf16.mxu0 0
      %2142 = vmatpush1.bf16.msra.mxu0 0
      %2143 = vmatprep.subr.bf16.mxu0 0
      %2144 = vmatpush1.bf16.msra.mxu0 0
      %2145 = vmatprep.subr.bf16.mxu0 0
      %2146 = vmatpush1.bf16.msra.mxu0 0
      %2147 = vmatprep.subr.bf16.mxu0 0
      %2148 = vmatpush1.bf16.msra.mxu0 0
      %2149 = vmatprep.subr.bf16.mxu0 0
      %2150 = vmatpush1.bf16.msra.mxu0 %v2130
      %2151 = vmatprep.subr.bf16.mxu0 0
      %2152 = vmatpush2.bf16.msra.mxu0 0
      %2153 = vmatprep.subr.bf16.mxu0 0
      %2154 = vmatpush2.bf16.msra.mxu0 0
      %2155 = vmatprep.subr.bf16.mxu0 0
      %2156 = vmatpush2.bf16.msra.mxu0 0
      %2157 = vmatprep.subr.bf16.mxu0 0
      %2158 = vmatpush2.bf16.msra.mxu0 0
      %2159 = vmatprep.subr.bf16.mxu0 0
      %2160 = vmatpush2.bf16.msra.mxu0 0
      %2161 = vmatprep.subr.bf16.mxu0 0
      %2162 = vmatpush2.bf16.msra.mxu0 0
      %2163 = vmatprep.subr.bf16.mxu0 0
      %2164 = vmatpush2.bf16.msra.mxu0 0
      %2165 = vmatprep.subr.bf16.mxu0 0
      %2166 = vmatpush2.bf16.msra.mxu0 0
      %2167 = vmatprep.mubr.bf16.mxu0 0
      %2168 = vmatmul.mubr.bf16.gmra.mxu0 %v2133
      %v2169 = vpop.f32.mrf.mxu0
      %v2170 = vadd.f32 0.0, %v2169
      %v2171 = vpop.f32.mrf.mxu0
      %v2172 = vpop.f32.mrf.mxu0
      %v2173 = vadd.f32 0.0, %v2172
      %v2174 = vpop.f32.mrf.mxu0
      %2175 = vdwg.mxu0
      %2176 = vrot.lane.b32.xlu0 %v650, 104
      %v2177 = vpop.permute.xlu0 %2176
      %2178 = vrot.lane.b32.xlu0 %v650, 72
      %v2179 = vpop.permute.xlu0 %2178
      %v2181 = vsel %vm657, %v2177, 0
      %v2184 = vsel %vm657, %v2179, 0
      %2186 = vmatprep.subr.bf16.mxu0 0
      %2187 = vmatpush1.bf16.xpose.msra.mxu0 0
      %2188 = vmatprep.subr.bf16.mxu0 0
      %2189 = vmatpush1.bf16.xpose.msra.mxu0 0
      %2190 = vmatprep.subr.bf16.mxu0 0
      %2191 = vmatpush1.bf16.xpose.msra.mxu0 0
      %2192 = vmatprep.subr.bf16.mxu0 0
      %2193 = vmatpush1.bf16.xpose.msra.mxu0 0
      %2194 = vmatprep.subr.bf16.mxu0 0
      %2195 = vmatpush1.bf16.xpose.msra.mxu0 0
      %2196 = vmatprep.subr.bf16.mxu0 0
      %2197 = vmatpush1.bf16.xpose.msra.mxu0 0
      %2198 = vmatprep.subr.bf16.mxu0 0
      %2199 = vmatpush1.bf16.xpose.msra.mxu0 0
      %2200 = vmatprep.subr.bf16.mxu0 0
      %2201 = vmatpush1.bf16.xpose.msra.mxu0 %v2184
      %2202 = vmatprep.subr.bf16.mxu0 0
      %2203 = vmatpush2.bf16.xpose.msra.mxu0 0
      %2204 = vmatprep.subr.bf16.mxu0 0
      %2205 = vmatpush2.bf16.xpose.msra.mxu0 0
      %2206 = vmatprep.subr.bf16.mxu0 0
      %2207 = vmatpush2.bf16.xpose.msra.mxu0 0
      %2208 = vmatprep.subr.bf16.mxu0 0
      %2209 = vmatpush2.bf16.xpose.msra.mxu0 0
      %2210 = vmatprep.subr.bf16.mxu0 0
      %2211 = vmatpush2.bf16.xpose.msra.mxu0 0
      %2212 = vmatprep.subr.bf16.mxu0 0
      %2213 = vmatpush2.bf16.xpose.msra.mxu0 0
      %2214 = vmatprep.subr.bf16.mxu0 0
      %2215 = vmatpush2.bf16.xpose.msra.mxu0 0
      %2216 = vmatprep.subr.bf16.mxu0 0
      %2217 = vmatpush2.bf16.xpose.msra.mxu0 0
      %2218 = vmatprep.mubr.bf16.mxu0 0
      %2219 = vmatmul.mubr.bf16.gmra.mxu0 %v2181
      %v2220 = vpop.f32.mrf.mxu0
      %v2221 = vadd.f32 0.0, %v2220
      %v2222 = vpop.f32.mrf.mxu0
      %v2223 = vpop.f32.mrf.mxu0
      %v2224 = vadd.f32 0.0, %v2223
      %v2225 = vpop.f32.mrf.mxu0
      %2226 = vdwg.mxu0
      %2227 = vrot.lane.b32.xlu0 %v651, 104
      %v2228 = vpop.permute.xlu0 %2227
      %2229 = vrot.lane.b32.xlu0 %v651, 72
      %v2230 = vpop.permute.xlu0 %2229
      %v2232 = vsel %vm657, %v2228, 0
      %v2235 = vsel %vm657, %v2230, 0
      %2237 = vmatprep.subr.bf16.mxu0 0
      %2238 = vmatpush1.bf16.xpose.msra.mxu0 0
      %2239 = vmatprep.subr.bf16.mxu0 0
      %2240 = vmatpush1.bf16.xpose.msra.mxu0 0
      %2241 = vmatprep.subr.bf16.mxu0 0
      %2242 = vmatpush1.bf16.xpose.msra.mxu0 0
      %2243 = vmatprep.subr.bf16.mxu0 0
      %2244 = vmatpush1.bf16.xpose.msra.mxu0 0
      %2245 = vmatprep.subr.bf16.mxu0 0
      %2246 = vmatpush1.bf16.xpose.msra.mxu0 0
      %2247 = vmatprep.subr.bf16.mxu0 0
      %2248 = vmatpush1.bf16.xpose.msra.mxu0 0
      %2249 = vmatprep.subr.bf16.mxu0 0
      %2250 = vmatpush1.bf16.xpose.msra.mxu0 0
      %2251 = vmatprep.subr.bf16.mxu0 0
      %2252 = vmatpush1.bf16.xpose.msra.mxu0 %v2235
      %2253 = vmatprep.subr.bf16.mxu0 0
      %2254 = vmatpush2.bf16.xpose.msra.mxu0 0
      %2255 = vmatprep.subr.bf16.mxu0 0
      %2256 = vmatpush2.bf16.xpose.msra.mxu0 0
      %2257 = vmatprep.subr.bf16.mxu0 0
      %2258 = vmatpush2.bf16.xpose.msra.mxu0 0
      %2259 = vmatprep.subr.bf16.mxu0 0
      %2260 = vmatpush2.bf16.xpose.msra.mxu0 0
      %2261 = vmatprep.subr.bf16.mxu0 0
      %2262 = vmatpush2.bf16.xpose.msra.mxu0 0
      %2263 = vmatprep.subr.bf16.mxu0 0
      %2264 = vmatpush2.bf16.xpose.msra.mxu0 0
      %2265 = vmatprep.subr.bf16.mxu0 0
      %2266 = vmatpush2.bf16.xpose.msra.mxu0 0
      %2267 = vmatprep.subr.bf16.mxu0 0
      %2268 = vmatpush2.bf16.xpose.msra.mxu0 0
      %2269 = vmatprep.mubr.bf16.mxu0 0
      %2270 = vmatmul.mubr.bf16.gmra.mxu0 %v2232
      %v2271 = vpop.f32.mrf.mxu0
      %v2272 = vadd.f32 0.0, %v2271
      %v2273 = vpop.f32.mrf.mxu0
      %v2274 = vpop.f32.mrf.mxu0
      %v2275 = vadd.f32 0.0, %v2274
      %v2276 = vpop.f32.mrf.mxu0
      %2277 = vdwg.mxu0
      %2278 = vrot.lane.b32.xlu0 %v652, 104
      %v2279 = vpop.permute.xlu0 %2278
      %2280 = vrot.lane.b32.xlu0 %v652, 72
      %v2281 = vpop.permute.xlu0 %2280
      %v2283 = vsel %vm657, %v2279, 0
      %v2286 = vsel %vm657, %v2281, 0
      %2288 = vmatprep.subr.bf16.mxu0 0
      %2289 = vmatpush1.bf16.xpose.msra.mxu0 0
      %2290 = vmatprep.subr.bf16.mxu0 0
      %2291 = vmatpush1.bf16.xpose.msra.mxu0 0
      %2292 = vmatprep.subr.bf16.mxu0 0
      %2293 = vmatpush1.bf16.xpose.msra.mxu0 0
      %2294 = vmatprep.subr.bf16.mxu0 0
      %2295 = vmatpush1.bf16.xpose.msra.mxu0 0
      %2296 = vmatprep.subr.bf16.mxu0 0
      %2297 = vmatpush1.bf16.xpose.msra.mxu0 0
      %2298 = vmatprep.subr.bf16.mxu0 0
      %2299 = vmatpush1.bf16.xpose.msra.mxu0 0
      %2300 = vmatprep.subr.bf16.mxu0 0
      %2301 = vmatpush1.bf16.xpose.msra.mxu0 0
      %2302 = vmatprep.subr.bf16.mxu0 0
      %2303 = vmatpush1.bf16.xpose.msra.mxu0 %v2286
      %2304 = vmatprep.subr.bf16.mxu0 0
      %2305 = vmatpush2.bf16.xpose.msra.mxu0 0
      %2306 = vmatprep.subr.bf16.mxu0 0
      %2307 = vmatpush2.bf16.xpose.msra.mxu0 0
      %2308 = vmatprep.subr.bf16.mxu0 0
      %2309 = vmatpush2.bf16.xpose.msra.mxu0 0
      %2310 = vmatprep.subr.bf16.mxu0 0
      %2311 = vmatpush2.bf16.xpose.msra.mxu0 0
      %2312 = vmatprep.subr.bf16.mxu0 0
      %2313 = vmatpush2.bf16.xpose.msra.mxu0 0
      %2314 = vmatprep.subr.bf16.mxu0 0
      %2315 = vmatpush2.bf16.xpose.msra.mxu0 0
      %2316 = vmatprep.subr.bf16.mxu0 0
      %2317 = vmatpush2.bf16.xpose.msra.mxu0 0
      %2318 = vmatprep.subr.bf16.mxu0 0
      %2319 = vmatpush2.bf16.xpose.msra.mxu0 0
      %2320 = vmatprep.mubr.bf16.mxu0 0
      %2321 = vmatmul.mubr.bf16.gmra.mxu0 %v2283
      %v2322 = vpop.f32.mrf.mxu0
      %v2323 = vadd.f32 0.0, %v2322
      %v2324 = vpop.f32.mrf.mxu0
      %v2325 = vpop.f32.mrf.mxu0
      %v2326 = vadd.f32 0.0, %v2325
      %v2327 = vpop.f32.mrf.mxu0
      %2328 = vdwg.mxu0
      %2329 = vrot.lane.b32.xlu0 %v653, 104
      %v2330 = vpop.permute.xlu0 %2329
      %2331 = vrot.lane.b32.xlu0 %v653, 72
      %v2332 = vpop.permute.xlu0 %2331
      %v2334 = vsel %vm657, %v2330, 0
      %v2337 = vsel %vm657, %v2332, 0
      %2339 = vmatprep.subr.bf16.mxu0 0
      %2340 = vmatpush1.bf16.xpose.msra.mxu0 0
      %2341 = vmatprep.subr.bf16.mxu0 0
      %2342 = vmatpush1.bf16.xpose.msra.mxu0 0
      %2343 = vmatprep.subr.bf16.mxu0 0
      %2344 = vmatpush1.bf16.xpose.msra.mxu0 0
      %2345 = vmatprep.subr.bf16.mxu0 0
      %2346 = vmatpush1.bf16.xpose.msra.mxu0 0
      %2347 = vmatprep.subr.bf16.mxu0 0
      %2348 = vmatpush1.bf16.xpose.msra.mxu0 0
      %2349 = vmatprep.subr.bf16.mxu0 0
      %2350 = vmatpush1.bf16.xpose.msra.mxu0 0
      %2351 = vmatprep.subr.bf16.mxu0 0
      %2352 = vmatpush1.bf16.xpose.msra.mxu0 0
      %2353 = vmatprep.subr.bf16.mxu0 0
      %2354 = vmatpush1.bf16.xpose.msra.mxu0 %v2337
      %2355 = vmatprep.subr.bf16.mxu0 0
      %2356 = vmatpush2.bf16.xpose.msra.mxu0 0
      %2357 = vmatprep.subr.bf16.mxu0 0
      %2358 = vmatpush2.bf16.xpose.msra.mxu0 0
      %2359 = vmatprep.subr.bf16.mxu0 0
      %2360 = vmatpush2.bf16.xpose.msra.mxu0 0
      %2361 = vmatprep.subr.bf16.mxu0 0
      %2362 = vmatpush2.bf16.xpose.msra.mxu0 0
      %2363 = vmatprep.subr.bf16.mxu0 0
      %2364 = vmatpush2.bf16.xpose.msra.mxu0 0
      %2365 = vmatprep.subr.bf16.mxu0 0
      %2366 = vmatpush2.bf16.xpose.msra.mxu0 0
      %2367 = vmatprep.subr.bf16.mxu0 0
      %2368 = vmatpush2.bf16.xpose.msra.mxu0 0
      %2369 = vmatprep.subr.bf16.mxu0 0
      %2370 = vmatpush2.bf16.xpose.msra.mxu0 0
      %2371 = vmatprep.mubr.bf16.mxu0 0
      %2372 = vmatmul.mubr.bf16.gmra.mxu0 %v2334
      %v2373 = vpop.f32.mrf.mxu0
      %v2374 = vadd.f32 0.0, %v2373
      %v2375 = vpop.f32.mrf.mxu0
      %v2376 = vpop.f32.mrf.mxu0
      %v2377 = vadd.f32 0.0, %v2376
      %v2378 = vpop.f32.mrf.mxu0
      %2379 = vdwg.mxu0
      %v2380 = vmul.f32 %v2221, 0.35355338
      %v2381 = vmul.f32 %v2224, 0.35355338
      %v2382 = vmul.f32 %v2272, 0.35355338
      %v2383 = vmul.f32 %v2275, 0.35355338
      %v2384 = vmul.f32 %v2323, 0.35355338
      %v2385 = vmul.f32 %v2326, 0.35355338
      %v2386 = vmul.f32 %v2374, 0.35355338
      %v2387 = vmul.f32 %v2377, 0.35355338
      %v2388 = vadd.f32 %v2380, %v640
      %v2389 = vadd.f32 %v2381, %v641
      %v2390 = vadd.f32 %v2382, %v640
      %v2391 = vadd.f32 %v2383, %v641
      %v2392 = vadd.f32 %v2384, %v640
      %v2393 = vadd.f32 %v2385, %v641
      %v2394 = vadd.f32 %v2386, %v640
      %v2395 = vadd.f32 %v2387, %v641
      %v2396 = vadd.f32 %v2388, %v642
      %v2397 = vadd.f32 %v2389, %v643
      %v2398 = vadd.f32 %v2390, %v644
      %v2399 = vadd.f32 %v2391, %v645
      %v2400 = vadd.f32 %v2392, %v646
      %v2401 = vadd.f32 %v2393, %v647
      %v2402 = vadd.f32 %v2394, %v648
      %v2403 = vadd.f32 %v2395, %v649
      %v2404 = vsel %vm879, %v2396, -inf
      %2405 = vmax.xlane.f32.xlu0 %v2404
      %v2406 = vpop.xlane.xlu0 %2405
      %v2407 = vsel %vm879, %v2397, -inf
      %2408 = vmax.xlane.f32.xlu0 %v2407
      %v2409 = vpop.xlane.xlu0 %2408
      %v2410 = vsel %vm879, %v2398, -inf
      %2411 = vmax.xlane.f32.xlu0 %v2410
      %v2412 = vpop.xlane.xlu0 %2411
      %v2413 = vsel %vm879, %v2399, -inf
      %2414 = vmax.xlane.f32.xlu0 %v2413
      %v2415 = vpop.xlane.xlu0 %2414
      %v2416 = vsel %vm879, %v2400, -inf
      %2417 = vmax.xlane.f32.xlu0 %v2416
      %v2418 = vpop.xlane.xlu0 %2417
      %v2419 = vsel %vm879, %v2401, -inf
      %2420 = vmax.xlane.f32.xlu0 %v2419
      %v2421 = vpop.xlane.xlu0 %2420
      %v2422 = vsel %vm879, %v2402, -inf
      %2423 = vmax.xlane.f32.xlu0 %v2422
      %v2424 = vpop.xlane.xlu0 %2423
      %v2425 = vsel %vm879, %v2403, -inf
      %2426 = vmax.xlane.f32.xlu0 %v2425
      %v2427 = vpop.xlane.xlu0 %2426
      %v2428 = vsub.f32 %v2396, %v2406
      %v2429 = vsub.f32 %v2397, %v2409
      %v2430 = vsub.f32 %v2398, %v2412
      %v2431 = vsub.f32 %v2399, %v2415
      %v2432 = vsub.f32 %v2400, %v2418
      %v2433 = vsub.f32 %v2401, %v2421
      %v2434 = vsub.f32 %v2402, %v2424
      %v2435 = vsub.f32 %v2403, %v2427
      %v2436 = vmul.f32 %v2428, 1.442695
      %v2437 = vpow.pop %v2436
      %v2438 = vmul.f32 %v2429, 1.442695
      %v2439 = vpow.pop %v2438
      %v2440 = vmul.f32 %v2430, 1.442695
      %v2441 = vpow.pop %v2440
      %v2442 = vmul.f32 %v2431, 1.442695
      %v2443 = vpow.pop %v2442
      %v2444 = vmul.f32 %v2432, 1.442695
      %v2445 = vpow.pop %v2444
      %v2446 = vmul.f32 %v2433, 1.442695
      %v2447 = vpow.pop %v2446
      %v2448 = vmul.f32 %v2434, 1.442695
      %v2449 = vpow.pop %v2448
      %v2450 = vmul.f32 %v2435, 1.442695
      %v2451 = vpow.pop %v2450
      %v2452 = vsel %vm879, %v2437, 0.0
      %2453 = vadd.xlane.f32.xlu0 %v2452
      %v2454 = vpop.xlane.xlu0 %2453
      %v2455 = vsel %vm879, %v2439, 0.0
      %2456 = vadd.xlane.f32.xlu0 %v2455
      %v2457 = vpop.xlane.xlu0 %2456
      %v2458 = vsel %vm879, %v2441, 0.0
      %2459 = vadd.xlane.f32.xlu0 %v2458
      %v2460 = vpop.xlane.xlu0 %2459
      %v2461 = vsel %vm879, %v2443, 0.0
      %2462 = vadd.xlane.f32.xlu0 %v2461
      %v2463 = vpop.xlane.xlu0 %2462
      %v2464 = vsel %vm879, %v2445, 0.0
      %2465 = vadd.xlane.f32.xlu0 %v2464
      %v2466 = vpop.xlane.xlu0 %2465
      %v2467 = vsel %vm879, %v2447, 0.0
      %2468 = vadd.xlane.f32.xlu0 %v2467
      %v2469 = vpop.xlane.xlu0 %2468
      %v2470 = vsel %vm879, %v2449, 0.0
      %2471 = vadd.xlane.f32.xlu0 %v2470
      %v2472 = vpop.xlane.xlu0 %2471
      %v2473 = vsel %vm879, %v2451, 0.0
      %2474 = vadd.xlane.f32.xlu0 %v2473
      %v2475 = vpop.xlane.xlu0 %2474
      %v2476 = vrcp.pop %v2454
      %v2477 = vrcp.pop %v2457
      %v2478 = vrcp.pop %v2460
      %v2479 = vrcp.pop %v2463
      %v2480 = vrcp.pop %v2466
      %v2481 = vrcp.pop %v2469
      %v2482 = vrcp.pop %v2472
      %v2483 = vrcp.pop %v2475
      %v2484 = vmul.f32 %v2437, %v2476
      %v2485 = vmul.f32 %v2439, %v2477
      %v2486 = vmul.f32 %v2441, %v2478
      %v2487 = vmul.f32 %v2443, %v2479
      %v2488 = vmul.f32 %v2445, %v2480
      %v2489 = vmul.f32 %v2447, %v2481
      %v2490 = vmul.f32 %v2449, %v2482
      %v2491 = vmul.f32 %v2451, %v2483
      %v2492 = vpack.c.bf16 %v2485, %v2484
      %v2493 = vpack.c.bf16 %v2487, %v2486
      %v2494 = vpack.c.bf16 %v2489, %v2488
      %v2495 = vpack.c.bf16 %v2491, %v2490
      %2496 = vrot.lane.b32.xlu0 %v650, 40
      %v2497 = vpop.permute.xlu0 %2496
      %v2500 = vsel %vm879, %v2492, 0
      %2502 = vmatprep.subr.bf16.mxu0 0
      %2503 = vmatpush1.bf16.msra.mxu0 0
      %2504 = vmatprep.subr.bf16.mxu0 0
      %2505 = vmatpush1.bf16.msra.mxu0 0
      %2506 = vmatprep.subr.bf16.mxu0 0
      %2507 = vmatpush1.bf16.msra.mxu0 0
      %2508 = vmatprep.subr.bf16.mxu0 0
      %2509 = vmatpush1.bf16.msra.mxu0 0
      %2510 = vmatprep.subr.bf16.mxu0 0
      %2511 = vmatpush1.bf16.msra.mxu0 0
      %2512 = vmatprep.subr.bf16.mxu0 0
      %2513 = vmatpush1.bf16.msra.mxu0 0
      %2514 = vmatprep.subr.bf16.mxu0 0
      %2515 = vmatpush1.bf16.msra.mxu0 0
      %2516 = vmatprep.subr.bf16.mxu0 0
      %2517 = vmatpush1.bf16.msra.mxu0 %v2497
      %2518 = vmatprep.subr.bf16.mxu0 0
      %2519 = vmatpush2.bf16.msra.mxu0 0
      %2520 = vmatprep.subr.bf16.mxu0 0
      %2521 = vmatpush2.bf16.msra.mxu0 0
      %2522 = vmatprep.subr.bf16.mxu0 0
      %2523 = vmatpush2.bf16.msra.mxu0 0
      %2524 = vmatprep.subr.bf16.mxu0 0
      %2525 = vmatpush2.bf16.msra.mxu0 0
      %2526 = vmatprep.subr.bf16.mxu0 0
      %2527 = vmatpush2.bf16.msra.mxu0 0
      %2528 = vmatprep.subr.bf16.mxu0 0
      %2529 = vmatpush2.bf16.msra.mxu0 0
      %2530 = vmatprep.subr.bf16.mxu0 0
      %2531 = vmatpush2.bf16.msra.mxu0 0
      %2532 = vmatprep.subr.bf16.mxu0 0
      %2533 = vmatpush2.bf16.msra.mxu0 0
      %2534 = vmatprep.mubr.bf16.mxu0 0
      %2535 = vmatmul.mubr.bf16.gmra.mxu0 %v2500
      %v2536 = vpop.f32.mrf.mxu0
      %v2537 = vadd.f32 0.0, %v2536
      %v2538 = vpop.f32.mrf.mxu0
      %v2539 = vpop.f32.mrf.mxu0
      %v2540 = vadd.f32 0.0, %v2539
      %v2541 = vpop.f32.mrf.mxu0
      %2542 = vdwg.mxu0
      %2543 = vrot.lane.b32.xlu0 %v651, 40
      %v2544 = vpop.permute.xlu0 %2543
      %v2547 = vsel %vm879, %v2493, 0
      %2549 = vmatprep.subr.bf16.mxu0 0
      %2550 = vmatpush1.bf16.msra.mxu0 0
      %2551 = vmatprep.subr.bf16.mxu0 0
      %2552 = vmatpush1.bf16.msra.mxu0 0
      %2553 = vmatprep.subr.bf16.mxu0 0
      %2554 = vmatpush1.bf16.msra.mxu0 0
      %2555 = vmatprep.subr.bf16.mxu0 0
      %2556 = vmatpush1.bf16.msra.mxu0 0
      %2557 = vmatprep.subr.bf16.mxu0 0
      %2558 = vmatpush1.bf16.msra.mxu0 0
      %2559 = vmatprep.subr.bf16.mxu0 0
      %2560 = vmatpush1.bf16.msra.mxu0 0
      %2561 = vmatprep.subr.bf16.mxu0 0
      %2562 = vmatpush1.bf16.msra.mxu0 0
      %2563 = vmatprep.subr.bf16.mxu0 0
      %2564 = vmatpush1.bf16.msra.mxu0 %v2544
      %2565 = vmatprep.subr.bf16.mxu0 0
      %2566 = vmatpush2.bf16.msra.mxu0 0
      %2567 = vmatprep.subr.bf16.mxu0 0
      %2568 = vmatpush2.bf16.msra.mxu0 0
      %2569 = vmatprep.subr.bf16.mxu0 0
      %2570 = vmatpush2.bf16.msra.mxu0 0
      %2571 = vmatprep.subr.bf16.mxu0 0
      %2572 = vmatpush2.bf16.msra.mxu0 0
      %2573 = vmatprep.subr.bf16.mxu0 0
      %2574 = vmatpush2.bf16.msra.mxu0 0
      %2575 = vmatprep.subr.bf16.mxu0 0
      %2576 = vmatpush2.bf16.msra.mxu0 0
      %2577 = vmatprep.subr.bf16.mxu0 0
      %2578 = vmatpush2.bf16.msra.mxu0 0
      %2579 = vmatprep.subr.bf16.mxu0 0
      %2580 = vmatpush2.bf16.msra.mxu0 0
      %2581 = vmatprep.mubr.bf16.mxu0 0
      %2582 = vmatmul.mubr.bf16.gmra.mxu0 %v2547
      %v2583 = vpop.f32.mrf.mxu0
      %v2584 = vadd.f32 0.0, %v2583
      %v2585 = vpop.f32.mrf.mxu0
      %v2586 = vpop.f32.mrf.mxu0
      %v2587 = vadd.f32 0.0, %v2586
      %v2588 = vpop.f32.mrf.mxu0
      %2589 = vdwg.mxu0
      %2590 = vrot.lane.b32.xlu0 %v652, 40
      %v2591 = vpop.permute.xlu0 %2590
      %v2594 = vsel %vm879, %v2494, 0
      %2596 = vmatprep.subr.bf16.mxu0 0
      %2597 = vmatpush1.bf16.msra.mxu0 0
      %2598 = vmatprep.subr.bf16.mxu0 0
      %2599 = vmatpush1.bf16.msra.mxu0 0
      %2600 = vmatprep.subr.bf16.mxu0 0
      %2601 = vmatpush1.bf16.msra.mxu0 0
      %2602 = vmatprep.subr.bf16.mxu0 0
      %2603 = vmatpush1.bf16.msra.mxu0 0
      %2604 = vmatprep.subr.bf16.mxu0 0
      %2605 = vmatpush1.bf16.msra.mxu0 0
      %2606 = vmatprep.subr.bf16.mxu0 0
      %2607 = vmatpush1.bf16.msra.mxu0 0
      %2608 = vmatprep.subr.bf16.mxu0 0
      %2609 = vmatpush1.bf16.msra.mxu0 0
      %2610 = vmatprep.subr.bf16.mxu0 0
      %2611 = vmatpush1.bf16.msra.mxu0 %v2591
      %2612 = vmatprep.subr.bf16.mxu0 0
      %2613 = vmatpush2.bf16.msra.mxu0 0
      %2614 = vmatprep.subr.bf16.mxu0 0
      %2615 = vmatpush2.bf16.msra.mxu0 0
      %2616 = vmatprep.subr.bf16.mxu0 0
      %2617 = vmatpush2.bf16.msra.mxu0 0
      %2618 = vmatprep.subr.bf16.mxu0 0
      %2619 = vmatpush2.bf16.msra.mxu0 0
      %2620 = vmatprep.subr.bf16.mxu0 0
      %2621 = vmatpush2.bf16.msra.mxu0 0
      %2622 = vmatprep.subr.bf16.mxu0 0
      %2623 = vmatpush2.bf16.msra.mxu0 0
      %2624 = vmatprep.subr.bf16.mxu0 0
      %2625 = vmatpush2.bf16.msra.mxu0 0
      %2626 = vmatprep.subr.bf16.mxu0 0
      %2627 = vmatpush2.bf16.msra.mxu0 0
      %2628 = vmatprep.mubr.bf16.mxu0 0
      %2629 = vmatmul.mubr.bf16.gmra.mxu0 %v2594
      %v2630 = vpop.f32.mrf.mxu0
      %v2631 = vadd.f32 0.0, %v2630
      %v2632 = vpop.f32.mrf.mxu0
      %v2633 = vpop.f32.mrf.mxu0
      %v2634 = vadd.f32 0.0, %v2633
      %v2635 = vpop.f32.mrf.mxu0
      %2636 = vdwg.mxu0
      %2637 = vrot.lane.b32.xlu0 %v653, 40
      %v2638 = vpop.permute.xlu0 %2637
      %v2641 = vsel %vm879, %v2495, 0
      %2643 = vmatprep.subr.bf16.mxu0 0
      %2644 = vmatpush1.bf16.msra.mxu0 0
      %2645 = vmatprep.subr.bf16.mxu0 0
      %2646 = vmatpush1.bf16.msra.mxu0 0
      %2647 = vmatprep.subr.bf16.mxu0 0
      %2648 = vmatpush1.bf16.msra.mxu0 0
      %2649 = vmatprep.subr.bf16.mxu0 0
      %2650 = vmatpush1.bf16.msra.mxu0 0
      %2651 = vmatprep.subr.bf16.mxu0 0
      %2652 = vmatpush1.bf16.msra.mxu0 0
      %2653 = vmatprep.subr.bf16.mxu0 0
      %2654 = vmatpush1.bf16.msra.mxu0 0
      %2655 = vmatprep.subr.bf16.mxu0 0
      %2656 = vmatpush1.bf16.msra.mxu0 0
      %2657 = vmatprep.subr.bf16.mxu0 0
      %2658 = vmatpush1.bf16.msra.mxu0 %v2638
      %2659 = vmatprep.subr.bf16.mxu0 0
      %2660 = vmatpush2.bf16.msra.mxu0 0
      %2661 = vmatprep.subr.bf16.mxu0 0
      %2662 = vmatpush2.bf16.msra.mxu0 0
      %2663 = vmatprep.subr.bf16.mxu0 0
      %2664 = vmatpush2.bf16.msra.mxu0 0
      %2665 = vmatprep.subr.bf16.mxu0 0
      %2666 = vmatpush2.bf16.msra.mxu0 0
      %2667 = vmatprep.subr.bf16.mxu0 0
      %2668 = vmatpush2.bf16.msra.mxu0 0
      %2669 = vmatprep.subr.bf16.mxu0 0
      %2670 = vmatpush2.bf16.msra.mxu0 0
      %2671 = vmatprep.subr.bf16.mxu0 0
      %2672 = vmatpush2.bf16.msra.mxu0 0
      %2673 = vmatprep.subr.bf16.mxu0 0
      %2674 = vmatpush2.bf16.msra.mxu0 0
      %2675 = vmatprep.mubr.bf16.mxu0 0
      %2676 = vmatmul.mubr.bf16.gmra.mxu0 %v2641
      %v2677 = vpop.f32.mrf.mxu0
      %v2678 = vadd.f32 0.0, %v2677
      %v2679 = vpop.f32.mrf.mxu0
      %v2680 = vpop.f32.mrf.mxu0
      %v2681 = vadd.f32 0.0, %v2680
      %v2682 = vpop.f32.mrf.mxu0
      %2683 = vdwg.mxu0
      %2692 = vrot.lane.b32.xlu0 %v1521, 8
      %v2693 = vpop.permute.xlu0 %2692
      %2694 = vrot.lane.b32.xlu0 %v1524, 8
      %v2695 = vpop.permute.xlu0 %2694
      %2696 = vrot.lane.b32.xlu0 %v1568, 8
      %v2697 = vpop.permute.xlu0 %2696
      %2698 = vrot.lane.b32.xlu0 %v1571, 8
      %v2699 = vpop.permute.xlu0 %2698
      %2700 = vrot.lane.b32.xlu0 %v1615, 8
      %v2701 = vpop.permute.xlu0 %2700
      %2702 = vrot.lane.b32.xlu0 %v1618, 8
      %v2703 = vpop.permute.xlu0 %2702
      %2704 = vrot.lane.b32.xlu0 %v1662, 8
      %v2705 = vpop.permute.xlu0 %2704
      %2706 = vrot.lane.b32.xlu0 %v1665, 8
      %v2707 = vpop.permute.xlu0 %2706
      %2724 = vrot.lane.b32.xlu0 %v2029, 16
      %v2725 = vpop.permute.xlu0 %2724
      %2726 = vrot.lane.b32.xlu0 %v2032, 16
      %v2727 = vpop.permute.xlu0 %2726
      %2728 = vrot.lane.b32.xlu0 %v2076, 16
      %v2729 = vpop.permute.xlu0 %2728
      %2730 = vrot.lane.b32.xlu0 %v2079, 16
      %v2731 = vpop.permute.xlu0 %2730
      %2732 = vrot.lane.b32.xlu0 %v2123, 16
      %v2733 = vpop.permute.xlu0 %2732
      %2734 = vrot.lane.b32.xlu0 %v2126, 16
      %v2735 = vpop.permute.xlu0 %2734
      %2736 = vrot.lane.b32.xlu0 %v2170, 16
      %v2737 = vpop.permute.xlu0 %2736
      %2738 = vrot.lane.b32.xlu0 %v2173, 16
      %v2739 = vpop.permute.xlu0 %2738
      %2756 = vrot.lane.b32.xlu0 %v2537, 24
      %v2757 = vpop.permute.xlu0 %2756
      %2758 = vrot.lane.b32.xlu0 %v2540, 24
      %v2759 = vpop.permute.xlu0 %2758
      %2760 = vrot.lane.b32.xlu0 %v2584, 24
      %v2761 = vpop.permute.xlu0 %2760
      %2762 = vrot.lane.b32.xlu0 %v2587, 24
      %v2763 = vpop.permute.xlu0 %2762
      %2764 = vrot.lane.b32.xlu0 %v2631, 24
      %v2765 = vpop.permute.xlu0 %2764
      %2766 = vrot.lane.b32.xlu0 %v2634, 24
      %v2767 = vpop.permute.xlu0 %2766
      %2768 = vrot.lane.b32.xlu0 %v2678, 24
      %v2769 = vpop.permute.xlu0 %2768
      %2770 = vrot.lane.b32.xlu0 %v2681, 24
      %v2771 = vpop.permute.xlu0 %2770
      %v2780 = vsel %vm657, %v1013, %v2693
      %v2781 = vsel %vm657, %v1016, %v2695
      %v2782 = vsel %vm657, %v1060, %v2697
      %v2783 = vsel %vm657, %v1063, %v2699
      %v2784 = vsel %vm657, %v1107, %v2701
      %v2785 = vsel %vm657, %v1110, %v2703
      %v2786 = vsel %vm657, %v1154, %v2705
      %v2787 = vsel %vm657, %v1157, %v2707
      %v2788 = vsel %vm879, %v2780, %v2725
      %v2789 = vsel %vm879, %v2781, %v2727
      %v2790 = vsel %vm879, %v2782, %v2729
      %v2791 = vsel %vm879, %v2783, %v2731
      %v2792 = vsel %vm879, %v2784, %v2733
      %v2793 = vsel %vm879, %v2785, %v2735
      %v2794 = vsel %vm879, %v2786, %v2737
      %v2795 = vsel %vm879, %v2787, %v2739
      %vm2796 = vcmask 195584
      %v2797 = vsel %vm2796, %v2788, %v2757
      %v2798 = vsel %vm2796, %v2789, %v2759
      %v2799 = vsel %vm2796, %v2790, %v2761
      %v2800 = vsel %vm2796, %v2791, %v2763
      %v2801 = vsel %vm2796, %v2792, %v2765
      %v2802 = vsel %vm2796, %v2793, %v2767
      %v2803 = vsel %vm2796, %v2794, %v2769
      %v2804 = vsel %vm2796, %v2795, %v2771
      %v2805 = vpack.c.bf16 %v2798, %v2797
      %v2806 = vpack.c.bf16 %v2800, %v2799
      %v2807 = vpack.c.bf16 %v2802, %v2801
      %v2808 = vpack.c.bf16 %v2804, %v2803
      %v2809 = vld [vmem:[%s7] sm:$0xf]
      %v2810 = vld [vmem:[%s7 + $0x4] sm:$0xf]
      %v2811 = vld [vmem:[%s7 + $0x8] sm:$0xf]
      %v2812 = vld [vmem:[%s7 + $0xc] sm:$0xf]
      %v2813 = vld [vmem:[%s8] sm:$0x1]
      %v2815 = vlaneseq
      %v2816 = vshrl.u32 %v2815, 7
      %v2817 = vsub.s32 0, %v2816
      %v2818 = vrot.slane %v2813, %v2817
      %v2824 = vunpack.c.l.b16 %v2809
      %v2825 = vunpack.c.l.b16 %v2810
      %v2826 = vunpack.c.l.b16 %v2811
      %v2827 = vunpack.c.l.b16 %v2812
      %v2828 = vpack.c.b16 %v2825, %v2824
      %v2829 = vpack.c.b16 %v2827, %v2826
      %v2833 = vsel %vm396, %v2805, 0
      %v2836 = vsel %vm396, %v2806, 0
      %v2839 = vsel %vm396, %v2807, 0
      %v2842 = vsel %vm396, %v2808, 0
      %2844 = vmatprep.subr.bf16.mxu0 0
      %2845 = vmatpush1.bf16.msra.mxu0 0
      %2846 = vmatprep.subr.bf16.mxu0 0
      %2847 = vmatpush1.bf16.msra.mxu0 0
      %2848 = vmatprep.subr.bf16.mxu0 0
      %2849 = vmatpush1.bf16.msra.mxu0 0
      %2850 = vmatprep.subr.bf16.mxu0 0
      %2851 = vmatpush1.bf16.msra.mxu0 0
      %2852 = vmatprep.subr.bf16.mxu0 0
      %2853 = vmatpush1.bf16.msra.mxu0 0
      %2854 = vmatprep.subr.bf16.mxu0 0
      %2855 = vmatpush1.bf16.msra.mxu0 0
      %2856 = vmatprep.subr.bf16.mxu0 0
      %2857 = vmatpush1.bf16.msra.mxu0 %v2829
      %2858 = vmatprep.subr.bf16.mxu0 0
      %2859 = vmatpush1.bf16.msra.mxu0 %v2828
      %2860 = vmatprep.subr.bf16.mxu0 0
      %2861 = vmatpush2.bf16.msra.mxu0 0
      %2862 = vmatprep.subr.bf16.mxu0 0
      %2863 = vmatpush2.bf16.msra.mxu0 0
      %2864 = vmatprep.subr.bf16.mxu0 0
      %2865 = vmatpush2.bf16.msra.mxu0 0
      %2866 = vmatprep.subr.bf16.mxu0 0
      %2867 = vmatpush2.bf16.msra.mxu0 0
      %2868 = vmatprep.subr.bf16.mxu0 0
      %2869 = vmatpush2.bf16.msra.mxu0 0
      %2870 = vmatprep.subr.bf16.mxu0 0
      %2871 = vmatpush2.bf16.msra.mxu0 0
      %2872 = vmatprep.subr.bf16.mxu0 0
      %2873 = vmatpush2.bf16.msra.mxu0 0
      %2874 = vmatprep.subr.bf16.mxu0 0
      %2875 = vmatpush2.bf16.msra.mxu0 0
      %2876 = vmatprep.mubr.bf16.mxu0 0
      %2877 = vmatmul.mubr.bf16.gmra.mxu0 %v2833
      %v2878 = vpop.f32.mrf.mxu0
      %v2879 = vadd.f32 %v2818, %v2878
      %v2880 = vpop.f32.mrf.mxu0
      %v2881 = vpop.f32.mrf.mxu0
      %v2882 = vadd.f32 %v2818, %v2881
      %v2883 = vpop.f32.mrf.mxu0
      %2884 = vmatprep.mubr.bf16.mxu0 0
      %2885 = vmatmul.mubr.bf16.gmra.mxu0 %v2836
      %v2886 = vpop.f32.mrf.mxu0
      %v2887 = vadd.f32 %v2818, %v2886
      %v2888 = vpop.f32.mrf.mxu0
      %v2889 = vpop.f32.mrf.mxu0
      %v2890 = vadd.f32 %v2818, %v2889
      %v2891 = vpop.f32.mrf.mxu0
      %2892 = vmatprep.mubr.bf16.mxu0 0
      %2893 = vmatmul.mubr.bf16.gmra.mxu0 %v2839
      %v2894 = vpop.f32.mrf.mxu0
      %v2895 = vadd.f32 %v2818, %v2894
      %v2896 = vpop.f32.mrf.mxu0
      %v2897 = vpop.f32.mrf.mxu0
      %v2898 = vadd.f32 %v2818, %v2897
      %v2899 = vpop.f32.mrf.mxu0
      %2900 = vmatprep.mubr.bf16.mxu0 0
      %2901 = vmatmul.mubr.bf16.gmra.mxu0 %v2842
      %v2902 = vpop.f32.mrf.mxu0
      %v2903 = vadd.f32 %v2818, %v2902
      %v2904 = vpop.f32.mrf.mxu0
      %v2905 = vpop.f32.mrf.mxu0
      %v2906 = vadd.f32 %v2818, %v2905
      %v2907 = vpop.f32.mrf.mxu0
      %2908 = vdwg.mxu0
      %v2909 = vadd.f32 %v2879, %v386
      %v2910 = vadd.f32 %v2882, %v387
      %v2911 = vadd.f32 %v2887, %v388
      %v2912 = vadd.f32 %v2890, %v389
      %v2913 = vadd.f32 %v2895, %v390
      %v2914 = vadd.f32 %v2898, %v391
      %v2915 = vadd.f32 %v2903, %v392
      %v2916 = vadd.f32 %v2906, %v393
      %2917 = vst.msk [vmem:[%s382] sm:$0xff] %vm396, %v2909
      %2918 = vst.msk [vmem:[%s382 + $0x8] sm:$0xff] %vm396, %v2910
      %2919 = vst.msk [vmem:[%s382 + $0x10] sm:$0xff] %vm396, %v2911
      %2920 = vst.msk [vmem:[%s382 + $0x18] sm:$0xff] %vm396, %v2912
      %2921 = vst.msk [vmem:[%s382 + $0x20] sm:$0xff] %vm396, %v2913
      %2922 = vst.msk [vmem:[%s382 + $0x28] sm:$0xff] %vm396, %v2914
      %2923 = vst.msk [vmem:[%s382 + $0x30] sm:$0xff] %vm396, %v2915
      %2924 = vst.msk [vmem:[%s382 + $0x38] sm:$0xff] %vm396, %v2916
      %s2925 = sadd.s32 %s24, %s25
      %s2926 = smul.u32 8, %s2925
      %p2927 = scmp.lt.s32.totalorder %s2926, 15
      %s2928 = scalar_select %p2927, %s2926, 15
      %s2929 = smul.addr %s2928, 8
      %s2930 = scalar_lea.vmem %s9, %s2929
      // Predicated region
      $region57: #{tpu_custom_call.1} parent=55 // pred_check
        %p2931 = pneg %p253
      $region58: #{tpu_custom_call.1} parent=55 // pred_check_branch
        %2933 = sbr.rel (%p2931) target = $region60
      $region59: #{tpu_custom_call.1} parent=55 // pred_region
        %s2934 = sadd.s32 %s24, %s25
        %s2935 = smul.u32 8, %s2934
      $region60: #{tpu_custom_call.1} parent=55 // pred_fallthru
        _
    $region56: #{tpu_custom_call.1} parent=5 // pred_fallthru
      _
    %p2936 = scmp.le.s32.totalorder 2, %s15
    // Predicated region
    $region61: #{tpu_custom_call.1} parent=5 // pred_check
      %p2937 = pneg %p2936
    $region62: #{tpu_custom_call.1} parent=5 // pred_check_branch
      %2939 = sbr.rel (%p2937) target = $region64
    $region63: #{tpu_custom_call.1} parent=5 // pred_region
      %s2940 = ssub.s32 %s15, 2
      // Predicated region
      $region65: #{tpu_custom_call.1} parent=63 // pred_check
        %p2941 = pneg %p259
      $region66: #{tpu_custom_call.1} parent=63 // pred_check_branch
        %2943 = sbr.rel (%p2941) target = $region68
      $region67: #{tpu_custom_call.1} parent=63 // pred_region
        %s2944 = sadd.s32 %s26, %s27
        %s2945 = smul.u32 8, %s2944
        %p2946 = scmp.lt.s32.totalorder %s2945, 15
        %s2947 = scalar_select %p2946, %s2945, 15
        %s2948 = smul.addr %s2947, 8
        %s2949 = scalar_lea.vmem %s9, %s2948
      $region68: #{tpu_custom_call.1} parent=63 // pred_fallthru
        _
    $region64: #{tpu_custom_call.1} parent=5 // pred_fallthru
      _
  $region6: #{tpu_custom_call.1} parent=0 // loop_footer
    %s19 = sadd.s32 1, %s15
  $region7: #{tpu_custom_call.1} parent=0 // loop_footer_branch
    %14 = sbr.rel target = $region3
  $region8: #{tpu_custom_call.1} parent=0 // loop_exit
    _

</llo_original>
